<compile_context>
chip_gen: v7x
topology: tpu7x:2x2x1
jax: 0.10.0
libtpu: 0.0.40
codegen_flags: <defaults>
</compile_context>

<pallas_src>
import functools

import jax
import jax.numpy as jnp
from jax.experimental import pallas as pl
from jax.experimental.pallas import tpu as pltpu


# ----------------------------------------------------------------------------
# Pallas kernel: one grid step == `tb` batch elements, seq-first slabs.
# ----------------------------------------------------------------------------
def _integration_kernel(
    vf_ref,     # (S, TB, C)  features block (stored dtype: f32 or bf16)
    va_ref,     # (TB, S) f32 visual attention
    sa_ref,     # (TB, S) f32 subject attention
    sp_ref,     # (TB, S) f32 precomputed subj_spatial_feature(subjects)
    sem_ref,    # (TB, C) f32 precomputed subj_semantic_feature(subjects)
    wvs_ref,    # (S, S)  bf16 vision_spatial weight, (out, in) — used on the left
    bvs_ref,    # (S, 1)  f32
    wvsem_ref,  # (2C, C) bf16 vision_semantic weight, (in, out)
    bvsem_ref,  # (1, C)  f32
    wl1_ref,    # (C, C)  bf16 final linear, features half, (in, out)
    wl2_ref,    # (C, C)  bf16 final linear, R half, (in, out)
    bl_ref,     # (1, C)  f32
    out_ref,    # (S, TB, C)  same dtype as features
):
    f32, bf16 = jnp.float32, jnp.bfloat16
    s, tb, c = vf_ref.shape

    vf = vf_ref[...]                        # (S, TB, C) stored dtype
    vf32 = vf.astype(f32)                   # VPU math in f32

    # Small on-chip reorientation of the batch-major maps to (S, TB).
    va = va_ref[...].T                      # (S, TB)
    sa = sa_ref[...].T                      # (S, TB)

    # ---- spatial path (in (S, TB) orientation, matches the output layout) --
    # xu.sum(-1) == sum_c(vf) * (va + sa)   [no (S,TB,C) x+u temporary]
    ssum = jnp.sum(vf32, axis=-1)                                   # (S, TB)
    xu_s = ssum * (va + sa)                                         # (S, TB)
    vs = jnp.dot(wvs_ref[...], xu_s.astype(bf16),
                 preferred_element_type=f32) + bvs_ref[...]         # (S, TB)
    u_s = jnp.maximum(vs, 0.0) + sp_ref[...].T                      # (S, TB)

    # ---- semantic path ------------------------------------------------------
    x_sum = jnp.sum(vf32 * va[:, :, None], axis=0)                  # (TB, C)
    u_sum = jnp.sum(vf32 * sa[:, :, None], axis=0)                  # (TB, C)
    xu_c = jnp.concatenate([x_sum, u_sum], axis=-1)                 # (TB, 2C)
    vsem = jnp.dot(xu_c.astype(bf16), wvsem_ref[...],
                   preferred_element_type=f32) + bvsem_ref[...]     # (TB, C)
    u_c = jnp.maximum(vsem, 0.0) + sem_ref[...]                     # (TB, C)

    # ---- R never materialized: (u_s ⊗ u_c) @ W2 == u_s ⊗ (u_c @ W2) ---------
    t = jnp.dot(u_c.astype(bf16), wl2_ref[...],
                preferred_element_type=f32)                         # (TB, C)

    # ---- final linear (features half) + rank-1 correction -------------------
    lin = jnp.dot(vf.reshape(s * tb, c).astype(bf16), wl1_ref[...],
                  preferred_element_type=f32) + bl_ref[...]         # (S*TB, C)
    final = lin.reshape(s, tb, c) + u_s[:, :, None] * t[None, :, :]
    out_ref[...] = final.astype(out_ref.dtype)


# ----------------------------------------------------------------------------
# Parameter prep (call ONCE, outside jit): transpose to the layouts the kernel
# wants, split the 2C-wide linear, cast MXU operands to bf16.
# ----------------------------------------------------------------------------
def prepare_params(params):
    C = params["lin_b"].shape[0]
    bf16, f32 = jnp.bfloat16, jnp.float32
    return {
        # subject-only branches: hoisted out of the kernel (tiny XLA matmuls)
        "ss1_w": params["ss1_w"], "ss1_b": params["ss1_b"],
        "ss2_w": params["ss2_w"], "ss2_b": params["ss2_b"],
        "sc1_w": params["sc1_w"], "sc1_b": params["sc1_b"],
        "sc2_w": params["sc2_w"], "sc2_b": params["sc2_b"],
        # kernel-side weights
        "wvs": jnp.asarray(params["vs_w"], bf16),               # (S, S)  (out, in)
        "bvs": jnp.asarray(params["vs_b"], f32)[:, None],       # (S, 1)
        "wvsem": jnp.asarray(params["vsem_w"].T, bf16),         # (2C, C)
        "bvsem": jnp.asarray(params["vsem_b"], f32)[None, :],   # (1, C)
        "wl1": jnp.asarray(params["lin_w"][:, :C].T, bf16),     # (C, C)
        "wl2": jnp.asarray(params["lin_w"][:, C:].T, bf16),     # (C, C)
        "bl": jnp.asarray(params["lin_b"], f32)[None, :],       # (1, C)
    }


# ----------------------------------------------------------------------------
# Batch-tile selection against a VMEM budget.
# ----------------------------------------------------------------------------
def _select_batch_tile(B, per_elem_bytes, budget_bytes, min_grid):
    """Return (tb, padded_B): batch rows per grid step (multiple of 8) and the
    padded batch size.  Sized so the per-step working set fits the VMEM budget;
    for B >= 16 prefers >= min_grid grid steps (keeps both v7x TensorCores busy
    under dimension_semantics=("parallel",)) with minimal batch padding."""
    b8 = -(-B // 8)                                   # batch in units of 8 rows
    max_tb8 = max(1, int(budget_bytes) // int(8 * per_elem_bytes))
    if b8 <= 1:
        return 8, 8
    hi8 = max(1, min(max_tb8, -(-b8 // max(1, min_grid))))
    best = None                                       # (pad8, -tb8)
    for tb8 in range(1, hi8 + 1):
        pad8 = -(-b8 // tb8) * tb8
        cand = (pad8, -tb8)
        if best is None or cand < best:
            best = cand
    pad8, neg_tb8 = best
    return -8 * neg_tb8, 8 * pad8


# ----------------------------------------------------------------------------
# Wrapper
# ----------------------------------------------------------------------------
@functools.partial(jax.jit, static_argnames=("vmem_budget_bytes",
                                             "vmem_limit_bytes", "min_grid"))
def integration_forward(prepped, features, visual_att, subject_att, subjects,
                        *, vmem_budget_bytes=28 * 1024 * 1024,
                        vmem_limit_bytes=48 * 1024 * 1024, min_grid=2):
    """features: (S, B, C) seq-first (PyTorch transformer convention), f32 or
    bf16.  Returns (S, B, C) in the same dtype (matches the module layout)."""
    S, B, C = features.shape
    f32 = jnp.float32

    # Subject-only branches (Linear->ReLU->[Dropout=id]->Linear on (B, E)):
    # tiny, hoisted out of the kernel as plain XLA matmuls.
    lin = lambda a, w, b: a @ w.T + b
    sp = lin(jax.nn.relu(lin(subjects, prepped["ss1_w"], prepped["ss1_b"])),
             prepped["ss2_w"], prepped["ss2_b"]).astype(f32)        # (B, S)
    sem = lin(jax.nn.relu(lin(subjects, prepped["sc1_w"], prepped["sc1_b"])),
              prepped["sc2_w"], prepped["sc2_b"]).astype(f32)       # (B, C)

    weights = (prepped["wvs"], prepped["bvs"], prepped["wvsem"],
               prepped["bvsem"], prepped["wl1"], prepped["wl2"], prepped["bl"])

    # --- batch-tile selection against the VMEM budget ------------------------
    io_bytes = features.dtype.itemsize            # out dtype == in dtype
    # per batch element: double-buffered in+out slabs + ~3 block-sized f32
    # temporaries + the small lane-dense 2-D blocks (double-buffered).
    per_elem = S * C * (4 * io_bytes + 3 * 4) + 2 * 4 * (3 * S + C)
    weight_vmem = 2 * sum(w.size * w.dtype.itemsize for w in weights)
    budget = max(8 * per_elem, vmem_budget_bytes - weight_vmem)
    tb, b_pad = _select_batch_tile(B, per_elem, budget, min_grid)
    grid_b = b_pad // tb

    va = visual_att.astype(f32)
    sa = subject_att.astype(f32)
    vf = features
    if b_pad != B:
        pad2 = lambda a: jnp.pad(a, ((0, b_pad - B), (0, 0)))
        va, sa, sp, sem = pad2(va), pad2(sa), pad2(sp), pad2(sem)
        vf = jnp.pad(vf, ((0, 0), (0, b_pad - B), (0, 0)))

    full = lambda a: pl.BlockSpec(a.shape, lambda i, n=a.ndim: (0,) * n)
    out = pl.pallas_call(
        _integration_kernel,
        out_shape=jax.ShapeDtypeStruct((S, b_pad, C), features.dtype),
        grid_spec=pltpu.PrefetchScalarGridSpec(
            num_scalar_prefetch=0,
            grid=(grid_b,),
            in_specs=[pl.BlockSpec((S, tb, C), lambda i: (0, i, 0)),   # features
                      pl.BlockSpec((tb, S), lambda i: (i, 0)),         # visual att
                      pl.BlockSpec((tb, S), lambda i: (i, 0)),         # subject att
                      pl.BlockSpec((tb, S), lambda i: (i, 0)),         # subj spatial
                      pl.BlockSpec((tb, C), lambda i: (i, 0))]         # subj semantic
                     + [full(w) for w in weights],
            out_specs=pl.BlockSpec((S, tb, C), lambda i: (0, i, 0)),
        ),
        compiler_params=pltpu.CompilerParams(
            dimension_semantics=("parallel",),
            vmem_limit_bytes=vmem_limit_bytes,   # safe below v7x's 64 MiB physical
        ),
    )(vf, va, sa, sp, sem, *weights)

    return out[:, :B, :] if b_pad != B else out


# ----------------------------------------------------------------------------
# Pure-JAX f32 reference (mirrors the PyTorch forward; dropout = identity)
# ----------------------------------------------------------------------------
def reference_forward(params, features, visual_att, subject_att, subjects):
    lin = lambda a, w, b: a @ w.T + b
    vf = jnp.transpose(features, (1, 0, 2))
    x = vf * visual_att[..., None]
    u = vf * subject_att[..., None]
    xu = jnp.concatenate([x, u], axis=-1)
    u_s = (jax.nn.relu(lin(xu.sum(-1), params["vs_w"], params["vs_b"])) +
           lin(jax.nn.relu(lin(subjects, params["ss1_w"], params["ss1_b"])),
               params["ss2_w"], params["ss2_b"]))[..., None]
    u_c = (jax.nn.relu(lin(xu.sum(-2), params["vsem_w"], params["vsem_b"])) +
           lin(jax.nn.relu(lin(subjects, params["sc1_w"], params["sc1_b"])),
               params["sc2_w"], params["sc2_b"]))[..., None, :]
    R = u_s * u_c                        # (B, S, C)
    R = jnp.transpose(R, (1, 0, 2))      # (S, B, C)
    return lin(jnp.concatenate([features, R], axis=-1),
               params["lin_w"], params["lin_b"])


def init_params(key, channel_size, im_h, im_w, subject_embedding_size):
    # nn.Linear weights: normal(std=0.1); biases: zeros (per init_weights()).
    C, E, S = channel_size, subject_embedding_size, im_h * im_w
    ks = jax.random.split(key, 7)
    n = lambda k, shp: (0.1 * jax.random.normal(k, shp)).astype(jnp.float32)
    z = lambda shp: jnp.zeros(shp, jnp.float32)
    return {
        "ss1_w": n(ks[0], (C // 2, E)), "ss1_b": z((C // 2,)),
        "ss2_w": n(ks[1], (S, C // 2)), "ss2_b": z((S,)),
        "sc1_w": n(ks[2], (C // 2, E)), "sc1_b": z((C // 2,)),
        "sc2_w": n(ks[3], (C, C // 2)), "sc2_b": z((C,)),
        "vs_w": n(ks[4], (S, S)),       "vs_b": z((S,)),
        "vsem_w": n(ks[5], (C, 2 * C)), "vsem_b": z((C,)),
        "lin_w": n(ks[6], (C, 2 * C)),  "lin_b": z((C,)),
    }


if __name__ == "__main__":
    # Small demo shapes: channel_size=128 (lane-dense blocks), 4x8 spatial
    # grid, batch 16 (exercises the batched grid: tb=8, 2 grid steps).
    B, C, H, W, E = 16, 128, 4, 8, 32
    S = H * W
    key = jax.random.PRNGKey(0)
    kp, kf, kva, ksa, ksub = jax.random.split(key, 5)

    params = init_params(kp, C, H, W, E)
    features_f32 = jax.random.normal(kf, (S, B, C), jnp.float32)     # seq-first
    visual_att = jax.random.uniform(kva, (B, S), jnp.float32)
    subject_att = jax.random.uniform(ksa, (B, S), jnp.float32)
    subjects = jax.random.normal(ksub, (B, E), jnp.float32)

    prepped = prepare_params(params)      # one-time weight repack, outside jit

    # bf16 HBM I/O for the memory-bound kernel (perf feedback); math stays f32
    # on the VPU with f32 MXU accumulation inside the kernel.
    features = features_f32.astype(jnp.bfloat16)
    out = integration_forward(prepped, features, visual_att, subject_att,
                              subjects)
    out = jax.block_until_ready(out)

    ref = reference_forward(params, features_f32, visual_att, subject_att,
                            subjects)
    assert out.shape == (S, B, C) and out.dtype == jnp.bfloat16
    # bf16 I/O + bf16 MXU operands + re-associated folds change rounding order
    # vs the f32 reference: check a normalized error, not elementwise equality.
    rel_err = jnp.linalg.norm(out.astype(jnp.float32) - ref) / (
        jnp.linalg.norm(ref) + 1e-12)
    assert float(rel_err) < 3e-2, f"mismatch vs reference: rel_err={rel_err}"

    print("KERNEL_OK")
</pallas_src>

<mosaic_0001>
module attributes {stable_mosaic.version = 11 : i64} {
  func.func @_integration_kernel(%arg0: i32, %arg1: memref<32x8x128xbf16, #tpu.memory_space<vmem>>, %arg2: memref<8x32xf32, #tpu.memory_space<vmem>>, %arg3: memref<8x32xf32, #tpu.memory_space<vmem>>, %arg4: memref<8x32xf32, #tpu.memory_space<vmem>>, %arg5: memref<8x128xf32, #tpu.memory_space<vmem>>, %arg6: memref<32x32xbf16, #tpu.memory_space<vmem>>, %arg7: memref<32x1xf32, #tpu.memory_space<vmem>>, %arg8: memref<256x128xbf16, #tpu.memory_space<vmem>>, %arg9: memref<1x128xf32, #tpu.memory_space<vmem>>, %arg10: memref<128x128xbf16, #tpu.memory_space<vmem>>, %arg11: memref<128x128xbf16, #tpu.memory_space<vmem>>, %arg12: memref<1x128xf32, #tpu.memory_space<vmem>>, %arg13: memref<32x8x128xbf16, #tpu.memory_space<vmem>>) attributes {dimension_semantics = [#tpu.dimension_semantics<parallel>], iteration_bounds = array<i64: 2>, scalar_prefetch = 0 : i64, scratch_operands = 0 : i64, tpu.core_type = #tpu.core_type<tc>, window_params = [{transform_indices = @transform_0, window_bounds = array<i64: 32, 8, 128>}, {transform_indices = @transform_1, window_bounds = array<i64: 8, 32>}, {transform_indices = @transform_2, window_bounds = array<i64: 8, 32>}, {transform_indices = @transform_3, window_bounds = array<i64: 8, 32>}, {transform_indices = @transform_4, window_bounds = array<i64: 8, 128>}, {pipeline_mode = #tpu.pipeline_mode<synchronous>, transform_indices = @transform_5, window_bounds = array<i64: 32, 32>}, {pipeline_mode = #tpu.pipeline_mode<synchronous>, transform_indices = @transform_6, window_bounds = array<i64: 32, 1>}, {pipeline_mode = #tpu.pipeline_mode<synchronous>, transform_indices = @transform_7, window_bounds = array<i64: 256, 128>}, {pipeline_mode = #tpu.pipeline_mode<synchronous>, transform_indices = @transform_8, window_bounds = array<i64: 1, 128>}, {pipeline_mode = #tpu.pipeline_mode<synchronous>, transform_indices = @transform_9, window_bounds = array<i64: 128, 128>}, {pipeline_mode = #tpu.pipeline_mode<synchronous>, transform_indices = @transform_10, window_bounds = array<i64: 128, 128>}, {pipeline_mode = #tpu.pipeline_mode<synchronous>, transform_indices = @transform_11, window_bounds = array<i64: 1, 128>}, {transform_indices = @transform_12, window_bounds = array<i64: 32, 8, 128>}]} {
    %c0 = arith.constant 0 : index
    %c0_0 = arith.constant 0 : index
    %c0_1 = arith.constant 0 : index
    %0 = vector.load %arg1[%c0, %c0_0, %c0_1] : memref<32x8x128xbf16, #tpu.memory_space<vmem>>, vector<32x8x128xbf16>
    %1 = arith.extf %0 : vector<32x8x128xbf16> to vector<32x8x128xf32>
    %c0_2 = arith.constant 0 : index
    %c0_3 = arith.constant 0 : index
    %2 = vector.load %arg2[%c0_2, %c0_3] : memref<8x32xf32, #tpu.memory_space<vmem>>, vector<8x32xf32>
    %3 = tpu.transpose %2, [1, 0] : vector<8x32xf32> -> vector<32x8xf32>
    %c0_4 = arith.constant 0 : index
    %c0_5 = arith.constant 0 : index
    %4 = vector.load %arg3[%c0_4, %c0_5] : memref<8x32xf32, #tpu.memory_space<vmem>>, vector<8x32xf32>
    %5 = tpu.transpose %4, [1, 0] : vector<8x32xf32> -> vector<32x8xf32>
    %cst = arith.constant dense<0.000000e+00> : vector<32x8xf32>
    %6 = vector.multi_reduction <add>, %1, %cst [2] : vector<32x8x128xf32> to vector<32x8xf32>
    %7 = arith.addf %3, %5 : vector<32x8xf32>
    %8 = arith.mulf %6, %7 : vector<32x8xf32>
    %c0_6 = arith.constant 0 : index
    %c0_7 = arith.constant 0 : index
    %9 = vector.load %arg6[%c0_6, %c0_7] : memref<32x32xbf16, #tpu.memory_space<vmem>>, vector<32x32xbf16>
    %10 = arith.truncf %8 : vector<32x8xf32> to vector<32x8xbf16>
    %cst_8 = arith.constant dense<0.000000e+00> : vector<32x8xf32>
    %11 = tpu.matmul %9, %10, %cst_8 {dimension_numbers = #tpu.dot_dimension_numbers<[1], [0], [0], [1], [0, 0, 1, 1], [], []>} : vector<32x32xbf16>, vector<32x8xbf16>, vector<32x8xf32> -> vector<32x8xf32>
    %c0_9 = arith.constant 0 : index
    %c0_10 = arith.constant 0 : index
    %12 = vector.load %arg7[%c0_9, %c0_10] : memref<32x1xf32, #tpu.memory_space<vmem>>, vector<32x1xf32>
    %13 = vector.broadcast %12 : vector<32x1xf32> to vector<32x8xf32>
    %14 = arith.addf %11, %13 : vector<32x8xf32>
    %cst_11 = arith.constant 0.000000e+00 : f32
    %15 = vector.broadcast %cst_11 : f32 to vector<32x8xf32>
    %16 = arith.maximumf %14, %15 : vector<32x8xf32>
    %c0_12 = arith.constant 0 : index
    %c0_13 = arith.constant 0 : index
    %17 = vector.load %arg4[%c0_12, %c0_13] : memref<8x32xf32, #tpu.memory_space<vmem>>, vector<8x32xf32>
    %18 = tpu.transpose %17, [1, 0] : vector<8x32xf32> -> vector<32x8xf32>
    %19 = arith.addf %16, %18 : vector<32x8xf32>
    %20 = vector.shape_cast %3 : vector<32x8xf32> to vector<32x8x1xf32>
    %21 = vector.broadcast %20 : vector<32x8x1xf32> to vector<32x8x128xf32>
    %22 = arith.mulf %1, %21 : vector<32x8x128xf32>
    %cst_14 = arith.constant dense<0.000000e+00> : vector<8x128xf32>
    %23 = vector.multi_reduction <add>, %22, %cst_14 [0] : vector<32x8x128xf32> to vector<8x128xf32>
    %24 = vector.shape_cast %5 : vector<32x8xf32> to vector<32x8x1xf32>
    %25 = vector.broadcast %24 : vector<32x8x1xf32> to vector<32x8x128xf32>
    %26 = arith.mulf %1, %25 : vector<32x8x128xf32>
    %cst_15 = arith.constant dense<0.000000e+00> : vector<8x128xf32>
    %27 = vector.multi_reduction <add>, %26, %cst_15 [0] : vector<32x8x128xf32> to vector<8x128xf32>
    %28 = tpu.concatenate %23, %27 in 1 : vector<8x128xf32>, vector<8x128xf32> -> vector<8x256xf32>
    %29 = arith.truncf %28 : vector<8x256xf32> to vector<8x256xbf16>
    %c0_16 = arith.constant 0 : index
    %c0_17 = arith.constant 0 : index
    %30 = vector.load %arg8[%c0_16, %c0_17] : memref<256x128xbf16, #tpu.memory_space<vmem>>, vector<256x128xbf16>
    %cst_18 = arith.constant dense<0.000000e+00> : vector<8x128xf32>
    %31 = tpu.matmul %29, %30, %cst_18 {dimension_numbers = #tpu.dot_dimension_numbers<[1], [0], [0], [1], [0, 0, 1, 1], [], []>} : vector<8x256xbf16>, vector<256x128xbf16>, vector<8x128xf32> -> vector<8x128xf32>
    %c0_19 = arith.constant 0 : index
    %c0_20 = arith.constant 0 : index
    %32 = vector.load %arg9[%c0_19, %c0_20] : memref<1x128xf32, #tpu.memory_space<vmem>>, vector<1x128xf32>
    %33 = vector.broadcast %32 : vector<1x128xf32> to vector<8x128xf32>
    %34 = arith.addf %31, %33 : vector<8x128xf32>
    %cst_21 = arith.constant 0.000000e+00 : f32
    %35 = vector.broadcast %cst_21 : f32 to vector<8x128xf32>
    %36 = arith.maximumf %34, %35 : vector<8x128xf32>
    %c0_22 = arith.constant 0 : index
    %c0_23 = arith.constant 0 : index
    %37 = vector.load %arg5[%c0_22, %c0_23] : memref<8x128xf32, #tpu.memory_space<vmem>>, vector<8x128xf32>
    %38 = arith.addf %36, %37 : vector<8x128xf32>
    %39 = arith.truncf %38 : vector<8x128xf32> to vector<8x128xbf16>
    %c0_24 = arith.constant 0 : index
    %c0_25 = arith.constant 0 : index
    %40 = vector.load %arg11[%c0_24, %c0_25] : memref<128x128xbf16, #tpu.memory_space<vmem>>, vector<128x128xbf16>
    %cst_26 = arith.constant dense<0.000000e+00> : vector<8x128xf32>
    %41 = tpu.matmul %39, %40, %cst_26 {dimension_numbers = #tpu.dot_dimension_numbers<[1], [0], [0], [1], [0, 0, 1, 1], [], []>} : vector<8x128xbf16>, vector<128x128xbf16>, vector<8x128xf32> -> vector<8x128xf32>
    %42 = vector.shape_cast %0 : vector<32x8x128xbf16> to vector<256x128xbf16>
    %c0_27 = arith.constant 0 : index
    %c0_28 = arith.constant 0 : index
    %43 = vector.load %arg10[%c0_27, %c0_28] : memref<128x128xbf16, #tpu.memory_space<vmem>>, vector<128x128xbf16>
    %cst_29 = arith.constant dense<0.000000e+00> : vector<256x128xf32>
    %44 = tpu.matmul %42, %43, %cst_29 {dimension_numbers = #tpu.dot_dimension_numbers<[1], [0], [0], [1], [0, 0, 1, 1], [], []>} : vector<256x128xbf16>, vector<128x128xbf16>, vector<256x128xf32> -> vector<256x128xf32>
    %c0_30 = arith.constant 0 : index
    %c0_31 = arith.constant 0 : index
    %45 = vector.load %arg12[%c0_30, %c0_31] : memref<1x128xf32, #tpu.memory_space<vmem>>, vector<1x128xf32>
    %46 = vector.broadcast %45 : vector<1x128xf32> to vector<256x128xf32>
    %47 = arith.addf %44, %46 : vector<256x128xf32>
    %48 = vector.shape_cast %47 : vector<256x128xf32> to vector<32x8x128xf32>
    %49 = vector.shape_cast %19 : vector<32x8xf32> to vector<32x8x1xf32>
    %50 = vector.shape_cast %41 : vector<8x128xf32> to vector<1x8x128xf32>
    %51 = vector.broadcast %49 : vector<32x8x1xf32> to vector<32x8x128xf32>
    %52 = vector.broadcast %50 : vector<1x8x128xf32> to vector<32x8x128xf32>
    %53 = arith.mulf %51, %52 : vector<32x8x128xf32>
    %54 = arith.addf %48, %53 : vector<32x8x128xf32>
    %55 = arith.truncf %54 : vector<32x8x128xf32> to vector<32x8x128xbf16>
    %c0_32 = arith.constant 0 : index
    %c0_33 = arith.constant 0 : index
    %c0_34 = arith.constant 0 : index
    %56 = vector.load %arg13[%c0_32, %c0_33, %c0_34] : memref<32x8x128xbf16, #tpu.memory_space<vmem>>, vector<32x8x128xbf16>
    tpu.vector_store %arg13[%c0_32, %c0_33, %c0_34], %55 {strides = array<i32>} : memref<32x8x128xbf16, #tpu.memory_space<vmem>>, vector<32x8x128xbf16>,
    return
  }
  func.func @transform_0(%arg0: i32) -> (i32, i32, i32) {
    %c0_i32 = arith.constant 0 : i32
    %c0_i32_0 = arith.constant 0 : i32
    %c0_i32_1 = arith.constant 0 : i32
    return %c0_i32, %arg0, %c0_i32_0 : i32, i32, i32
  }
  func.func @transform_1(%arg0: i32) -> (i32, i32) {
    %c0_i32 = arith.constant 0 : i32
    %c0_i32_0 = arith.constant 0 : i32
    return %arg0, %c0_i32 : i32, i32
  }
  func.func @transform_2(%arg0: i32) -> (i32, i32) {
    %c0_i32 = arith.constant 0 : i32
    %c0_i32_0 = arith.constant 0 : i32
    return %arg0, %c0_i32 : i32, i32
  }
  func.func @transform_3(%arg0: i32) -> (i32, i32) {
    %c0_i32 = arith.constant 0 : i32
    %c0_i32_0 = arith.constant 0 : i32
    return %arg0, %c0_i32 : i32, i32
  }
  func.func @transform_4(%arg0: i32) -> (i32, i32) {
    %c0_i32 = arith.constant 0 : i32
    %c0_i32_0 = arith.constant 0 : i32
    return %arg0, %c0_i32 : i32, i32
  }
  func.func @transform_5(%arg0: i32) -> (i32, i32) {
    %c0_i32 = arith.constant 0 : i32
    %c0_i32_0 = arith.constant 0 : i32
    %c0_i32_1 = arith.constant 0 : i32
    return %c0_i32, %c0_i32_0 : i32, i32
  }
  func.func @transform_6(%arg0: i32) -> (i32, i32) {
    %c0_i32 = arith.constant 0 : i32
    %c0_i32_0 = arith.constant 0 : i32
    %c0_i32_1 = arith.constant 0 : i32
    return %c0_i32, %c0_i32_0 : i32, i32
  }
  func.func @transform_7(%arg0: i32) -> (i32, i32) {
    %c0_i32 = arith.constant 0 : i32
    %c0_i32_0 = arith.constant 0 : i32
    %c0_i32_1 = arith.constant 0 : i32
    return %c0_i32, %c0_i32_0 : i32, i32
  }
  func.func @transform_8(%arg0: i32) -> (i32, i32) {
    %c0_i32 = arith.constant 0 : i32
    %c0_i32_0 = arith.constant 0 : i32
    %c0_i32_1 = arith.constant 0 : i32
    return %c0_i32, %c0_i32_0 : i32, i32
  }
  func.func @transform_9(%arg0: i32) -> (i32, i32) {
    %c0_i32 = arith.constant 0 : i32
    %c0_i32_0 = arith.constant 0 : i32
    %c0_i32_1 = arith.constant 0 : i32
    return %c0_i32, %c0_i32_0 : i32, i32
  }
  func.func @transform_10(%arg0: i32) -> (i32, i32) {
    %c0_i32 = arith.constant 0 : i32
    %c0_i32_0 = arith.constant 0 : i32
    %c0_i32_1 = arith.constant 0 : i32
    return %c0_i32, %c0_i32_0 : i32, i32
  }
  func.func @transform_11(%arg0: i32) -> (i32, i32) {
    %c0_i32 = arith.constant 0 : i32
    %c0_i32_0 = arith.constant 0 : i32
    %c0_i32_1 = arith.constant 0 : i32
    return %c0_i32, %c0_i32_0 : i32, i32
  }
  func.func @transform_12(%arg0: i32) -> (i32, i32, i32) {
    %c0_i32 = arith.constant 0 : i32
    %c0_i32_0 = arith.constant 0 : i32
    %c0_i32_1 = arith.constant 0 : i32
    return %c0_i32, %arg0, %c0_i32_0 : i32, i32, i32
  }
}

</mosaic_0001>

<llo_original>
// kernel: integration_forward.1
$region0: #{integration_forward.1}
  #allocation0 [shape = 'u32[]', space=smem, size = 0x4, offset = 0x4, fixed_abs, tag = 'smem constant byte address 0x4 - core index']
  #allocation1 [shape = 'u32[144,128]{1,0:T(1,128)}', space=vmem, size = 0x12000, scoped, tag = 'internal scratch']
  %s0 = inlined_call_operand.vmem [shape: bf16[32,16,128], index: 0, kind: input, shape index: {}]
  %s1 = inlined_call_operand.vmem [shape: f32[16,32], index: 1, kind: input, shape index: {}]
  %s2 = inlined_call_operand.vmem [shape: f32[16,32], index: 2, kind: input, shape index: {}]
  %s3 = inlined_call_operand.vmem [shape: f32[16,32], index: 3, kind: input, shape index: {}]
  %s4 = inlined_call_operand.vmem [shape: f32[16,128], index: 4, kind: input, shape index: {}]
  %s5 = inlined_call_operand.vmem [shape: bf16[32,32], index: 5, kind: input, shape index: {}]
  %s6 = inlined_call_operand.vmem [shape: f32[32,1], index: 6, kind: input, shape index: {}]
  %s7 = inlined_call_operand.hbm [shape: bf16[256,128], index: 7, kind: input, shape index: {}]
  %s8 = inlined_call_operand.vmem [shape: f32[1,128], index: 8, kind: input, shape index: {}]
  %s9 = inlined_call_operand.hbm [shape: bf16[128,128], index: 9, kind: input, shape index: {}]
  %s10 = inlined_call_operand.hbm [shape: bf16[128,128], index: 10, kind: input, shape index: {}]
  %s11 = inlined_call_operand.hbm [shape: f32[1,128], index: 11, kind: input, shape index: {}]
  %s12 = inlined_call_operand.hbm [shape: bf16[32,16,128], index: 12, kind: output, shape index: {}]
  %s13 = sld [smem:[#allocation0]]
  $region138: #{integration_forward.1} parent=0
    _
  %s15 = ssub.s32 1, %s13
  %s16 = scalar_select 0, %s15, %s13
  $region1: #{integration_forward.1} parent=0
    #allocation2 [shape = 'u8[131072]{0}', space=vmem, size = 0x20000, scoped, tag = 'input window, operand 0']
    #allocation3 [shape = 'u8[65536]{0}', space=vmem, size = 0x10000, scoped, tag = 'input window, operand 7, single buffered']
    #allocation4 [shape = 's32[2]{0}', space=sflag, size = 0x8, scoped, tag = 'scoped memory for integration_forward.1']
    #allocation5 [shape = 's32[2]{0}', space=sflag, size = 0x8, scoped, tag = 'scoped memory for integration_forward.1']
    #allocation6 [shape = 'u8[32768]{0}', space=vmem, size = 0x8000, scoped, tag = 'input window, operand 9, single buffered']
    #allocation7 [shape = 's32[1]{0}', space=sflag, size = 0x4, scoped, tag = 'scoped memory for integration_forward.1']
    #allocation8 [shape = 'u8[32768]{0}', space=vmem, size = 0x8000, scoped, tag = 'input window, operand 10, single buffered']
    #allocation9 [shape = 'u8[512]{0}', space=vmem, size = 0x400, scoped, tag = 'input window, operand 11, single buffered']
    #allocation10 [shape = 's32[1]{0}', space=sflag, size = 0x4, scoped, tag = 'scoped memory for integration_forward.1']
    #allocation11 [shape = 'u8[131072]{0}', space=vmem, size = 0x20000, scoped, tag = 'output window, operand 0']
    %17 = vsyncpa [#allocation4], 0
    %18 = vsyncpa [#allocation7], 0
    %19 = vsyncpa [#allocation10], 0
    %20 = vsyncpa [#allocation5], 0
    %s21 = scalar_lea.sflag [#allocation5], 1
    %22 = vsyncpa %s21, 0
    loop: start=0, step=1, limit=4
    $region2: #{integration_forward.1} parent=1 // loop_pre_header
      _
    $region3: #{integration_forward.1} parent=1 // loop_header
      %s24 = sphi 0, %s28
      %p25 = scmp.ge.s32.totalorder %s24, 4
      %s34 = sphi 0, %s36
      %s37 = sphi 0, %s34
      %s38 = sphi 0, %s37
      %s54 = sphi 0, %s38
      %s60 = sphi 0, %s62
      %s63 = sphi 0, %s60
      %s64 = sphi 0, %s63
      %s80 = sphi 0, %s64
      %s86 = sphi 0, %s88
      %s89 = sphi 0, %s86
      %s90 = sphi 0, %s89
      %s106 = sphi 0, %s90
      %s112 = sphi 0, %s114
      %s115 = sphi 0, %s112
      %s116 = sphi 0, %s115
      %s132 = sphi 0, %s116
      %s138 = sphi 0, %s140
      %s141 = sphi 0, %s138
      %s142 = sphi 0, %s141
      %s158 = sphi 0, %s142
      %s162 = sphi 0, %s162
      %s164 = sphi 0, %s162
      %s165 = sphi 0, %s164
      %s179 = sphi 0, %s165
      %s183 = sphi 0, %s183
      %s185 = sphi 0, %s183
      %s186 = sphi 0, %s185
      %s200 = sphi 0, %s186
      %s204 = sphi 0, %s204
      %s206 = sphi 0, %s204
      %s207 = sphi 0, %s206
      %s221 = sphi 0, %s207
      %s225 = sphi 0, %s225
      %s227 = sphi 0, %s225
      %s228 = sphi 0, %s227
      %s242 = sphi 0, %s228
      %s246 = sphi 0, %s246
      %s248 = sphi 0, %s246
      %s249 = sphi 0, %s248
      %s263 = sphi 0, %s249
      %s267 = sphi 0, %s267
      %s269 = sphi 0, %s267
      %s270 = sphi 0, %s269
      %s284 = sphi 0, %s270
      %s288 = sphi 0, %s288
      %s290 = sphi 0, %s288
      %s291 = sphi 0, %s290
      %s305 = sphi 0, %s291
      %s311 = sphi 0, %s313
      %s314 = sphi 0, %s311
      %s315 = sphi 0, %s314
      %s331 = sphi 0, %s315
    $region4: #{integration_forward.1} parent=1 // loop_header_branch
      %27 = sbr.rel (%p25) target = $region8
    $region5: #{integration_forward.1} parent=1 // loop_body
      %s29 = ssub.s32 %s24, 1
      %s30 = ssub.s32 %s24, 2
      %s31 = sadd.s32 %s24, 1
      %s32 = ssub.s32 %s24, %s31
      %p33 = scmp.eq.s32.totalorder %s32, 0
      %s35 = sadd.s32 %s34, 1
      %s36 = scalar_select %p33, %s34, %s35
      %p39 = pneg %p33
      %p40 = scmp.eq.s32.totalorder %s24, 1
      %p41 = por %p39, %p40
      %p42 = scmp.ne.s32.totalorder %s34, %s37
      %p43 = scmp.eq.s32.totalorder %s24, 0
      %p44 = por %p42, %p43
      %p45 = scmp.ne.s32.totalorder %s34, %s37
      %p46 = scmp.eq.s32.totalorder %s29, 1
      %p47 = por %p45, %p46
      %p48 = scmp.ne.s32.totalorder %s37, %s38
      %p49 = scmp.eq.s32.totalorder %s29, 0
      %p50 = por %p48, %p49
      %p51 = scmp.ne.s32.totalorder %s37, %s38
      %p52 = scmp.eq.s32.totalorder %s30, 1
      %p53 = por %p51, %p52
      %p55 = scmp.ne.s32.totalorder %s38, %s54
      %p56 = scmp.eq.s32.totalorder %s30, 0
      %p57 = por %p55, %p56
      %s58 = ssub.s32 %s24, %s31
      %p59 = scmp.eq.s32.totalorder %s58, 0
      %s61 = sadd.s32 %s60, 1
      %s62 = scalar_select %p59, %s60, %s61
      %p65 = pneg %p59
      %p66 = scmp.eq.s32.totalorder %s24, 1
      %p67 = por %p65, %p66
      %p68 = scmp.ne.s32.totalorder %s60, %s63
      %p69 = scmp.eq.s32.totalorder %s24, 0
      %p70 = por %p68, %p69
      %p71 = scmp.ne.s32.totalorder %s60, %s63
      %p72 = scmp.eq.s32.totalorder %s29, 1
      %p73 = por %p71, %p72
      %p74 = scmp.ne.s32.totalorder %s63, %s64
      %p75 = scmp.eq.s32.totalorder %s29, 0
      %p76 = por %p74, %p75
      %p77 = scmp.ne.s32.totalorder %s63, %s64
      %p78 = scmp.eq.s32.totalorder %s30, 1
      %p79 = por %p77, %p78
      %p81 = scmp.ne.s32.totalorder %s64, %s80
      %p82 = scmp.eq.s32.totalorder %s30, 0
      %p83 = por %p81, %p82
      %s84 = ssub.s32 %s24, %s31
      %p85 = scmp.eq.s32.totalorder %s84, 0
      %s87 = sadd.s32 %s86, 1
      %s88 = scalar_select %p85, %s86, %s87
      %p91 = pneg %p85
      %p92 = scmp.eq.s32.totalorder %s24, 1
      %p93 = por %p91, %p92
      %p94 = scmp.ne.s32.totalorder %s86, %s89
      %p95 = scmp.eq.s32.totalorder %s24, 0
      %p96 = por %p94, %p95
      %p97 = scmp.ne.s32.totalorder %s86, %s89
      %p98 = scmp.eq.s32.totalorder %s29, 1
      %p99 = por %p97, %p98
      %p100 = scmp.ne.s32.totalorder %s89, %s90
      %p101 = scmp.eq.s32.totalorder %s29, 0
      %p102 = por %p100, %p101
      %p103 = scmp.ne.s32.totalorder %s89, %s90
      %p104 = scmp.eq.s32.totalorder %s30, 1
      %p105 = por %p103, %p104
      %p107 = scmp.ne.s32.totalorder %s90, %s106
      %p108 = scmp.eq.s32.totalorder %s30, 0
      %p109 = por %p107, %p108
      %s110 = ssub.s32 %s24, %s31
      %p111 = scmp.eq.s32.totalorder %s110, 0
      %s113 = sadd.s32 %s112, 1
      %s114 = scalar_select %p111, %s112, %s113
      %p117 = pneg %p111
      %p118 = scmp.eq.s32.totalorder %s24, 1
      %p119 = por %p117, %p118
      %p120 = scmp.ne.s32.totalorder %s112, %s115
      %p121 = scmp.eq.s32.totalorder %s24, 0
      %p122 = por %p120, %p121
      %p123 = scmp.ne.s32.totalorder %s112, %s115
      %p124 = scmp.eq.s32.totalorder %s29, 1
      %p125 = por %p123, %p124
      %p126 = scmp.ne.s32.totalorder %s115, %s116
      %p127 = scmp.eq.s32.totalorder %s29, 0
      %p128 = por %p126, %p127
      %p129 = scmp.ne.s32.totalorder %s115, %s116
      %p130 = scmp.eq.s32.totalorder %s30, 1
      %p131 = por %p129, %p130
      %p133 = scmp.ne.s32.totalorder %s116, %s132
      %p134 = scmp.eq.s32.totalorder %s30, 0
      %p135 = por %p133, %p134
      %s136 = ssub.s32 %s24, %s31
      %p137 = scmp.eq.s32.totalorder %s136, 0
      %s139 = sadd.s32 %s138, 1
      %s140 = scalar_select %p137, %s138, %s139
      %p143 = pneg %p137
      %p144 = scmp.eq.s32.totalorder %s24, 1
      %p145 = por %p143, %p144
      %p146 = scmp.ne.s32.totalorder %s138, %s141
      %p147 = scmp.eq.s32.totalorder %s24, 0
      %p148 = por %p146, %p147
      %p149 = scmp.ne.s32.totalorder %s138, %s141
      %p150 = scmp.eq.s32.totalorder %s29, 1
      %p151 = por %p149, %p150
      %p152 = scmp.ne.s32.totalorder %s141, %s142
      %p153 = scmp.eq.s32.totalorder %s29, 0
      %p154 = por %p152, %p153
      %p155 = scmp.ne.s32.totalorder %s141, %s142
      %p156 = scmp.eq.s32.totalorder %s30, 1
      %p157 = por %p155, %p156
      %p159 = scmp.ne.s32.totalorder %s142, %s158
      %p160 = scmp.eq.s32.totalorder %s30, 0
      %p161 = por %p159, %p160
      %s163 = sadd.s32 %s162, 1
      %p166 = scmp.eq.s32.totalorder %s24, 1
      %p167 = scmp.ne.s32.totalorder %s162, %s164
      %p168 = scmp.eq.s32.totalorder %s24, 0
      %p169 = por %p167, %p168
      %p170 = scmp.ne.s32.totalorder %s162, %s164
      %p171 = scmp.eq.s32.totalorder %s29, 1
      %p172 = por %p170, %p171
      %p173 = scmp.ne.s32.totalorder %s164, %s165
      %p174 = scmp.eq.s32.totalorder %s29, 0
      %p175 = por %p173, %p174
      %p176 = scmp.ne.s32.totalorder %s164, %s165
      %p177 = scmp.eq.s32.totalorder %s30, 1
      %p178 = por %p176, %p177
      %p180 = scmp.ne.s32.totalorder %s165, %s179
      %p181 = scmp.eq.s32.totalorder %s30, 0
      %p182 = por %p180, %p181
      %s184 = sadd.s32 %s183, 1
      %p187 = scmp.eq.s32.totalorder %s24, 1
      %p188 = scmp.ne.s32.totalorder %s183, %s185
      %p189 = scmp.eq.s32.totalorder %s24, 0
      %p190 = por %p188, %p189
      %p191 = scmp.ne.s32.totalorder %s183, %s185
      %p192 = scmp.eq.s32.totalorder %s29, 1
      %p193 = por %p191, %p192
      %p194 = scmp.ne.s32.totalorder %s185, %s186
      %p195 = scmp.eq.s32.totalorder %s29, 0
      %p196 = por %p194, %p195
      %p197 = scmp.ne.s32.totalorder %s185, %s186
      %p198 = scmp.eq.s32.totalorder %s30, 1
      %p199 = por %p197, %p198
      %p201 = scmp.ne.s32.totalorder %s186, %s200
      %p202 = scmp.eq.s32.totalorder %s30, 0
      %p203 = por %p201, %p202
      %s205 = sadd.s32 %s204, 1
      %p208 = scmp.eq.s32.totalorder %s24, 1
      %p209 = scmp.ne.s32.totalorder %s204, %s206
      %p210 = scmp.eq.s32.totalorder %s24, 0
      %p211 = por %p209, %p210
      %p212 = scmp.ne.s32.totalorder %s204, %s206
      %p213 = scmp.eq.s32.totalorder %s29, 1
      %p214 = por %p212, %p213
      %p215 = scmp.ne.s32.totalorder %s206, %s207
      %p216 = scmp.eq.s32.totalorder %s29, 0
      %p217 = por %p215, %p216
      %p218 = scmp.ne.s32.totalorder %s206, %s207
      %p219 = scmp.eq.s32.totalorder %s30, 1
      %p220 = por %p218, %p219
      %p222 = scmp.ne.s32.totalorder %s207, %s221
      %p223 = scmp.eq.s32.totalorder %s30, 0
      %p224 = por %p222, %p223
      %s226 = sadd.s32 %s225, 1
      %p229 = scmp.eq.s32.totalorder %s24, 1
      %p230 = scmp.ne.s32.totalorder %s225, %s227
      %p231 = scmp.eq.s32.totalorder %s24, 0
      %p232 = por %p230, %p231
      %p233 = scmp.ne.s32.totalorder %s225, %s227
      %p234 = scmp.eq.s32.totalorder %s29, 1
      %p235 = por %p233, %p234
      %p236 = scmp.ne.s32.totalorder %s227, %s228
      %p237 = scmp.eq.s32.totalorder %s29, 0
      %p238 = por %p236, %p237
      %p239 = scmp.ne.s32.totalorder %s227, %s228
      %p240 = scmp.eq.s32.totalorder %s30, 1
      %p241 = por %p239, %p240
      %p243 = scmp.ne.s32.totalorder %s228, %s242
      %p244 = scmp.eq.s32.totalorder %s30, 0
      %p245 = por %p243, %p244
      %s247 = sadd.s32 %s246, 1
      %p250 = scmp.eq.s32.totalorder %s24, 1
      %p251 = scmp.ne.s32.totalorder %s246, %s248
      %p252 = scmp.eq.s32.totalorder %s24, 0
      %p253 = por %p251, %p252
      %p254 = scmp.ne.s32.totalorder %s246, %s248
      %p255 = scmp.eq.s32.totalorder %s29, 1
      %p256 = por %p254, %p255
      %p257 = scmp.ne.s32.totalorder %s248, %s249
      %p258 = scmp.eq.s32.totalorder %s29, 0
      %p259 = por %p257, %p258
      %p260 = scmp.ne.s32.totalorder %s248, %s249
      %p261 = scmp.eq.s32.totalorder %s30, 1
      %p262 = por %p260, %p261
      %p264 = scmp.ne.s32.totalorder %s249, %s263
      %p265 = scmp.eq.s32.totalorder %s30, 0
      %p266 = por %p264, %p265
      %s268 = sadd.s32 %s267, 1
      %p271 = scmp.eq.s32.totalorder %s24, 1
      %p272 = scmp.ne.s32.totalorder %s267, %s269
      %p273 = scmp.eq.s32.totalorder %s24, 0
      %p274 = por %p272, %p273
      %p275 = scmp.ne.s32.totalorder %s267, %s269
      %p276 = scmp.eq.s32.totalorder %s29, 1
      %p277 = por %p275, %p276
      %p278 = scmp.ne.s32.totalorder %s269, %s270
      %p279 = scmp.eq.s32.totalorder %s29, 0
      %p280 = por %p278, %p279
      %p281 = scmp.ne.s32.totalorder %s269, %s270
      %p282 = scmp.eq.s32.totalorder %s30, 1
      %p283 = por %p281, %p282
      %p285 = scmp.ne.s32.totalorder %s270, %s284
      %p286 = scmp.eq.s32.totalorder %s30, 0
      %p287 = por %p285, %p286
      %s289 = sadd.s32 %s288, 1
      %p292 = scmp.eq.s32.totalorder %s24, 1
      %p293 = scmp.ne.s32.totalorder %s288, %s290
      %p294 = scmp.eq.s32.totalorder %s24, 0
      %p295 = por %p293, %p294
      %p296 = scmp.ne.s32.totalorder %s288, %s290
      %p297 = scmp.eq.s32.totalorder %s29, 1
      %p298 = por %p296, %p297
      %p299 = scmp.ne.s32.totalorder %s290, %s291
      %p300 = scmp.eq.s32.totalorder %s29, 0
      %p301 = por %p299, %p300
      %p302 = scmp.ne.s32.totalorder %s290, %s291
      %p303 = scmp.eq.s32.totalorder %s30, 1
      %p304 = por %p302, %p303
      %p306 = scmp.ne.s32.totalorder %s291, %s305
      %p307 = scmp.eq.s32.totalorder %s30, 0
      %p308 = por %p306, %p307
      %s309 = ssub.s32 %s24, %s31
      %p310 = scmp.eq.s32.totalorder %s309, 0
      %s312 = sadd.s32 %s311, 1
      %s313 = scalar_select %p310, %s311, %s312
      %p316 = pneg %p310
      %p317 = scmp.eq.s32.totalorder %s24, 1
      %p318 = por %p316, %p317
      %p319 = scmp.ne.s32.totalorder %s311, %s314
      %p320 = scmp.eq.s32.totalorder %s24, 0
      %p321 = por %p319, %p320
      %p322 = scmp.ne.s32.totalorder %s311, %s314
      %p323 = scmp.eq.s32.totalorder %s29, 1
      %p324 = por %p322, %p323
      %p325 = scmp.ne.s32.totalorder %s314, %s315
      %p326 = scmp.eq.s32.totalorder %s29, 0
      %p327 = por %p325, %p326
      %p328 = scmp.ne.s32.totalorder %s314, %s315
      %p329 = scmp.eq.s32.totalorder %s30, 1
      %p330 = por %p328, %p329
      %p332 = scmp.ne.s32.totalorder %s315, %s331
      %p333 = scmp.eq.s32.totalorder %s30, 0
      %p334 = por %p332, %p333
      %p335 = scmp.le.s32.totalorder 1, %s24
      %p336 = scmp.lt.s32.totalorder %s24, 3
      %p337 = pnand %p335, %p336
      %p338 = pneg %p337
      // Predicated region
      $region9: #{integration_forward.1} parent=5 // pred_check
        _
      $region10: #{integration_forward.1} parent=5 // pred_check_branch
        %340 = sbr.rel (%p337) target = $region12
      $region11: #{integration_forward.1} parent=5 // pred_region
        %s341 = ssub.s32 %s24, 1
        // Predicated region
        $region13: #{integration_forward.1} parent=11 // pred_check
          %p342 = pneg %p175
        $region14: #{integration_forward.1} parent=11 // pred_check_branch
          %344 = sbr.rel (%p342) target = $region16
        $region15: #{integration_forward.1} parent=11 // pred_region
          _
        $region16: #{integration_forward.1} parent=11 // pred_fallthru
          _
        // Predicated region
        $region17: #{integration_forward.1} parent=11 // pred_check
          %p345 = pneg %p196
        $region18: #{integration_forward.1} parent=11 // pred_check_branch
          %347 = sbr.rel (%p345) target = $region20
        $region19: #{integration_forward.1} parent=11 // pred_region
          _
        $region20: #{integration_forward.1} parent=11 // pred_fallthru
          _
        // Predicated region
        $region21: #{integration_forward.1} parent=11 // pred_check
          %p348 = pneg %p217
        $region22: #{integration_forward.1} parent=11 // pred_check_branch
          %350 = sbr.rel (%p348) target = $region24
        $region23: #{integration_forward.1} parent=11 // pred_region
          %s352 = ssub.s32 2048, 2048
          %353 = vsyncadd [#allocation4], %s352
          %s354 = sshll.u32 [#allocation3], 4
          %s355 = int_to_ptr.vmem [resolvable:$true] %s354
          %360 = dma.hbm_to_vmem [thread:$0]  %s7, 2048, %s355, [#allocation4], 64, 64, 4
        $region24: #{integration_forward.1} parent=11 // pred_fallthru
          _
        // Predicated region
        $region25: #{integration_forward.1} parent=11 // pred_check
          %p361 = pneg %p238
        $region26: #{integration_forward.1} parent=11 // pred_check_branch
          %363 = sbr.rel (%p361) target = $region28
        $region27: #{integration_forward.1} parent=11 // pred_region
          _
        $region28: #{integration_forward.1} parent=11 // pred_fallthru
          _
        // Predicated region
        $region29: #{integration_forward.1} parent=11 // pred_check
          %p364 = pneg %p259
        $region30: #{integration_forward.1} parent=11 // pred_check_branch
          %366 = sbr.rel (%p364) target = $region32
        $region31: #{integration_forward.1} parent=11 // pred_region
          %s368 = ssub.s32 1024, 1024
          %369 = vsyncadd [#allocation7], %s368
          %s370 = sshll.u32 [#allocation6], 4
          %s371 = int_to_ptr.vmem [resolvable:$true] %s370
          %376 = dma.hbm_to_vmem [thread:$0]  %s9, 1024, %s371, [#allocation7], 64, 64, 4
        $region32: #{integration_forward.1} parent=11 // pred_fallthru
          _
        // Predicated region
        $region33: #{integration_forward.1} parent=11 // pred_check
          %p377 = pneg %p280
        $region34: #{integration_forward.1} parent=11 // pred_check_branch
          %379 = sbr.rel (%p377) target = $region36
        $region35: #{integration_forward.1} parent=11 // pred_region
          %s381 = ssub.s32 1024, 1024
          %382 = vsyncadd [#allocation7], %s381
          %s383 = sshll.u32 [#allocation8], 4
          %s384 = int_to_ptr.vmem [resolvable:$true] %s383
          %389 = dma.hbm_to_vmem [thread:$0]  %s10, 1024, %s384, [#allocation7], 64, 64, 4
        $region36: #{integration_forward.1} parent=11 // pred_fallthru
          _
        // Predicated region
        $region37: #{integration_forward.1} parent=11 // pred_check
          %p390 = pneg %p301
        $region38: #{integration_forward.1} parent=11 // pred_check_branch
          %392 = sbr.rel (%p390) target = $region40
        $region39: #{integration_forward.1} parent=11 // pred_region
          %s394 = ssub.s32 16, 16
          %395 = vsyncadd [#allocation10], %s394
          %s397 = sshll.u32 [#allocation9], 4
          %s398 = int_to_ptr.vmem [resolvable:$true] %s397
          %400 = dma.hbm_to_vmem [thread:$0]  %s11, 16, %s398, [#allocation10]
        $region40: #{integration_forward.1} parent=11 // pred_fallthru
          _
      $region12: #{integration_forward.1} parent=5 // pred_fallthru
        _
      %p401 = scmp.lt.s32.totalorder %s24, 2
      // Predicated region
      $region41: #{integration_forward.1} parent=5 // pred_check
        %p402 = pneg %p401
      $region42: #{integration_forward.1} parent=5 // pred_check_branch
        %404 = sbr.rel (%p402) target = $region44
      $region43: #{integration_forward.1} parent=5 // pred_region
        // Predicated region
        $region45: #{integration_forward.1} parent=43 // pred_check
          %p405 = pneg %p44
        $region46: #{integration_forward.1} parent=43 // pred_check_branch
          %407 = sbr.rel (%p405) target = $region48
        $region47: #{integration_forward.1} parent=43 // pred_region
          %s408 = sand.u32 %s34, 1
          %s409 = sand.u32 %s34, 1
          %s410 = smul.addr %s409, 128
          %s411 = scalar_lea.vmem [#allocation2], %s410
          %s412 = smul.addr %s24, 4
          %s413 = scalar_lea.vmem %s0, %s412
          // Predicated region
          $region49: #{integration_forward.1} parent=47 // pred_check
            _
          $region50: #{integration_forward.1} parent=47 // pred_check_branch
            %415 = sbr.rel (0) target = $region52
          $region51: #{integration_forward.1} parent=47 // pred_region
            // Predicated region
            $region53: #{integration_forward.1} parent=51 // pred_check
              _
            $region54: #{integration_forward.1} parent=51 // pred_check_branch
              %417 = sbr.rel target = $region56
            $region55: #{integration_forward.1} parent=51 // pred_region
              // Predicated region
              $region68: #{integration_forward.1} parent=55 // pred_check
                _
              $region69: #{integration_forward.1} parent=55 // pred_check_branch
                %494 = sbr.rel (0) target = $region71
              $region70: #{integration_forward.1} parent=55 // pred_region
                loop: start=0, step=1, limit=1
                $region72: #{integration_forward.1} parent=70 // loop_pre_header
                  _
                $region73: #{integration_forward.1} parent=70 // loop_header
                  %s496 = sphi 0, %s500
                  %p497 = scmp.ge.s32.totalorder %s496, 1
                  %s501 = sphi %s413, %s413
                  %s502 = sphi %s411, %s411
                $region74: #{integration_forward.1} parent=70 // loop_header_branch
                  %499 = sbr.rel (%p497) target = $region78
                $region75: #{integration_forward.1} parent=70 // loop_body
                  _
                $region76: #{integration_forward.1} parent=70 // loop_footer
                  %s500 = sadd.s32 1, %s496
                $region77: #{integration_forward.1} parent=70 // loop_footer_branch
                  %495 = sbr.rel target = $region73
                $region78: #{integration_forward.1} parent=70 // loop_exit
                  _
                loop: start=0, step=1, limit=1
                $region79: #{integration_forward.1} parent=70 // loop_pre_header
                  _
                $region80: #{integration_forward.1} parent=70 // loop_header
                  %s505 = sphi 0, %s509
                  %p506 = scmp.ge.s32.totalorder %s505, 1
                  %s510 = sphi %s413, %s413
                  %s511 = sphi %s411, %s411
                $region81: #{integration_forward.1} parent=70 // loop_header_branch
                  %508 = sbr.rel (%p506) target = $region85
                $region82: #{integration_forward.1} parent=70 // loop_body
                  %v512 = vld [vmem:[%s510] sm:$0xf]
                  %513 = vst [vmem:[%s511] sm:$0xf] %v512
                  %v514 = vld [vmem:[%s510 + $0x8] sm:$0xf]
                  %515 = vst [vmem:[%s511 + $0x4] sm:$0xf] %v514
                  %v516 = vld [vmem:[%s510 + $0x10] sm:$0xf]
                  %517 = vst [vmem:[%s511 + $0x8] sm:$0xf] %v516
                  %v518 = vld [vmem:[%s510 + $0x18] sm:$0xf]
                  %519 = vst [vmem:[%s511 + $0xc] sm:$0xf] %v518
                  %v520 = vld [vmem:[%s510 + $0x20] sm:$0xf]
                  %521 = vst [vmem:[%s511 + $0x10] sm:$0xf] %v520
                  %v522 = vld [vmem:[%s510 + $0x28] sm:$0xf]
                  %523 = vst [vmem:[%s511 + $0x14] sm:$0xf] %v522
                  %v524 = vld [vmem:[%s510 + $0x30] sm:$0xf]
                  %525 = vst [vmem:[%s511 + $0x18] sm:$0xf] %v524
                  %v526 = vld [vmem:[%s510 + $0x38] sm:$0xf]
                  %527 = vst [vmem:[%s511 + $0x1c] sm:$0xf] %v526
                  %v528 = vld [vmem:[%s510 + $0x40] sm:$0xf]
                  %529 = vst [vmem:[%s511 + $0x20] sm:$0xf] %v528
                  %v530 = vld [vmem:[%s510 + $0x48] sm:$0xf]
                  %531 = vst [vmem:[%s511 + $0x24] sm:$0xf] %v530
                  %v532 = vld [vmem:[%s510 + $0x50] sm:$0xf]
                  %533 = vst [vmem:[%s511 + $0x28] sm:$0xf] %v532
                  %v534 = vld [vmem:[%s510 + $0x58] sm:$0xf]
                  %535 = vst [vmem:[%s511 + $0x2c] sm:$0xf] %v534
                  %v536 = vld [vmem:[%s510 + $0x60] sm:$0xf]
                  %537 = vst [vmem:[%s511 + $0x30] sm:$0xf] %v536
                  %v538 = vld [vmem:[%s510 + $0x68] sm:$0xf]
                  %539 = vst [vmem:[%s511 + $0x34] sm:$0xf] %v538
                  %v540 = vld [vmem:[%s510 + $0x70] sm:$0xf]
                  %541 = vst [vmem:[%s511 + $0x38] sm:$0xf] %v540
                  %v542 = vld [vmem:[%s510 + $0x78] sm:$0xf]
                  %543 = vst [vmem:[%s511 + $0x3c] sm:$0xf] %v542
                  %v544 = vld [vmem:[%s510 + $0x80] sm:$0xf]
                  %545 = vst [vmem:[%s511 + $0x40] sm:$0xf] %v544
                  %v546 = vld [vmem:[%s510 + $0x88] sm:$0xf]
                  %547 = vst [vmem:[%s511 + $0x44] sm:$0xf] %v546
                  %v548 = vld [vmem:[%s510 + $0x90] sm:$0xf]
                  %549 = vst [vmem:[%s511 + $0x48] sm:$0xf] %v548
                  %v550 = vld [vmem:[%s510 + $0x98] sm:$0xf]
                  %551 = vst [vmem:[%s511 + $0x4c] sm:$0xf] %v550
                  %v552 = vld [vmem:[%s510 + $0xa0] sm:$0xf]
                  %553 = vst [vmem:[%s511 + $0x50] sm:$0xf] %v552
                  %v554 = vld [vmem:[%s510 + $0xa8] sm:$0xf]
                  %555 = vst [vmem:[%s511 + $0x54] sm:$0xf] %v554
                  %v556 = vld [vmem:[%s510 + $0xb0] sm:$0xf]
                  %557 = vst [vmem:[%s511 + $0x58] sm:$0xf] %v556
                  %v558 = vld [vmem:[%s510 + $0xb8] sm:$0xf]
                  %559 = vst [vmem:[%s511 + $0x5c] sm:$0xf] %v558
                  %v560 = vld [vmem:[%s510 + $0xc0] sm:$0xf]
                  %561 = vst [vmem:[%s511 + $0x60] sm:$0xf] %v560
                  %v562 = vld [vmem:[%s510 + $0xc8] sm:$0xf]
                  %563 = vst [vmem:[%s511 + $0x64] sm:$0xf] %v562
                  %v564 = vld [vmem:[%s510 + $0xd0] sm:$0xf]
                  %565 = vst [vmem:[%s511 + $0x68] sm:$0xf] %v564
                  %v566 = vld [vmem:[%s510 + $0xd8] sm:$0xf]
                  %567 = vst [vmem:[%s511 + $0x6c] sm:$0xf] %v566
                  %v568 = vld [vmem:[%s510 + $0xe0] sm:$0xf]
                  %569 = vst [vmem:[%s511 + $0x70] sm:$0xf] %v568
                  %v570 = vld [vmem:[%s510 + $0xe8] sm:$0xf]
                  %571 = vst [vmem:[%s511 + $0x74] sm:$0xf] %v570
                  %v572 = vld [vmem:[%s510 + $0xf0] sm:$0xf]
                  %573 = vst [vmem:[%s511 + $0x78] sm:$0xf] %v572
                  %v574 = vld [vmem:[%s510 + $0xf8] sm:$0xf]
                  %575 = vst [vmem:[%s511 + $0x7c] sm:$0xf] %v574
                $region83: #{integration_forward.1} parent=70 // loop_footer
                  %s509 = sadd.s32 1, %s505
                $region84: #{integration_forward.1} parent=70 // loop_footer_branch
                  %504 = sbr.rel target = $region80
                $region85: #{integration_forward.1} parent=70 // loop_exit
                  _
              $region71: #{integration_forward.1} parent=55 // pred_fallthru
                _
            $region56: #{integration_forward.1} parent=51 // pred_fallthru
              _
            // Predicated region
            $region57: #{integration_forward.1} parent=51 // pred_check
              _
            $region58: #{integration_forward.1} parent=51 // pred_check_branch
              %419 = sbr.rel (0) target = $region60
            $region59: #{integration_forward.1} parent=51 // pred_region
              loop: start=0, step=1, limit=1
              $region61: #{integration_forward.1} parent=59 // loop_pre_header
                _
              $region62: #{integration_forward.1} parent=59 // loop_header
                %s422 = sphi 0, %s426
                %p423 = scmp.ge.s32.totalorder %s422, 1
                %s427 = sphi %s413, %s413
                %s428 = sphi %s411, %s411
              $region63: #{integration_forward.1} parent=59 // loop_header_branch
                %425 = sbr.rel (%p423) target = $region67
              $region64: #{integration_forward.1} parent=59 // loop_body
                %v429 = vld [vmem:[%s427] sm:$0xf]
                %430 = vst [vmem:[%s428] sm:$0xf] %v429
                %v431 = vld [vmem:[%s427 + $0x8] sm:$0xf]
                %432 = vst [vmem:[%s428 + $0x4] sm:$0xf] %v431
                %v433 = vld [vmem:[%s427 + $0x10] sm:$0xf]
                %434 = vst [vmem:[%s428 + $0x8] sm:$0xf] %v433
                %v435 = vld [vmem:[%s427 + $0x18] sm:$0xf]
                %436 = vst [vmem:[%s428 + $0xc] sm:$0xf] %v435
                %v437 = vld [vmem:[%s427 + $0x20] sm:$0xf]
                %438 = vst [vmem:[%s428 + $0x10] sm:$0xf] %v437
                %v439 = vld [vmem:[%s427 + $0x28] sm:$0xf]
                %440 = vst [vmem:[%s428 + $0x14] sm:$0xf] %v439
                %v441 = vld [vmem:[%s427 + $0x30] sm:$0xf]
                %442 = vst [vmem:[%s428 + $0x18] sm:$0xf] %v441
                %v443 = vld [vmem:[%s427 + $0x38] sm:$0xf]
                %444 = vst [vmem:[%s428 + $0x1c] sm:$0xf] %v443
                %v445 = vld [vmem:[%s427 + $0x40] sm:$0xf]
                %446 = vst [vmem:[%s428 + $0x20] sm:$0xf] %v445
                %v447 = vld [vmem:[%s427 + $0x48] sm:$0xf]
                %448 = vst [vmem:[%s428 + $0x24] sm:$0xf] %v447
                %v449 = vld [vmem:[%s427 + $0x50] sm:$0xf]
                %450 = vst [vmem:[%s428 + $0x28] sm:$0xf] %v449
                %v451 = vld [vmem:[%s427 + $0x58] sm:$0xf]
                %452 = vst [vmem:[%s428 + $0x2c] sm:$0xf] %v451
                %v453 = vld [vmem:[%s427 + $0x60] sm:$0xf]
                %454 = vst [vmem:[%s428 + $0x30] sm:$0xf] %v453
                %v455 = vld [vmem:[%s427 + $0x68] sm:$0xf]
                %456 = vst [vmem:[%s428 + $0x34] sm:$0xf] %v455
                %v457 = vld [vmem:[%s427 + $0x70] sm:$0xf]
                %458 = vst [vmem:[%s428 + $0x38] sm:$0xf] %v457
                %v459 = vld [vmem:[%s427 + $0x78] sm:$0xf]
                %460 = vst [vmem:[%s428 + $0x3c] sm:$0xf] %v459
                %v461 = vld [vmem:[%s427 + $0x80] sm:$0xf]
                %462 = vst [vmem:[%s428 + $0x40] sm:$0xf] %v461
                %v463 = vld [vmem:[%s427 + $0x88] sm:$0xf]
                %464 = vst [vmem:[%s428 + $0x44] sm:$0xf] %v463
                %v465 = vld [vmem:[%s427 + $0x90] sm:$0xf]
                %466 = vst [vmem:[%s428 + $0x48] sm:$0xf] %v465
                %v467 = vld [vmem:[%s427 + $0x98] sm:$0xf]
                %468 = vst [vmem:[%s428 + $0x4c] sm:$0xf] %v467
                %v469 = vld [vmem:[%s427 + $0xa0] sm:$0xf]
                %470 = vst [vmem:[%s428 + $0x50] sm:$0xf] %v469
                %v471 = vld [vmem:[%s427 + $0xa8] sm:$0xf]
                %472 = vst [vmem:[%s428 + $0x54] sm:$0xf] %v471
                %v473 = vld [vmem:[%s427 + $0xb0] sm:$0xf]
                %474 = vst [vmem:[%s428 + $0x58] sm:$0xf] %v473
                %v475 = vld [vmem:[%s427 + $0xb8] sm:$0xf]
                %476 = vst [vmem:[%s428 + $0x5c] sm:$0xf] %v475
                %v477 = vld [vmem:[%s427 + $0xc0] sm:$0xf]
                %478 = vst [vmem:[%s428 + $0x60] sm:$0xf] %v477
                %v479 = vld [vmem:[%s427 + $0xc8] sm:$0xf]
                %480 = vst [vmem:[%s428 + $0x64] sm:$0xf] %v479
                %v481 = vld [vmem:[%s427 + $0xd0] sm:$0xf]
                %482 = vst [vmem:[%s428 + $0x68] sm:$0xf] %v481
                %v483 = vld [vmem:[%s427 + $0xd8] sm:$0xf]
                %484 = vst [vmem:[%s428 + $0x6c] sm:$0xf] %v483
                %v485 = vld [vmem:[%s427 + $0xe0] sm:$0xf]
                %486 = vst [vmem:[%s428 + $0x70] sm:$0xf] %v485
                %v487 = vld [vmem:[%s427 + $0xe8] sm:$0xf]
                %488 = vst [vmem:[%s428 + $0x74] sm:$0xf] %v487
                %v489 = vld [vmem:[%s427 + $0xf0] sm:$0xf]
                %490 = vst [vmem:[%s428 + $0x78] sm:$0xf] %v489
                %v491 = vld [vmem:[%s427 + $0xf8] sm:$0xf]
                %492 = vst [vmem:[%s428 + $0x7c] sm:$0xf] %v491
              $region65: #{integration_forward.1} parent=59 // loop_footer
                %s426 = sadd.s32 1, %s422
              $region66: #{integration_forward.1} parent=59 // loop_footer_branch
                %421 = sbr.rel target = $region62
              $region67: #{integration_forward.1} parent=59 // loop_exit
                _
            $region60: #{integration_forward.1} parent=51 // pred_fallthru
              _
          $region52: #{integration_forward.1} parent=47 // pred_fallthru
            _
          %576 = vnop
        $region48: #{integration_forward.1} parent=43 // pred_fallthru
          _
        // Predicated region
        $region86: #{integration_forward.1} parent=43 // pred_check
          %p577 = pneg %p70
        $region87: #{integration_forward.1} parent=43 // pred_check_branch
          %579 = sbr.rel (%p577) target = $region89
        $region88: #{integration_forward.1} parent=43 // pred_region
          %p580 = scmp.lt.s32.totalorder %s24, 1
          %s581 = scalar_select %p580, %s24, 1
          %s582 = smul.addr %s581, 8
          %s583 = scalar_lea.vmem %s1, %s582
        $region89: #{integration_forward.1} parent=43 // pred_fallthru
          _
        // Predicated region
        $region90: #{integration_forward.1} parent=43 // pred_check
          %p584 = pneg %p96
        $region91: #{integration_forward.1} parent=43 // pred_check_branch
          %586 = sbr.rel (%p584) target = $region93
        $region92: #{integration_forward.1} parent=43 // pred_region
          %p587 = scmp.lt.s32.totalorder %s24, 1
          %s588 = scalar_select %p587, %s24, 1
          %s589 = smul.addr %s588, 8
          %s590 = scalar_lea.vmem %s2, %s589
        $region93: #{integration_forward.1} parent=43 // pred_fallthru
          _
        // Predicated region
        $region94: #{integration_forward.1} parent=43 // pred_check
          %p591 = pneg %p122
        $region95: #{integration_forward.1} parent=43 // pred_check_branch
          %593 = sbr.rel (%p591) target = $region97
        $region96: #{integration_forward.1} parent=43 // pred_region
          %p594 = scmp.lt.s32.totalorder %s24, 1
          %s595 = scalar_select %p594, %s24, 1
          %s596 = smul.addr %s595, 8
          %s597 = scalar_lea.vmem %s3, %s596
        $region97: #{integration_forward.1} parent=43 // pred_fallthru
          _
        // Predicated region
        $region98: #{integration_forward.1} parent=43 // pred_check
          %p598 = pneg %p148
        $region99: #{integration_forward.1} parent=43 // pred_check_branch
          %600 = sbr.rel (%p598) target = $region101
        $region100: #{integration_forward.1} parent=43 // pred_region
          %p601 = scmp.lt.s32.totalorder %s24, 1
          %s602 = scalar_select %p601, %s24, 1
          %s603 = smul.addr %s602, 8
          %s604 = scalar_lea.vmem %s4, %s603
        $region101: #{integration_forward.1} parent=43 // pred_fallthru
          _
      $region44: #{integration_forward.1} parent=5 // pred_fallthru
        _
      %p605 = scmp.le.s32.totalorder 1, %s24
      %p606 = scmp.lt.s32.totalorder %s24, 3
      %p607 = pnand %p605, %p606
      %p608 = pneg %p607
      // Predicated region
      $region102: #{integration_forward.1} parent=5 // pred_check
        _
      $region103: #{integration_forward.1} parent=5 // pred_check_branch
        %610 = sbr.rel (%p607) target = $region105
      $region104: #{integration_forward.1} parent=5 // pred_region
        %s611 = ssub.s32 %s24, 1
        %s612 = sand.u32 %s37, 1
        %s613 = sand.u32 %s37, 1
        %s614 = smul.addr %s613, 128
        %s615 = scalar_lea.vmem [#allocation2], %s614
        // Predicated region
        $region106: #{integration_forward.1} parent=104 // pred_check
          %p616 = pneg %p50
        $region107: #{integration_forward.1} parent=104 // pred_check_branch
          %618 = sbr.rel (%p616) target = $region109
        $region108: #{integration_forward.1} parent=104 // pred_region
          _
        $region109: #{integration_forward.1} parent=104 // pred_fallthru
          _
        // Predicated region
        $region110: #{integration_forward.1} parent=104 // pred_check
          %p619 = pneg %p217
        $region111: #{integration_forward.1} parent=104 // pred_check_branch
          %621 = sbr.rel (%p619) target = $region113
        $region112: #{integration_forward.1} parent=104 // pred_region
          %622 = dma.done [#allocation4], 2048
        $region113: #{integration_forward.1} parent=104 // pred_fallthru
          _
        // Predicated region
        $region114: #{integration_forward.1} parent=104 // pred_check
          %p623 = pneg %p259
        $region115: #{integration_forward.1} parent=104 // pred_check_branch
          %625 = sbr.rel (%p623) target = $region117
        $region116: #{integration_forward.1} parent=104 // pred_region
          %626 = dma.done [#allocation7], 1024
        $region117: #{integration_forward.1} parent=104 // pred_fallthru
          _
        // Predicated region
        $region118: #{integration_forward.1} parent=104 // pred_check
          %p627 = pneg %p280
        $region119: #{integration_forward.1} parent=104 // pred_check_branch
          %629 = sbr.rel (%p627) target = $region121
        $region120: #{integration_forward.1} parent=104 // pred_region
          %630 = dma.done [#allocation7], 1024
        $region121: #{integration_forward.1} parent=104 // pred_fallthru
          _
        // Predicated region
        $region122: #{integration_forward.1} parent=104 // pred_check
          %p631 = pneg %p301
        $region123: #{integration_forward.1} parent=104 // pred_check_branch
          %633 = sbr.rel (%p631) target = $region125
        $region124: #{integration_forward.1} parent=104 // pred_region
          %634 = dma.done [#allocation10], 16
        $region125: #{integration_forward.1} parent=104 // pred_fallthru
          _
        %s635 = sand.u32 %s37, 1
        %s636 = sand.u32 %s37, 1
        %s637 = smul.addr %s636, 128
        %s638 = scalar_lea.vmem [#allocation2], %s637
        %p639 = pneg %p50
        %p640 = pneg %p47
        %p641 = scmp.lt.s32.totalorder %s29, 1
        %s642 = scalar_select %p641, %s29, 1
        %s643 = smul.addr %s642, 8
        %s644 = scalar_lea.vmem %s1, %s643
        %p645 = pneg %p76
        %p646 = pneg %p73
        %p647 = scmp.lt.s32.totalorder %s29, 1
        %s648 = scalar_select %p647, %s29, 1
        %s649 = smul.addr %s648, 8
        %s650 = scalar_lea.vmem %s2, %s649
        %p651 = pneg %p102
        %p652 = pneg %p99
        %p653 = scmp.lt.s32.totalorder %s29, 1
        %s654 = scalar_select %p653, %s29, 1
        %s655 = smul.addr %s654, 8
        %s656 = scalar_lea.vmem %s3, %s655
        %p657 = pneg %p128
        %p658 = pneg %p125
        %p659 = scmp.lt.s32.totalorder %s29, 1
        %s660 = scalar_select %p659, %s29, 1
        %s661 = smul.addr %s660, 8
        %s662 = scalar_lea.vmem %s4, %s661
        %p663 = pneg %p154
        %p664 = pneg %p151
        %p665 = pneg %p175
        %p666 = pneg %p172
        %p667 = pneg %p196
        %p668 = pneg %p193
        %p669 = pneg %p217
        %p670 = pneg %p214
        %p671 = pneg %p238
        %p672 = pneg %p235
        %p673 = pneg %p259
        %p674 = pneg %p256
        %p675 = pneg %p280
        %p676 = pneg %p277
        %p677 = pneg %p301
        %p678 = pneg %p298
        %p679 = pneg %p327
        %p680 = pneg %p324
        %s681 = sand.u32 %s314, 1
        %s682 = scalar_lea.sflag [#allocation5], %s681
        %s683 = sand.u32 %s314, 1
        %s684 = smul.addr %s683, 128
        %s685 = scalar_lea.vmem [#allocation11], %s684
        %p686 = scmp.lt.s32.totalorder %s29, 1
        %s687 = scalar_select %p686, %s29, 1
        %s688 = smul.addr %s687, 8
        %s689 = scalar_lea.vmem %s1, %s688
        %p690 = scmp.lt.s32.totalorder %s29, 1
        %s691 = scalar_select %p690, %s29, 1
        %s692 = smul.addr %s691, 8
        %s693 = scalar_lea.vmem %s2, %s692
        %p694 = scmp.lt.s32.totalorder %s29, 1
        %s695 = scalar_select %p694, %s29, 1
        %s696 = smul.addr %s695, 8
        %s697 = scalar_lea.vmem %s3, %s696
        %p698 = scmp.lt.s32.totalorder %s29, 1
        %s699 = scalar_select %p698, %s29, 1
        %s700 = smul.addr %s699, 8
        %s701 = scalar_lea.vmem %s4, %s700
        %v703 = vld [vmem:[%s615] sm:$0xf]
        %v704 = vld [vmem:[%s615 + $0x4] sm:$0xf]
        %v705 = vld [vmem:[%s615 + $0x8] sm:$0xf]
        %v706 = vld [vmem:[%s615 + $0xc] sm:$0xf]
        %v707 = vld [vmem:[%s615 + $0x10] sm:$0xf]
        %v708 = vld [vmem:[%s615 + $0x14] sm:$0xf]
        %v709 = vld [vmem:[%s615 + $0x18] sm:$0xf]
        %v710 = vld [vmem:[%s615 + $0x1c] sm:$0xf]
        %v711 = vld [vmem:[%s615 + $0x20] sm:$0xf]
        %v712 = vld [vmem:[%s615 + $0x24] sm:$0xf]
        %v713 = vld [vmem:[%s615 + $0x28] sm:$0xf]
        %v714 = vld [vmem:[%s615 + $0x2c] sm:$0xf]
        %v715 = vld [vmem:[%s615 + $0x30] sm:$0xf]
        %v716 = vld [vmem:[%s615 + $0x34] sm:$0xf]
        %v717 = vld [vmem:[%s615 + $0x38] sm:$0xf]
        %v718 = vld [vmem:[%s615 + $0x3c] sm:$0xf]
        %v719 = vld [vmem:[%s615 + $0x40] sm:$0xf]
        %v720 = vld [vmem:[%s615 + $0x44] sm:$0xf]
        %v721 = vld [vmem:[%s615 + $0x48] sm:$0xf]
        %v722 = vld [vmem:[%s615 + $0x4c] sm:$0xf]
        %v723 = vld [vmem:[%s615 + $0x50] sm:$0xf]
        %v724 = vld [vmem:[%s615 + $0x54] sm:$0xf]
        %v725 = vld [vmem:[%s615 + $0x58] sm:$0xf]
        %v726 = vld [vmem:[%s615 + $0x5c] sm:$0xf]
        %v727 = vld [vmem:[%s615 + $0x60] sm:$0xf]
        %v728 = vld [vmem:[%s615 + $0x64] sm:$0xf]
        %v729 = vld [vmem:[%s615 + $0x68] sm:$0xf]
        %v730 = vld [vmem:[%s615 + $0x6c] sm:$0xf]
        %v731 = vld [vmem:[%s615 + $0x70] sm:$0xf]
        %v732 = vld [vmem:[%s615 + $0x74] sm:$0xf]
        %v733 = vld [vmem:[%s615 + $0x78] sm:$0xf]
        %v734 = vld [vmem:[%s615 + $0x7c] sm:$0xf]
        %v735 = vunpack.c.l.bf16 %v703
        %v736 = vunpack.c.l.bf16 %v704
        %v737 = vunpack.c.l.bf16 %v705
        %v738 = vunpack.c.l.bf16 %v706
        %v739 = vunpack.c.l.bf16 %v707
        %v740 = vunpack.c.l.bf16 %v708
        %v741 = vunpack.c.l.bf16 %v709
        %v742 = vunpack.c.l.bf16 %v710
        %v743 = vunpack.c.l.bf16 %v711
        %v744 = vunpack.c.l.bf16 %v712
        %v745 = vunpack.c.l.bf16 %v713
        %v746 = vunpack.c.l.bf16 %v714
        %v747 = vunpack.c.l.bf16 %v715
        %v748 = vunpack.c.l.bf16 %v716
        %v749 = vunpack.c.l.bf16 %v717
        %v750 = vunpack.c.l.bf16 %v718
        %v751 = vunpack.c.l.bf16 %v719
        %v752 = vunpack.c.l.bf16 %v720
        %v753 = vunpack.c.l.bf16 %v721
        %v754 = vunpack.c.l.bf16 %v722
        %v755 = vunpack.c.l.bf16 %v723
        %v756 = vunpack.c.l.bf16 %v724
        %v757 = vunpack.c.l.bf16 %v725
        %v758 = vunpack.c.l.bf16 %v726
        %v759 = vunpack.c.l.bf16 %v727
        %v760 = vunpack.c.l.bf16 %v728
        %v761 = vunpack.c.l.bf16 %v729
        %v762 = vunpack.c.l.bf16 %v730
        %v763 = vunpack.c.l.bf16 %v731
        %v764 = vunpack.c.l.bf16 %v732
        %v765 = vunpack.c.l.bf16 %v733
        %v766 = vunpack.c.l.bf16 %v734
        %v767 = vld [vmem:[%s689] sm:$0xff]
        %768 = vxpose.xlu0.b32.start [1/16] %v767, 128
        %769 = vxpose.xlu0.b32.cont [2/16] 0.0, 128
        %770 = vxpose.xlu0.b32.cont [3/16] 0.0, 128
        %771 = vxpose.xlu0.b32.cont [4/16] 0.0, 128
        %772 = vxpose.xlu0.b32.cont [5/16] 0.0, 128
        %773 = vxpose.xlu0.b32.cont [6/16] 0.0, 128
        %774 = vxpose.xlu0.b32.cont [7/16] 0.0, 128
        %775 = vxpose.xlu0.b32.cont [8/16] 0.0, 128
        %776 = vxpose.xlu0.b32.cont [9/16] 0.0, 128
        %777 = vxpose.xlu0.b32.cont [10/16] 0.0, 128
        %778 = vxpose.xlu0.b32.cont [11/16] 0.0, 128
        %779 = vxpose.xlu0.b32.cont [12/16] 0.0, 128
        %780 = vxpose.xlu0.b32.cont [13/16] 0.0, 128
        %781 = vxpose.xlu0.b32.cont [14/16] 0.0, 128
        %782 = vxpose.xlu0.b32.cont [15/16] 0.0, 128
        %783 = vxpose.xlu0.b32.end [16/16] 0.0, 128
        %v784 = vpop.trf.xlu0
        %v785 = vpop.trf.xlu0
        %v786 = vpop.trf.xlu0
        %v787 = vpop.trf.xlu0
        %v788 = vpop.trf.xlu0
        %v789 = vpop.trf.xlu0
        %v790 = vpop.trf.xlu0
        %v791 = vpop.trf.xlu0
        %v792 = vpop.trf.xlu0
        %v793 = vpop.trf.xlu0
        %v794 = vpop.trf.xlu0
        %v795 = vpop.trf.xlu0
        %v796 = vpop.trf.xlu0
        %v797 = vpop.trf.xlu0
        %v798 = vpop.trf.xlu0
        %v799 = vpop.trf.xlu0
        %v800 = vld [vmem:[%s693] sm:$0xff]
        %801 = vxpose.xlu0.b32.start [1/16] %v800, 128
        %802 = vxpose.xlu0.b32.cont [2/16] 0.0, 128
        %803 = vxpose.xlu0.b32.cont [3/16] 0.0, 128
        %804 = vxpose.xlu0.b32.cont [4/16] 0.0, 128
        %805 = vxpose.xlu0.b32.cont [5/16] 0.0, 128
        %806 = vxpose.xlu0.b32.cont [6/16] 0.0, 128
        %807 = vxpose.xlu0.b32.cont [7/16] 0.0, 128
        %808 = vxpose.xlu0.b32.cont [8/16] 0.0, 128
        %809 = vxpose.xlu0.b32.cont [9/16] 0.0, 128
        %810 = vxpose.xlu0.b32.cont [10/16] 0.0, 128
        %811 = vxpose.xlu0.b32.cont [11/16] 0.0, 128
        %812 = vxpose.xlu0.b32.cont [12/16] 0.0, 128
        %813 = vxpose.xlu0.b32.cont [13/16] 0.0, 128
        %814 = vxpose.xlu0.b32.cont [14/16] 0.0, 128
        %815 = vxpose.xlu0.b32.cont [15/16] 0.0, 128
        %816 = vxpose.xlu0.b32.end [16/16] 0.0, 128
        %v817 = vpop.trf.xlu0
        %v818 = vpop.trf.xlu0
        %v819 = vpop.trf.xlu0
        %v820 = vpop.trf.xlu0
        %v821 = vpop.trf.xlu0
        %v822 = vpop.trf.xlu0
        %v823 = vpop.trf.xlu0
        %v824 = vpop.trf.xlu0
        %v825 = vpop.trf.xlu0
        %v826 = vpop.trf.xlu0
        %v827 = vpop.trf.xlu0
        %v828 = vpop.trf.xlu0
        %v829 = vpop.trf.xlu0
        %v830 = vpop.trf.xlu0
        %v831 = vpop.trf.xlu0
        %v832 = vpop.trf.xlu0
        %833 = vadd.xlane.f32.xlu0 %v735
        %v834 = vpop.xlane.xlu0 %833
        %835 = vadd.xlane.f32.xlu0 %v736
        %v836 = vpop.xlane.xlu0 %835
        %837 = vadd.xlane.f32.xlu0 %v737
        %v838 = vpop.xlane.xlu0 %837
        %839 = vadd.xlane.f32.xlu0 %v738
        %v840 = vpop.xlane.xlu0 %839
        %841 = vadd.xlane.f32.xlu0 %v739
        %v842 = vpop.xlane.xlu0 %841
        %843 = vadd.xlane.f32.xlu0 %v740
        %v844 = vpop.xlane.xlu0 %843
        %845 = vadd.xlane.f32.xlu0 %v741
        %v846 = vpop.xlane.xlu0 %845
        %847 = vadd.xlane.f32.xlu0 %v742
        %v848 = vpop.xlane.xlu0 %847
        %849 = vadd.xlane.f32.xlu0 %v743
        %v850 = vpop.xlane.xlu0 %849
        %851 = vadd.xlane.f32.xlu0 %v744
        %v852 = vpop.xlane.xlu0 %851
        %853 = vadd.xlane.f32.xlu0 %v745
        %v854 = vpop.xlane.xlu0 %853
        %855 = vadd.xlane.f32.xlu0 %v746
        %v856 = vpop.xlane.xlu0 %855
        %857 = vadd.xlane.f32.xlu0 %v747
        %v858 = vpop.xlane.xlu0 %857
        %859 = vadd.xlane.f32.xlu0 %v748
        %v860 = vpop.xlane.xlu0 %859
        %861 = vadd.xlane.f32.xlu0 %v749
        %v862 = vpop.xlane.xlu0 %861
        %863 = vadd.xlane.f32.xlu0 %v750
        %v864 = vpop.xlane.xlu0 %863
        %865 = vadd.xlane.f32.xlu0 %v751
        %v866 = vpop.xlane.xlu0 %865
        %867 = vadd.xlane.f32.xlu0 %v752
        %v868 = vpop.xlane.xlu0 %867
        %869 = vadd.xlane.f32.xlu0 %v753
        %v870 = vpop.xlane.xlu0 %869
        %871 = vadd.xlane.f32.xlu0 %v754
        %v872 = vpop.xlane.xlu0 %871
        %873 = vadd.xlane.f32.xlu0 %v755
        %v874 = vpop.xlane.xlu0 %873
        %875 = vadd.xlane.f32.xlu0 %v756
        %v876 = vpop.xlane.xlu0 %875
        %877 = vadd.xlane.f32.xlu0 %v757
        %v878 = vpop.xlane.xlu0 %877
        %879 = vadd.xlane.f32.xlu0 %v758
        %v880 = vpop.xlane.xlu0 %879
        %881 = vadd.xlane.f32.xlu0 %v759
        %v882 = vpop.xlane.xlu0 %881
        %883 = vadd.xlane.f32.xlu0 %v760
        %v884 = vpop.xlane.xlu0 %883
        %885 = vadd.xlane.f32.xlu0 %v761
        %v886 = vpop.xlane.xlu0 %885
        %887 = vadd.xlane.f32.xlu0 %v762
        %v888 = vpop.xlane.xlu0 %887
        %889 = vadd.xlane.f32.xlu0 %v763
        %v890 = vpop.xlane.xlu0 %889
        %891 = vadd.xlane.f32.xlu0 %v764
        %v892 = vpop.xlane.xlu0 %891
        %893 = vadd.xlane.f32.xlu0 %v765
        %v894 = vpop.xlane.xlu0 %893
        %895 = vadd.xlane.f32.xlu0 %v766
        %v896 = vpop.xlane.xlu0 %895
        %v897 = vadd.f32 %v784, %v817
        %v898 = vadd.f32 %v785, %v818
        %v899 = vadd.f32 %v786, %v819
        %v900 = vadd.f32 %v787, %v820
        %v905 = vlaneseq
        %v906 = vshrl.u32 %v905, 7
        %v907 = vsub.s32 0, %v906
        %v908 = vrot.slane %v897, %v907
        %910 = vbcast.lane.b32.xlu0 %v908, 256
        %v911 = vpop.permute.xlu0 %910
        %v912 = vlaneseq
        %v913 = vshrl.u32 %v912, 7
        %v914 = vsub.s32 1, %v913
        %v915 = vrot.slane %v897, %v914
        %917 = vbcast.lane.b32.xlu0 %v915, 256
        %v918 = vpop.permute.xlu0 %917
        %v919 = vlaneseq
        %v920 = vshrl.u32 %v919, 7
        %v921 = vsub.s32 2, %v920
        %v922 = vrot.slane %v897, %v921
        %924 = vbcast.lane.b32.xlu0 %v922, 256
        %v925 = vpop.permute.xlu0 %924
        %v926 = vlaneseq
        %v927 = vshrl.u32 %v926, 7
        %v928 = vsub.s32 3, %v927
        %v929 = vrot.slane %v897, %v928
        %931 = vbcast.lane.b32.xlu0 %v929, 256
        %v932 = vpop.permute.xlu0 %931
        %v933 = vlaneseq
        %v934 = vshrl.u32 %v933, 7
        %v935 = vsub.s32 4, %v934
        %v936 = vrot.slane %v897, %v935
        %938 = vbcast.lane.b32.xlu0 %v936, 256
        %v939 = vpop.permute.xlu0 %938
        %v940 = vlaneseq
        %v941 = vshrl.u32 %v940, 7
        %v942 = vsub.s32 5, %v941
        %v943 = vrot.slane %v897, %v942
        %945 = vbcast.lane.b32.xlu0 %v943, 256
        %v946 = vpop.permute.xlu0 %945
        %v947 = vlaneseq
        %v948 = vshrl.u32 %v947, 7
        %v949 = vsub.s32 6, %v948
        %v950 = vrot.slane %v897, %v949
        %952 = vbcast.lane.b32.xlu0 %v950, 256
        %v953 = vpop.permute.xlu0 %952
        %v954 = vlaneseq
        %v955 = vshrl.u32 %v954, 7
        %v956 = vsub.s32 7, %v955
        %v957 = vrot.slane %v897, %v956
        %959 = vbcast.lane.b32.xlu0 %v957, 256
        %v960 = vpop.permute.xlu0 %959
        %v961 = vlaneseq
        %v962 = vshrl.u32 %v961, 7
        %v963 = vsub.s32 0, %v962
        %v964 = vrot.slane %v898, %v963
        %966 = vbcast.lane.b32.xlu0 %v964, 256
        %v967 = vpop.permute.xlu0 %966
        %v968 = vlaneseq
        %v969 = vshrl.u32 %v968, 7
        %v970 = vsub.s32 1, %v969
        %v971 = vrot.slane %v898, %v970
        %973 = vbcast.lane.b32.xlu0 %v971, 256
        %v974 = vpop.permute.xlu0 %973
        %v975 = vlaneseq
        %v976 = vshrl.u32 %v975, 7
        %v977 = vsub.s32 2, %v976
        %v978 = vrot.slane %v898, %v977
        %980 = vbcast.lane.b32.xlu0 %v978, 256
        %v981 = vpop.permute.xlu0 %980
        %v982 = vlaneseq
        %v983 = vshrl.u32 %v982, 7
        %v984 = vsub.s32 3, %v983
        %v985 = vrot.slane %v898, %v984
        %987 = vbcast.lane.b32.xlu0 %v985, 256
        %v988 = vpop.permute.xlu0 %987
        %v989 = vlaneseq
        %v990 = vshrl.u32 %v989, 7
        %v991 = vsub.s32 4, %v990
        %v992 = vrot.slane %v898, %v991
        %994 = vbcast.lane.b32.xlu0 %v992, 256
        %v995 = vpop.permute.xlu0 %994
        %v996 = vlaneseq
        %v997 = vshrl.u32 %v996, 7
        %v998 = vsub.s32 5, %v997
        %v999 = vrot.slane %v898, %v998
        %1001 = vbcast.lane.b32.xlu0 %v999, 256
        %v1002 = vpop.permute.xlu0 %1001
        %v1003 = vlaneseq
        %v1004 = vshrl.u32 %v1003, 7
        %v1005 = vsub.s32 6, %v1004
        %v1006 = vrot.slane %v898, %v1005
        %1008 = vbcast.lane.b32.xlu0 %v1006, 256
        %v1009 = vpop.permute.xlu0 %1008
        %v1010 = vlaneseq
        %v1011 = vshrl.u32 %v1010, 7
        %v1012 = vsub.s32 7, %v1011
        %v1013 = vrot.slane %v898, %v1012
        %1015 = vbcast.lane.b32.xlu0 %v1013, 256
        %v1016 = vpop.permute.xlu0 %1015
        %v1017 = vlaneseq
        %v1018 = vshrl.u32 %v1017, 7
        %v1019 = vsub.s32 0, %v1018
        %v1020 = vrot.slane %v899, %v1019
        %1022 = vbcast.lane.b32.xlu0 %v1020, 256
        %v1023 = vpop.permute.xlu0 %1022
        %v1024 = vlaneseq
        %v1025 = vshrl.u32 %v1024, 7
        %v1026 = vsub.s32 1, %v1025
        %v1027 = vrot.slane %v899, %v1026
        %1029 = vbcast.lane.b32.xlu0 %v1027, 256
        %v1030 = vpop.permute.xlu0 %1029
        %v1031 = vlaneseq
        %v1032 = vshrl.u32 %v1031, 7
        %v1033 = vsub.s32 2, %v1032
        %v1034 = vrot.slane %v899, %v1033
        %1036 = vbcast.lane.b32.xlu0 %v1034, 256
        %v1037 = vpop.permute.xlu0 %1036
        %v1038 = vlaneseq
        %v1039 = vshrl.u32 %v1038, 7
        %v1040 = vsub.s32 3, %v1039
        %v1041 = vrot.slane %v899, %v1040
        %1043 = vbcast.lane.b32.xlu0 %v1041, 256
        %v1044 = vpop.permute.xlu0 %1043
        %v1045 = vlaneseq
        %v1046 = vshrl.u32 %v1045, 7
        %v1047 = vsub.s32 4, %v1046
        %v1048 = vrot.slane %v899, %v1047
        %1050 = vbcast.lane.b32.xlu0 %v1048, 256
        %v1051 = vpop.permute.xlu0 %1050
        %v1052 = vlaneseq
        %v1053 = vshrl.u32 %v1052, 7
        %v1054 = vsub.s32 5, %v1053
        %v1055 = vrot.slane %v899, %v1054
        %1057 = vbcast.lane.b32.xlu0 %v1055, 256
        %v1058 = vpop.permute.xlu0 %1057
        %v1059 = vlaneseq
        %v1060 = vshrl.u32 %v1059, 7
        %v1061 = vsub.s32 6, %v1060
        %v1062 = vrot.slane %v899, %v1061
        %1064 = vbcast.lane.b32.xlu0 %v1062, 256
        %v1065 = vpop.permute.xlu0 %1064
        %v1066 = vlaneseq
        %v1067 = vshrl.u32 %v1066, 7
        %v1068 = vsub.s32 7, %v1067
        %v1069 = vrot.slane %v899, %v1068
        %1071 = vbcast.lane.b32.xlu0 %v1069, 256
        %v1072 = vpop.permute.xlu0 %1071
        %v1073 = vlaneseq
        %v1074 = vshrl.u32 %v1073, 7
        %v1075 = vsub.s32 0, %v1074
        %v1076 = vrot.slane %v900, %v1075
        %1078 = vbcast.lane.b32.xlu0 %v1076, 256
        %v1079 = vpop.permute.xlu0 %1078
        %v1080 = vlaneseq
        %v1081 = vshrl.u32 %v1080, 7
        %v1082 = vsub.s32 1, %v1081
        %v1083 = vrot.slane %v900, %v1082
        %1085 = vbcast.lane.b32.xlu0 %v1083, 256
        %v1086 = vpop.permute.xlu0 %1085
        %v1087 = vlaneseq
        %v1088 = vshrl.u32 %v1087, 7
        %v1089 = vsub.s32 2, %v1088
        %v1090 = vrot.slane %v900, %v1089
        %1092 = vbcast.lane.b32.xlu0 %v1090, 256
        %v1093 = vpop.permute.xlu0 %1092
        %v1094 = vlaneseq
        %v1095 = vshrl.u32 %v1094, 7
        %v1096 = vsub.s32 3, %v1095
        %v1097 = vrot.slane %v900, %v1096
        %1099 = vbcast.lane.b32.xlu0 %v1097, 256
        %v1100 = vpop.permute.xlu0 %1099
        %v1101 = vlaneseq
        %v1102 = vshrl.u32 %v1101, 7
        %v1103 = vsub.s32 4, %v1102
        %v1104 = vrot.slane %v900, %v1103
        %1106 = vbcast.lane.b32.xlu0 %v1104, 256
        %v1107 = vpop.permute.xlu0 %1106
        %v1108 = vlaneseq
        %v1109 = vshrl.u32 %v1108, 7
        %v1110 = vsub.s32 5, %v1109
        %v1111 = vrot.slane %v900, %v1110
        %1113 = vbcast.lane.b32.xlu0 %v1111, 256
        %v1114 = vpop.permute.xlu0 %1113
        %v1115 = vlaneseq
        %v1116 = vshrl.u32 %v1115, 7
        %v1117 = vsub.s32 6, %v1116
        %v1118 = vrot.slane %v900, %v1117
        %1120 = vbcast.lane.b32.xlu0 %v1118, 256
        %v1121 = vpop.permute.xlu0 %1120
        %v1122 = vlaneseq
        %v1123 = vshrl.u32 %v1122, 7
        %v1124 = vsub.s32 7, %v1123
        %v1125 = vrot.slane %v900, %v1124
        %1127 = vbcast.lane.b32.xlu0 %v1125, 256
        %v1128 = vpop.permute.xlu0 %1127
        %v1161 = vmul.f32 %v834, %v911
        %v1162 = vmul.f32 %v836, %v918
        %v1163 = vmul.f32 %v838, %v925
        %v1164 = vmul.f32 %v840, %v932
        %v1165 = vmul.f32 %v842, %v939
        %v1166 = vmul.f32 %v844, %v946
        %v1167 = vmul.f32 %v846, %v953
        %v1168 = vmul.f32 %v848, %v960
        %v1169 = vmul.f32 %v850, %v967
        %v1170 = vmul.f32 %v852, %v974
        %v1171 = vmul.f32 %v854, %v981
        %v1172 = vmul.f32 %v856, %v988
        %v1173 = vmul.f32 %v858, %v995
        %v1174 = vmul.f32 %v860, %v1002
        %v1175 = vmul.f32 %v862, %v1009
        %v1176 = vmul.f32 %v864, %v1016
        %v1177 = vmul.f32 %v866, %v1023
        %v1178 = vmul.f32 %v868, %v1030
        %v1179 = vmul.f32 %v870, %v1037
        %v1180 = vmul.f32 %v872, %v1044
        %v1181 = vmul.f32 %v874, %v1051
        %v1182 = vmul.f32 %v876, %v1058
        %v1183 = vmul.f32 %v878, %v1065
        %v1184 = vmul.f32 %v880, %v1072
        %v1185 = vmul.f32 %v882, %v1079
        %v1186 = vmul.f32 %v884, %v1086
        %v1187 = vmul.f32 %v886, %v1093
        %v1188 = vmul.f32 %v888, %v1100
        %v1189 = vmul.f32 %v890, %v1107
        %v1190 = vmul.f32 %v892, %v1114
        %v1191 = vmul.f32 %v894, %v1121
        %v1192 = vmul.f32 %v896, %v1128
        %v1193 = vld [vmem:[%s5] sm:$0xf]
        %v1194 = vld [vmem:[%s5 + $0x4] sm:$0xf]
        %v1195 = vld [vmem:[%s5 + $0x8] sm:$0xf]
        %v1196 = vld [vmem:[%s5 + $0xc] sm:$0xf]
        %v1197 = vpack.c.bf16 %v1161, %v1161
        %v1198 = vpack.c.bf16 %v1162, %v1162
        %v1199 = vpack.c.bf16 %v1163, %v1163
        %v1200 = vpack.c.bf16 %v1164, %v1164
        %v1201 = vpack.c.bf16 %v1165, %v1165
        %v1202 = vpack.c.bf16 %v1166, %v1166
        %v1203 = vpack.c.bf16 %v1167, %v1167
        %v1204 = vpack.c.bf16 %v1168, %v1168
        %v1205 = vpack.c.bf16 %v1169, %v1169
        %v1206 = vpack.c.bf16 %v1170, %v1170
        %v1207 = vpack.c.bf16 %v1171, %v1171
        %v1208 = vpack.c.bf16 %v1172, %v1172
        %v1209 = vpack.c.bf16 %v1173, %v1173
        %v1210 = vpack.c.bf16 %v1174, %v1174
        %v1211 = vpack.c.bf16 %v1175, %v1175
        %v1212 = vpack.c.bf16 %v1176, %v1176
        %v1213 = vpack.c.bf16 %v1177, %v1177
        %v1214 = vpack.c.bf16 %v1178, %v1178
        %v1215 = vpack.c.bf16 %v1179, %v1179
        %v1216 = vpack.c.bf16 %v1180, %v1180
        %v1217 = vpack.c.bf16 %v1181, %v1181
        %v1218 = vpack.c.bf16 %v1182, %v1182
        %v1219 = vpack.c.bf16 %v1183, %v1183
        %v1220 = vpack.c.bf16 %v1184, %v1184
        %v1221 = vpack.c.bf16 %v1185, %v1185
        %v1222 = vpack.c.bf16 %v1186, %v1186
        %v1223 = vpack.c.bf16 %v1187, %v1187
        %v1224 = vpack.c.bf16 %v1188, %v1188
        %v1225 = vpack.c.bf16 %v1189, %v1189
        %v1226 = vpack.c.bf16 %v1190, %v1190
        %v1227 = vpack.c.bf16 %v1191, %v1191
        %v1228 = vpack.c.bf16 %v1192, %v1192
        %v1229 = vld [vmem:[%s6] sm:$0xff]
        %v1230 = vld [vmem:[%s6 + $0x8] sm:$0xff]
        %v1231 = vld [vmem:[%s6 + $0x10] sm:$0xff]
        %v1232 = vld [vmem:[%s6 + $0x18] sm:$0xff]
        %1234 = vset.pattern.permute.xlu0 0
        %1235 = vperm.xlu0 %1234, %v1229
        %v1236 = vpop.permute.xlu0 %1235
        %1239 = vset.pattern.permute.xlu0 0
        %1240 = vperm.xlu0 %1239, %v1230
        %v1241 = vpop.permute.xlu0 %1240
        %1244 = vset.pattern.permute.xlu0 0
        %1245 = vperm.xlu0 %1244, %v1231
        %v1246 = vpop.permute.xlu0 %1245
        %1249 = vset.pattern.permute.xlu0 0
        %1250 = vperm.xlu0 %1249, %v1232
        %v1251 = vpop.permute.xlu0 %1250
        %v1257 = vunpack.c.l.b16 %v1193
        %v1258 = vunpack.c.l.b16 %v1194
        %v1259 = vunpack.c.l.b16 %v1195
        %v1260 = vunpack.c.l.b16 %v1196
        %v1261 = vpack.c.b16 %v1258, %v1257
        %v1262 = vpack.c.b16 %v1260, %v1259
        %v1295 = vunpack.c.l.b16 %v1197
        %v1296 = vunpack.c.l.b16 %v1198
        %v1297 = vunpack.c.l.b16 %v1199
        %v1298 = vunpack.c.l.b16 %v1200
        %v1299 = vunpack.c.l.b16 %v1201
        %v1300 = vunpack.c.l.b16 %v1202
        %v1301 = vunpack.c.l.b16 %v1203
        %v1302 = vunpack.c.l.b16 %v1204
        %v1303 = vunpack.c.l.b16 %v1205
        %v1304 = vunpack.c.l.b16 %v1206
        %v1305 = vunpack.c.l.b16 %v1207
        %v1306 = vunpack.c.l.b16 %v1208
        %v1307 = vunpack.c.l.b16 %v1209
        %v1308 = vunpack.c.l.b16 %v1210
        %v1309 = vunpack.c.l.b16 %v1211
        %v1310 = vunpack.c.l.b16 %v1212
        %v1311 = vunpack.c.l.b16 %v1213
        %v1312 = vunpack.c.l.b16 %v1214
        %v1313 = vunpack.c.l.b16 %v1215
        %v1314 = vunpack.c.l.b16 %v1216
        %v1315 = vunpack.c.l.b16 %v1217
        %v1316 = vunpack.c.l.b16 %v1218
        %v1317 = vunpack.c.l.b16 %v1219
        %v1318 = vunpack.c.l.b16 %v1220
        %v1319 = vunpack.c.l.b16 %v1221
        %v1320 = vunpack.c.l.b16 %v1222
        %v1321 = vunpack.c.l.b16 %v1223
        %v1322 = vunpack.c.l.b16 %v1224
        %v1323 = vunpack.c.l.b16 %v1225
        %v1324 = vunpack.c.l.b16 %v1226
        %v1325 = vunpack.c.l.b16 %v1227
        %v1326 = vunpack.c.l.b16 %v1228
        %1327 = vset.pattern.permute.xlu0 0
        %1328 = vperm.xlu0 %1327, %v1295
        %v1329 = vpop.permute.xlu0 %1328
        %1330 = vset.pattern.permute.xlu0 0
        %1331 = vperm.xlu0 %1330, %v1296
        %v1332 = vpop.permute.xlu0 %1331
        %1333 = vset.pattern.permute.xlu0 0
        %1334 = vperm.xlu0 %1333, %v1297
        %v1335 = vpop.permute.xlu0 %1334
        %1336 = vset.pattern.permute.xlu0 0
        %1337 = vperm.xlu0 %1336, %v1298
        %v1338 = vpop.permute.xlu0 %1337
        %1339 = vset.pattern.permute.xlu0 0
        %1340 = vperm.xlu0 %1339, %v1299
        %v1341 = vpop.permute.xlu0 %1340
        %1342 = vset.pattern.permute.xlu0 0
        %1343 = vperm.xlu0 %1342, %v1300
        %v1344 = vpop.permute.xlu0 %1343
        %1345 = vset.pattern.permute.xlu0 0
        %1346 = vperm.xlu0 %1345, %v1301
        %v1347 = vpop.permute.xlu0 %1346
        %1348 = vset.pattern.permute.xlu0 0
        %1349 = vperm.xlu0 %1348, %v1302
        %v1350 = vpop.permute.xlu0 %1349
        %1351 = vset.pattern.permute.xlu0 0
        %1352 = vperm.xlu0 %1351, %v1303
        %v1353 = vpop.permute.xlu0 %1352
        %1354 = vset.pattern.permute.xlu0 0
        %1355 = vperm.xlu0 %1354, %v1304
        %v1356 = vpop.permute.xlu0 %1355
        %1357 = vset.pattern.permute.xlu0 0
        %1358 = vperm.xlu0 %1357, %v1305
        %v1359 = vpop.permute.xlu0 %1358
        %1360 = vset.pattern.permute.xlu0 0
        %1361 = vperm.xlu0 %1360, %v1306
        %v1362 = vpop.permute.xlu0 %1361
        %1363 = vset.pattern.permute.xlu0 0
        %1364 = vperm.xlu0 %1363, %v1307
        %v1365 = vpop.permute.xlu0 %1364
        %1366 = vset.pattern.permute.xlu0 0
        %1367 = vperm.xlu0 %1366, %v1308
        %v1368 = vpop.permute.xlu0 %1367
        %1369 = vset.pattern.permute.xlu0 0
        %1370 = vperm.xlu0 %1369, %v1309
        %v1371 = vpop.permute.xlu0 %1370
        %1372 = vset.pattern.permute.xlu0 0
        %1373 = vperm.xlu0 %1372, %v1310
        %v1374 = vpop.permute.xlu0 %1373
        %1375 = vset.pattern.permute.xlu0 0
        %1376 = vperm.xlu0 %1375, %v1311
        %v1377 = vpop.permute.xlu0 %1376
        %1378 = vset.pattern.permute.xlu0 0
        %1379 = vperm.xlu0 %1378, %v1312
        %v1380 = vpop.permute.xlu0 %1379
        %1381 = vset.pattern.permute.xlu0 0
        %1382 = vperm.xlu0 %1381, %v1313
        %v1383 = vpop.permute.xlu0 %1382
        %1384 = vset.pattern.permute.xlu0 0
        %1385 = vperm.xlu0 %1384, %v1314
        %v1386 = vpop.permute.xlu0 %1385
        %1387 = vset.pattern.permute.xlu0 0
        %1388 = vperm.xlu0 %1387, %v1315
        %v1389 = vpop.permute.xlu0 %1388
        %1390 = vset.pattern.permute.xlu0 0
        %1391 = vperm.xlu0 %1390, %v1316
        %v1392 = vpop.permute.xlu0 %1391
        %1393 = vset.pattern.permute.xlu0 0
        %1394 = vperm.xlu0 %1393, %v1317
        %v1395 = vpop.permute.xlu0 %1394
        %1396 = vset.pattern.permute.xlu0 0
        %1397 = vperm.xlu0 %1396, %v1318
        %v1398 = vpop.permute.xlu0 %1397
        %1399 = vset.pattern.permute.xlu0 0
        %1400 = vperm.xlu0 %1399, %v1319
        %v1401 = vpop.permute.xlu0 %1400
        %1402 = vset.pattern.permute.xlu0 0
        %1403 = vperm.xlu0 %1402, %v1320
        %v1404 = vpop.permute.xlu0 %1403
        %1405 = vset.pattern.permute.xlu0 0
        %1406 = vperm.xlu0 %1405, %v1321
        %v1407 = vpop.permute.xlu0 %1406
        %1408 = vset.pattern.permute.xlu0 0
        %1409 = vperm.xlu0 %1408, %v1322
        %v1410 = vpop.permute.xlu0 %1409
        %1411 = vset.pattern.permute.xlu0 0
        %1412 = vperm.xlu0 %1411, %v1323
        %v1413 = vpop.permute.xlu0 %1412
        %1414 = vset.pattern.permute.xlu0 0
        %1415 = vperm.xlu0 %1414, %v1324
        %v1416 = vpop.permute.xlu0 %1415
        %1417 = vset.pattern.permute.xlu0 0
        %1418 = vperm.xlu0 %1417, %v1325
        %v1419 = vpop.permute.xlu0 %1418
        %1420 = vset.pattern.permute.xlu0 0
        %1421 = vperm.xlu0 %1420, %v1326
        %v1422 = vpop.permute.xlu0 %1421
        %v1423 = vlaneseq
        %v1424 = vand.u32 %v1423, 127
        %v1425 = vlaneseq
        %v1426 = vshrl.u32 %v1425, 7
        %v1427 = vsub.s32 %v1424, %v1426
        %v1428 = vrot.slane %v1329, %v1427
        %v1429 = vlaneseq
        %v1430 = vshrl.u32 %v1429, 7
        %v1431 = vsub.s32 %v1424, %v1430
        %v1432 = vrot.slane %v1332, %v1431
        %v1433 = vlaneseq
        %v1434 = vshrl.u32 %v1433, 7
        %v1435 = vsub.s32 %v1424, %v1434
        %v1436 = vrot.slane %v1335, %v1435
        %v1437 = vlaneseq
        %v1438 = vshrl.u32 %v1437, 7
        %v1439 = vsub.s32 %v1424, %v1438
        %v1440 = vrot.slane %v1338, %v1439
        %v1441 = vlaneseq
        %v1442 = vshrl.u32 %v1441, 7
        %v1443 = vsub.s32 %v1424, %v1442
        %v1444 = vrot.slane %v1341, %v1443
        %v1445 = vlaneseq
        %v1446 = vshrl.u32 %v1445, 7
        %v1447 = vsub.s32 %v1424, %v1446
        %v1448 = vrot.slane %v1344, %v1447
        %v1449 = vlaneseq
        %v1450 = vshrl.u32 %v1449, 7
        %v1451 = vsub.s32 %v1424, %v1450
        %v1452 = vrot.slane %v1347, %v1451
        %v1453 = vlaneseq
        %v1454 = vshrl.u32 %v1453, 7
        %v1455 = vsub.s32 %v1424, %v1454
        %v1456 = vrot.slane %v1350, %v1455
        %v1457 = vlaneseq
        %v1458 = vshrl.u32 %v1457, 7
        %v1459 = vsub.s32 %v1424, %v1458
        %v1460 = vrot.slane %v1353, %v1459
        %v1461 = vlaneseq
        %v1462 = vshrl.u32 %v1461, 7
        %v1463 = vsub.s32 %v1424, %v1462
        %v1464 = vrot.slane %v1356, %v1463
        %v1465 = vlaneseq
        %v1466 = vshrl.u32 %v1465, 7
        %v1467 = vsub.s32 %v1424, %v1466
        %v1468 = vrot.slane %v1359, %v1467
        %v1469 = vlaneseq
        %v1470 = vshrl.u32 %v1469, 7
        %v1471 = vsub.s32 %v1424, %v1470
        %v1472 = vrot.slane %v1362, %v1471
        %v1473 = vlaneseq
        %v1474 = vshrl.u32 %v1473, 7
        %v1475 = vsub.s32 %v1424, %v1474
        %v1476 = vrot.slane %v1365, %v1475
        %v1477 = vlaneseq
        %v1478 = vshrl.u32 %v1477, 7
        %v1479 = vsub.s32 %v1424, %v1478
        %v1480 = vrot.slane %v1368, %v1479
        %v1481 = vlaneseq
        %v1482 = vshrl.u32 %v1481, 7
        %v1483 = vsub.s32 %v1424, %v1482
        %v1484 = vrot.slane %v1371, %v1483
        %v1485 = vlaneseq
        %v1486 = vshrl.u32 %v1485, 7
        %v1487 = vsub.s32 %v1424, %v1486
        %v1488 = vrot.slane %v1374, %v1487
        %v1489 = vlaneseq
        %v1490 = vshrl.u32 %v1489, 7
        %v1491 = vsub.s32 %v1424, %v1490
        %v1492 = vrot.slane %v1377, %v1491
        %v1493 = vlaneseq
        %v1494 = vshrl.u32 %v1493, 7
        %v1495 = vsub.s32 %v1424, %v1494
        %v1496 = vrot.slane %v1380, %v1495
        %v1497 = vlaneseq
        %v1498 = vshrl.u32 %v1497, 7
        %v1499 = vsub.s32 %v1424, %v1498
        %v1500 = vrot.slane %v1383, %v1499
        %v1501 = vlaneseq
        %v1502 = vshrl.u32 %v1501, 7
        %v1503 = vsub.s32 %v1424, %v1502
        %v1504 = vrot.slane %v1386, %v1503
        %v1505 = vlaneseq
        %v1506 = vshrl.u32 %v1505, 7
        %v1507 = vsub.s32 %v1424, %v1506
        %v1508 = vrot.slane %v1389, %v1507
        %v1509 = vlaneseq
        %v1510 = vshrl.u32 %v1509, 7
        %v1511 = vsub.s32 %v1424, %v1510
        %v1512 = vrot.slane %v1392, %v1511
        %v1513 = vlaneseq
        %v1514 = vshrl.u32 %v1513, 7
        %v1515 = vsub.s32 %v1424, %v1514
        %v1516 = vrot.slane %v1395, %v1515
        %v1517 = vlaneseq
        %v1518 = vshrl.u32 %v1517, 7
        %v1519 = vsub.s32 %v1424, %v1518
        %v1520 = vrot.slane %v1398, %v1519
        %v1521 = vlaneseq
        %v1522 = vshrl.u32 %v1521, 7
        %v1523 = vsub.s32 %v1424, %v1522
        %v1524 = vrot.slane %v1401, %v1523
        %v1525 = vlaneseq
        %v1526 = vshrl.u32 %v1525, 7
        %v1527 = vsub.s32 %v1424, %v1526
        %v1528 = vrot.slane %v1404, %v1527
        %v1529 = vlaneseq
        %v1530 = vshrl.u32 %v1529, 7
        %v1531 = vsub.s32 %v1424, %v1530
        %v1532 = vrot.slane %v1407, %v1531
        %v1533 = vlaneseq
        %v1534 = vshrl.u32 %v1533, 7
        %v1535 = vsub.s32 %v1424, %v1534
        %v1536 = vrot.slane %v1410, %v1535
        %v1537 = vlaneseq
        %v1538 = vshrl.u32 %v1537, 7
        %v1539 = vsub.s32 %v1424, %v1538
        %v1540 = vrot.slane %v1413, %v1539
        %v1541 = vlaneseq
        %v1542 = vshrl.u32 %v1541, 7
        %v1543 = vsub.s32 %v1424, %v1542
        %v1544 = vrot.slane %v1416, %v1543
        %v1545 = vlaneseq
        %v1546 = vshrl.u32 %v1545, 7
        %v1547 = vsub.s32 %v1424, %v1546
        %v1548 = vrot.slane %v1419, %v1547
        %v1549 = vlaneseq
        %v1550 = vshrl.u32 %v1549, 7
        %v1551 = vsub.s32 %v1424, %v1550
        %v1552 = vrot.slane %v1422, %v1551
        %vm1553 = vcmask 1041409
        %v1554 = vsel %vm1553, %v1432, %v1428
        %vm1555 = vcmask 1042434
        %v1556 = vsel %vm1555, %v1436, %v1554
        %vm1557 = vcmask 1043459
        %v1558 = vsel %vm1557, %v1440, %v1556
        %vm1559 = vcmask 1044484
        %v1560 = vsel %vm1559, %v1444, %v1558
        %vm1561 = vcmask 1045509
        %v1562 = vsel %vm1561, %v1448, %v1560
        %vm1563 = vcmask 1046534
        %v1564 = vsel %vm1563, %v1452, %v1562
        %vm1565 = vcmask 1047559
        %v1566 = vsel %vm1565, %v1456, %v1564
        %v1567 = vsel %vm1553, %v1464, %v1460
        %v1568 = vsel %vm1555, %v1468, %v1567
        %v1569 = vsel %vm1557, %v1472, %v1568
        %v1570 = vsel %vm1559, %v1476, %v1569
        %v1571 = vsel %vm1561, %v1480, %v1570
        %v1572 = vsel %vm1563, %v1484, %v1571
        %v1573 = vsel %vm1565, %v1488, %v1572
        %v1574 = vsel %vm1553, %v1496, %v1492
        %v1575 = vsel %vm1555, %v1500, %v1574
        %v1576 = vsel %vm1557, %v1504, %v1575
        %v1577 = vsel %vm1559, %v1508, %v1576
        %v1578 = vsel %vm1561, %v1512, %v1577
        %v1579 = vsel %vm1563, %v1516, %v1578
        %v1580 = vsel %vm1565, %v1520, %v1579
        %v1581 = vsel %vm1553, %v1528, %v1524
        %v1582 = vsel %vm1555, %v1532, %v1581
        %v1583 = vsel %vm1557, %v1536, %v1582
        %v1584 = vsel %vm1559, %v1540, %v1583
        %v1585 = vsel %vm1561, %v1544, %v1584
        %v1586 = vsel %vm1563, %v1548, %v1585
        %v1587 = vsel %vm1565, %v1552, %v1586
        %v1588 = vpack.c.b16 %v1573, %v1566
        %v1589 = vpack.c.b16 %v1587, %v1580
        %vm1592 = vcmask 261120
        %v1594 = vsel %vm1592, %v1261, 0
        %v1597 = vsel %vm1592, %v1262, 0
        %1599 = vmatprep.subr.bf16.mxu0 0
        %1600 = vmatpush1.bf16.msra.mxu0 %v1588
        %1601 = vmatprep.subr.bf16.mxu0 0
        %1602 = vmatpush1.bf16.msra.mxu0 %v1589
        %1603 = vmatprep.subr.bf16.mxu0 0
        %1604 = vmatpush1.bf16.msra.mxu0 0
        %1605 = vmatprep.subr.bf16.mxu0 0
        %1606 = vmatpush1.bf16.msra.mxu0 0
        %1607 = vmatprep.subr.bf16.mxu0 0
        %1608 = vmatpush1.bf16.msra.mxu0 0
        %1609 = vmatprep.subr.bf16.mxu0 0
        %1610 = vmatpush1.bf16.msra.mxu0 0
        %1611 = vmatprep.subr.bf16.mxu0 0
        %1612 = vmatpush1.bf16.msra.mxu0 0
        %1613 = vmatprep.subr.bf16.mxu0 0
        %1614 = vmatpush1.bf16.msra.mxu0 0
        %1615 = vmatprep.subr.bf16.mxu0 0
        %1616 = vmatpush1.bf16.msra.mxu0 0
        %1617 = vmatprep.subr.bf16.mxu0 0
        %1618 = vmatpush1.bf16.msra.mxu0 0
        %1619 = vmatprep.subr.bf16.mxu0 0
        %1620 = vmatpush1.bf16.msra.mxu0 0
        %1621 = vmatprep.subr.bf16.mxu0 0
        %1622 = vmatpush1.bf16.msra.mxu0 0
        %1623 = vmatprep.subr.bf16.mxu0 0
        %1624 = vmatpush1.bf16.msra.mxu0 0
        %1625 = vmatprep.subr.bf16.mxu0 0
        %1626 = vmatpush1.bf16.msra.mxu0 0
        %1627 = vmatprep.subr.bf16.mxu0 0
        %1628 = vmatpush1.bf16.msra.mxu0 0
        %1629 = vmatprep.subr.bf16.mxu0 0
        %1630 = vmatpush1.bf16.msra.mxu0 0
        %1631 = vmatprep.mubr.bf16.mxu0 0
        %1632 = vmatmul.mubr.bf16.gmra.mrb[0].mxu0 %v1594
        %v1633 = vpop.f32.mrb[0].mxu0
        %v1634 = vadd.f32 %v1236, %v1633
        %v1635 = vpop.f32.mrb[0].mxu0
        %v1636 = vpop.f32.mrb[0].mxu0
        %v1637 = vadd.f32 %v1241, %v1636
        %v1638 = vpop.f32.mrb[0].mxu0
        %1639 = vmatprep.mubr.bf16.mxu0 0
        %1640 = vmatmul.mubr.bf16.gmra.mrb[0].mxu0 %v1597
        %v1641 = vpop.f32.mrb[0].mxu0
        %v1642 = vadd.f32 %v1246, %v1641
        %v1643 = vpop.f32.mrb[0].mxu0
        %v1644 = vpop.f32.mrb[0].mxu0
        %v1645 = vadd.f32 %v1251, %v1644
        %v1646 = vpop.f32.mrb[0].mxu0
        %1647 = vdwg.mxu0
        %v1648 = vmax.f32 %v1634, 0.0
        %v1649 = vmax.f32 %v1637, 0.0
        %v1650 = vmax.f32 %v1642, 0.0
        %v1651 = vmax.f32 %v1645, 0.0
        %v1652 = vld [vmem:[%s697] sm:$0xff]
        %1653 = vxpose.xlu0.b32.start [1/16] %v1652, 128
        %1654 = vxpose.xlu0.b32.cont [2/16] 0.0, 128
        %1655 = vxpose.xlu0.b32.cont [3/16] 0.0, 128
        %1656 = vxpose.xlu0.b32.cont [4/16] 0.0, 128
        %1657 = vxpose.xlu0.b32.cont [5/16] 0.0, 128
        %1658 = vxpose.xlu0.b32.cont [6/16] 0.0, 128
        %1659 = vxpose.xlu0.b32.cont [7/16] 0.0, 128
        %1660 = vxpose.xlu0.b32.cont [8/16] 0.0, 128
        %1661 = vxpose.xlu0.b32.cont [9/16] 0.0, 128
        %1662 = vxpose.xlu0.b32.cont [10/16] 0.0, 128
        %1663 = vxpose.xlu0.b32.cont [11/16] 0.0, 128
        %1664 = vxpose.xlu0.b32.cont [12/16] 0.0, 128
        %1665 = vxpose.xlu0.b32.cont [13/16] 0.0, 128
        %1666 = vxpose.xlu0.b32.cont [14/16] 0.0, 128
        %1667 = vxpose.xlu0.b32.cont [15/16] 0.0, 128
        %1668 = vxpose.xlu0.b32.end [16/16] 0.0, 128
        %v1669 = vpop.trf.xlu0
        %v1670 = vpop.trf.xlu0
        %v1671 = vpop.trf.xlu0
        %v1672 = vpop.trf.xlu0
        %v1673 = vpop.trf.xlu0
        %v1674 = vpop.trf.xlu0
        %v1675 = vpop.trf.xlu0
        %v1676 = vpop.trf.xlu0
        %v1677 = vpop.trf.xlu0
        %v1678 = vpop.trf.xlu0
        %v1679 = vpop.trf.xlu0
        %v1680 = vpop.trf.xlu0
        %v1681 = vpop.trf.xlu0
        %v1682 = vpop.trf.xlu0
        %v1683 = vpop.trf.xlu0
        %v1684 = vpop.trf.xlu0
        %v1685 = vadd.f32 %v1648, %v1669
        %v1686 = vadd.f32 %v1649, %v1670
        %v1687 = vadd.f32 %v1650, %v1671
        %v1688 = vadd.f32 %v1651, %v1672
        %v1689 = vlaneseq
        %v1690 = vshrl.u32 %v1689, 7
        %v1691 = vsub.s32 0, %v1690
        %v1692 = vrot.slane %v784, %v1691
        %1694 = vbcast.lane.b32.xlu0 %v1692, 256
        %v1695 = vpop.permute.xlu0 %1694
        %v1696 = vlaneseq
        %v1697 = vshrl.u32 %v1696, 7
        %v1698 = vsub.s32 1, %v1697
        %v1699 = vrot.slane %v784, %v1698
        %1701 = vbcast.lane.b32.xlu0 %v1699, 256
        %v1702 = vpop.permute.xlu0 %1701
        %v1703 = vlaneseq
        %v1704 = vshrl.u32 %v1703, 7
        %v1705 = vsub.s32 2, %v1704
        %v1706 = vrot.slane %v784, %v1705
        %1708 = vbcast.lane.b32.xlu0 %v1706, 256
        %v1709 = vpop.permute.xlu0 %1708
        %v1710 = vlaneseq
        %v1711 = vshrl.u32 %v1710, 7
        %v1712 = vsub.s32 3, %v1711
        %v1713 = vrot.slane %v784, %v1712
        %1715 = vbcast.lane.b32.xlu0 %v1713, 256
        %v1716 = vpop.permute.xlu0 %1715
        %v1717 = vlaneseq
        %v1718 = vshrl.u32 %v1717, 7
        %v1719 = vsub.s32 4, %v1718
        %v1720 = vrot.slane %v784, %v1719
        %1722 = vbcast.lane.b32.xlu0 %v1720, 256
        %v1723 = vpop.permute.xlu0 %1722
        %v1724 = vlaneseq
        %v1725 = vshrl.u32 %v1724, 7
        %v1726 = vsub.s32 5, %v1725
        %v1727 = vrot.slane %v784, %v1726
        %1729 = vbcast.lane.b32.xlu0 %v1727, 256
        %v1730 = vpop.permute.xlu0 %1729
        %v1731 = vlaneseq
        %v1732 = vshrl.u32 %v1731, 7
        %v1733 = vsub.s32 6, %v1732
        %v1734 = vrot.slane %v784, %v1733
        %1736 = vbcast.lane.b32.xlu0 %v1734, 256
        %v1737 = vpop.permute.xlu0 %1736
        %v1738 = vlaneseq
        %v1739 = vshrl.u32 %v1738, 7
        %v1740 = vsub.s32 7, %v1739
        %v1741 = vrot.slane %v784, %v1740
        %1743 = vbcast.lane.b32.xlu0 %v1741, 256
        %v1744 = vpop.permute.xlu0 %1743
        %v1745 = vlaneseq
        %v1746 = vshrl.u32 %v1745, 7
        %v1747 = vsub.s32 0, %v1746
        %v1748 = vrot.slane %v785, %v1747
        %1750 = vbcast.lane.b32.xlu0 %v1748, 256
        %v1751 = vpop.permute.xlu0 %1750
        %v1752 = vlaneseq
        %v1753 = vshrl.u32 %v1752, 7
        %v1754 = vsub.s32 1, %v1753
        %v1755 = vrot.slane %v785, %v1754
        %1757 = vbcast.lane.b32.xlu0 %v1755, 256
        %v1758 = vpop.permute.xlu0 %1757
        %v1759 = vlaneseq
        %v1760 = vshrl.u32 %v1759, 7
        %v1761 = vsub.s32 2, %v1760
        %v1762 = vrot.slane %v785, %v1761
        %1764 = vbcast.lane.b32.xlu0 %v1762, 256
        %v1765 = vpop.permute.xlu0 %1764
        %v1766 = vlaneseq
        %v1767 = vshrl.u32 %v1766, 7
        %v1768 = vsub.s32 3, %v1767
        %v1769 = vrot.slane %v785, %v1768
        %1771 = vbcast.lane.b32.xlu0 %v1769, 256
        %v1772 = vpop.permute.xlu0 %1771
        %v1773 = vlaneseq
        %v1774 = vshrl.u32 %v1773, 7
        %v1775 = vsub.s32 4, %v1774
        %v1776 = vrot.slane %v785, %v1775
        %1778 = vbcast.lane.b32.xlu0 %v1776, 256
        %v1779 = vpop.permute.xlu0 %1778
        %v1780 = vlaneseq
        %v1781 = vshrl.u32 %v1780, 7
        %v1782 = vsub.s32 5, %v1781
        %v1783 = vrot.slane %v785, %v1782
        %1785 = vbcast.lane.b32.xlu0 %v1783, 256
        %v1786 = vpop.permute.xlu0 %1785
        %v1787 = vlaneseq
        %v1788 = vshrl.u32 %v1787, 7
        %v1789 = vsub.s32 6, %v1788
        %v1790 = vrot.slane %v785, %v1789
        %1792 = vbcast.lane.b32.xlu0 %v1790, 256
        %v1793 = vpop.permute.xlu0 %1792
        %v1794 = vlaneseq
        %v1795 = vshrl.u32 %v1794, 7
        %v1796 = vsub.s32 7, %v1795
        %v1797 = vrot.slane %v785, %v1796
        %1799 = vbcast.lane.b32.xlu0 %v1797, 256
        %v1800 = vpop.permute.xlu0 %1799
        %v1801 = vlaneseq
        %v1802 = vshrl.u32 %v1801, 7
        %v1803 = vsub.s32 0, %v1802
        %v1804 = vrot.slane %v786, %v1803
        %1806 = vbcast.lane.b32.xlu0 %v1804, 256
        %v1807 = vpop.permute.xlu0 %1806
        %v1808 = vlaneseq
        %v1809 = vshrl.u32 %v1808, 7
        %v1810 = vsub.s32 1, %v1809
        %v1811 = vrot.slane %v786, %v1810
        %1813 = vbcast.lane.b32.xlu0 %v1811, 256
        %v1814 = vpop.permute.xlu0 %1813
        %v1815 = vlaneseq
        %v1816 = vshrl.u32 %v1815, 7
        %v1817 = vsub.s32 2, %v1816
        %v1818 = vrot.slane %v786, %v1817
        %1820 = vbcast.lane.b32.xlu0 %v1818, 256
        %v1821 = vpop.permute.xlu0 %1820
        %v1822 = vlaneseq
        %v1823 = vshrl.u32 %v1822, 7
        %v1824 = vsub.s32 3, %v1823
        %v1825 = vrot.slane %v786, %v1824
        %1827 = vbcast.lane.b32.xlu0 %v1825, 256
        %v1828 = vpop.permute.xlu0 %1827
        %v1829 = vlaneseq
        %v1830 = vshrl.u32 %v1829, 7
        %v1831 = vsub.s32 4, %v1830
        %v1832 = vrot.slane %v786, %v1831
        %1834 = vbcast.lane.b32.xlu0 %v1832, 256
        %v1835 = vpop.permute.xlu0 %1834
        %v1836 = vlaneseq
        %v1837 = vshrl.u32 %v1836, 7
        %v1838 = vsub.s32 5, %v1837
        %v1839 = vrot.slane %v786, %v1838
        %1841 = vbcast.lane.b32.xlu0 %v1839, 256
        %v1842 = vpop.permute.xlu0 %1841
        %v1843 = vlaneseq
        %v1844 = vshrl.u32 %v1843, 7
        %v1845 = vsub.s32 6, %v1844
        %v1846 = vrot.slane %v786, %v1845
        %1848 = vbcast.lane.b32.xlu0 %v1846, 256
        %v1849 = vpop.permute.xlu0 %1848
        %v1850 = vlaneseq
        %v1851 = vshrl.u32 %v1850, 7
        %v1852 = vsub.s32 7, %v1851
        %v1853 = vrot.slane %v786, %v1852
        %1855 = vbcast.lane.b32.xlu0 %v1853, 256
        %v1856 = vpop.permute.xlu0 %1855
        %v1857 = vlaneseq
        %v1858 = vshrl.u32 %v1857, 7
        %v1859 = vsub.s32 0, %v1858
        %v1860 = vrot.slane %v787, %v1859
        %1862 = vbcast.lane.b32.xlu0 %v1860, 256
        %v1863 = vpop.permute.xlu0 %1862
        %v1864 = vlaneseq
        %v1865 = vshrl.u32 %v1864, 7
        %v1866 = vsub.s32 1, %v1865
        %v1867 = vrot.slane %v787, %v1866
        %1869 = vbcast.lane.b32.xlu0 %v1867, 256
        %v1870 = vpop.permute.xlu0 %1869
        %v1871 = vlaneseq
        %v1872 = vshrl.u32 %v1871, 7
        %v1873 = vsub.s32 2, %v1872
        %v1874 = vrot.slane %v787, %v1873
        %1876 = vbcast.lane.b32.xlu0 %v1874, 256
        %v1877 = vpop.permute.xlu0 %1876
        %v1878 = vlaneseq
        %v1879 = vshrl.u32 %v1878, 7
        %v1880 = vsub.s32 3, %v1879
        %v1881 = vrot.slane %v787, %v1880
        %1883 = vbcast.lane.b32.xlu0 %v1881, 256
        %v1884 = vpop.permute.xlu0 %1883
        %v1885 = vlaneseq
        %v1886 = vshrl.u32 %v1885, 7
        %v1887 = vsub.s32 4, %v1886
        %v1888 = vrot.slane %v787, %v1887
        %1890 = vbcast.lane.b32.xlu0 %v1888, 256
        %v1891 = vpop.permute.xlu0 %1890
        %v1892 = vlaneseq
        %v1893 = vshrl.u32 %v1892, 7
        %v1894 = vsub.s32 5, %v1893
        %v1895 = vrot.slane %v787, %v1894
        %1897 = vbcast.lane.b32.xlu0 %v1895, 256
        %v1898 = vpop.permute.xlu0 %1897
        %v1899 = vlaneseq
        %v1900 = vshrl.u32 %v1899, 7
        %v1901 = vsub.s32 6, %v1900
        %v1902 = vrot.slane %v787, %v1901
        %1904 = vbcast.lane.b32.xlu0 %v1902, 256
        %v1905 = vpop.permute.xlu0 %1904
        %v1906 = vlaneseq
        %v1907 = vshrl.u32 %v1906, 7
        %v1908 = vsub.s32 7, %v1907
        %v1909 = vrot.slane %v787, %v1908
        %1911 = vbcast.lane.b32.xlu0 %v1909, 256
        %v1912 = vpop.permute.xlu0 %1911
        %v1913 = vmul.f32 %v735, %v1695
        %v1914 = vmul.f32 %v736, %v1702
        %v1915 = vmul.f32 %v737, %v1709
        %v1916 = vmul.f32 %v738, %v1716
        %v1917 = vmul.f32 %v739, %v1723
        %v1918 = vmul.f32 %v740, %v1730
        %v1919 = vmul.f32 %v741, %v1737
        %v1920 = vmul.f32 %v742, %v1744
        %v1921 = vmul.f32 %v743, %v1751
        %v1922 = vmul.f32 %v744, %v1758
        %v1923 = vmul.f32 %v745, %v1765
        %v1924 = vmul.f32 %v746, %v1772
        %v1925 = vmul.f32 %v747, %v1779
        %v1926 = vmul.f32 %v748, %v1786
        %v1927 = vmul.f32 %v749, %v1793
        %v1928 = vmul.f32 %v750, %v1800
        %v1929 = vmul.f32 %v751, %v1807
        %v1930 = vmul.f32 %v752, %v1814
        %v1931 = vmul.f32 %v753, %v1821
        %v1932 = vmul.f32 %v754, %v1828
        %v1933 = vmul.f32 %v755, %v1835
        %v1934 = vmul.f32 %v756, %v1842
        %v1935 = vmul.f32 %v757, %v1849
        %v1936 = vmul.f32 %v758, %v1856
        %v1937 = vmul.f32 %v759, %v1863
        %v1938 = vmul.f32 %v760, %v1870
        %v1939 = vmul.f32 %v761, %v1877
        %v1940 = vmul.f32 %v762, %v1884
        %v1941 = vmul.f32 %v763, %v1891
        %v1942 = vmul.f32 %v764, %v1898
        %v1943 = vmul.f32 %v765, %v1905
        %v1944 = vmul.f32 %v766, %v1912
        %v1945 = vadd.f32 %v1913, %v1914
        %v1946 = vadd.f32 %v1945, %v1915
        %v1947 = vadd.f32 %v1946, %v1916
        %v1948 = vadd.f32 %v1947, %v1917
        %v1949 = vadd.f32 %v1948, %v1918
        %v1950 = vadd.f32 %v1949, %v1919
        %v1951 = vadd.f32 %v1950, %v1920
        %v1952 = vadd.f32 %v1951, %v1921
        %v1953 = vadd.f32 %v1952, %v1922
        %v1954 = vadd.f32 %v1953, %v1923
        %v1955 = vadd.f32 %v1954, %v1924
        %v1956 = vadd.f32 %v1955, %v1925
        %v1957 = vadd.f32 %v1956, %v1926
        %v1958 = vadd.f32 %v1957, %v1927
        %v1959 = vadd.f32 %v1958, %v1928
        %v1960 = vadd.f32 %v1959, %v1929
        %v1961 = vadd.f32 %v1960, %v1930
        %v1962 = vadd.f32 %v1961, %v1931
        %v1963 = vadd.f32 %v1962, %v1932
        %v1964 = vadd.f32 %v1963, %v1933
        %v1965 = vadd.f32 %v1964, %v1934
        %v1966 = vadd.f32 %v1965, %v1935
        %v1967 = vadd.f32 %v1966, %v1936
        %v1968 = vadd.f32 %v1967, %v1937
        %v1969 = vadd.f32 %v1968, %v1938
        %v1970 = vadd.f32 %v1969, %v1939
        %v1971 = vadd.f32 %v1970, %v1940
        %v1972 = vadd.f32 %v1971, %v1941
        %v1973 = vadd.f32 %v1972, %v1942
        %v1974 = vadd.f32 %v1973, %v1943
        %v1975 = vadd.f32 %v1974, %v1944
        %v1976 = vlaneseq
        %v1977 = vshrl.u32 %v1976, 7
        %v1978 = vsub.s32 0, %v1977
        %v1979 = vrot.slane %v817, %v1978
        %1981 = vbcast.lane.b32.xlu0 %v1979, 256
        %v1982 = vpop.permute.xlu0 %1981
        %v1983 = vlaneseq
        %v1984 = vshrl.u32 %v1983, 7
        %v1985 = vsub.s32 1, %v1984
        %v1986 = vrot.slane %v817, %v1985
        %1988 = vbcast.lane.b32.xlu0 %v1986, 256
        %v1989 = vpop.permute.xlu0 %1988
        %v1990 = vlaneseq
        %v1991 = vshrl.u32 %v1990, 7
        %v1992 = vsub.s32 2, %v1991
        %v1993 = vrot.slane %v817, %v1992
        %1995 = vbcast.lane.b32.xlu0 %v1993, 256
        %v1996 = vpop.permute.xlu0 %1995
        %v1997 = vlaneseq
        %v1998 = vshrl.u32 %v1997, 7
        %v1999 = vsub.s32 3, %v1998
        %v2000 = vrot.slane %v817, %v1999
        %2002 = vbcast.lane.b32.xlu0 %v2000, 256
        %v2003 = vpop.permute.xlu0 %2002
        %v2004 = vlaneseq
        %v2005 = vshrl.u32 %v2004, 7
        %v2006 = vsub.s32 4, %v2005
        %v2007 = vrot.slane %v817, %v2006
        %2009 = vbcast.lane.b32.xlu0 %v2007, 256
        %v2010 = vpop.permute.xlu0 %2009
        %v2011 = vlaneseq
        %v2012 = vshrl.u32 %v2011, 7
        %v2013 = vsub.s32 5, %v2012
        %v2014 = vrot.slane %v817, %v2013
        %2016 = vbcast.lane.b32.xlu0 %v2014, 256
        %v2017 = vpop.permute.xlu0 %2016
        %v2018 = vlaneseq
        %v2019 = vshrl.u32 %v2018, 7
        %v2020 = vsub.s32 6, %v2019
        %v2021 = vrot.slane %v817, %v2020
        %2023 = vbcast.lane.b32.xlu0 %v2021, 256
        %v2024 = vpop.permute.xlu0 %2023
        %v2025 = vlaneseq
        %v2026 = vshrl.u32 %v2025, 7
        %v2027 = vsub.s32 7, %v2026
        %v2028 = vrot.slane %v817, %v2027
        %2030 = vbcast.lane.b32.xlu0 %v2028, 256
        %v2031 = vpop.permute.xlu0 %2030
        %v2032 = vlaneseq
        %v2033 = vshrl.u32 %v2032, 7
        %v2034 = vsub.s32 0, %v2033
        %v2035 = vrot.slane %v818, %v2034
        %2037 = vbcast.lane.b32.xlu0 %v2035, 256
        %v2038 = vpop.permute.xlu0 %2037
        %v2039 = vlaneseq
        %v2040 = vshrl.u32 %v2039, 7
        %v2041 = vsub.s32 1, %v2040
        %v2042 = vrot.slane %v818, %v2041
        %2044 = vbcast.lane.b32.xlu0 %v2042, 256
        %v2045 = vpop.permute.xlu0 %2044
        %v2046 = vlaneseq
        %v2047 = vshrl.u32 %v2046, 7
        %v2048 = vsub.s32 2, %v2047
        %v2049 = vrot.slane %v818, %v2048
        %2051 = vbcast.lane.b32.xlu0 %v2049, 256
        %v2052 = vpop.permute.xlu0 %2051
        %v2053 = vlaneseq
        %v2054 = vshrl.u32 %v2053, 7
        %v2055 = vsub.s32 3, %v2054
        %v2056 = vrot.slane %v818, %v2055
        %2058 = vbcast.lane.b32.xlu0 %v2056, 256
        %v2059 = vpop.permute.xlu0 %2058
        %v2060 = vlaneseq
        %v2061 = vshrl.u32 %v2060, 7
        %v2062 = vsub.s32 4, %v2061
        %v2063 = vrot.slane %v818, %v2062
        %2065 = vbcast.lane.b32.xlu0 %v2063, 256
        %v2066 = vpop.permute.xlu0 %2065
        %v2067 = vlaneseq
        %v2068 = vshrl.u32 %v2067, 7
        %v2069 = vsub.s32 5, %v2068
        %v2070 = vrot.slane %v818, %v2069
        %2072 = vbcast.lane.b32.xlu0 %v2070, 256
        %v2073 = vpop.permute.xlu0 %2072
        %v2074 = vlaneseq
        %v2075 = vshrl.u32 %v2074, 7
        %v2076 = vsub.s32 6, %v2075
        %v2077 = vrot.slane %v818, %v2076
        %2079 = vbcast.lane.b32.xlu0 %v2077, 256
        %v2080 = vpop.permute.xlu0 %2079
        %v2081 = vlaneseq
        %v2082 = vshrl.u32 %v2081, 7
        %v2083 = vsub.s32 7, %v2082
        %v2084 = vrot.slane %v818, %v2083
        %2086 = vbcast.lane.b32.xlu0 %v2084, 256
        %v2087 = vpop.permute.xlu0 %2086
        %v2088 = vlaneseq
        %v2089 = vshrl.u32 %v2088, 7
        %v2090 = vsub.s32 0, %v2089
        %v2091 = vrot.slane %v819, %v2090
        %2093 = vbcast.lane.b32.xlu0 %v2091, 256
        %v2094 = vpop.permute.xlu0 %2093
        %v2095 = vlaneseq
        %v2096 = vshrl.u32 %v2095, 7
        %v2097 = vsub.s32 1, %v2096
        %v2098 = vrot.slane %v819, %v2097
        %2100 = vbcast.lane.b32.xlu0 %v2098, 256
        %v2101 = vpop.permute.xlu0 %2100
        %v2102 = vlaneseq
        %v2103 = vshrl.u32 %v2102, 7
        %v2104 = vsub.s32 2, %v2103
        %v2105 = vrot.slane %v819, %v2104
        %2107 = vbcast.lane.b32.xlu0 %v2105, 256
        %v2108 = vpop.permute.xlu0 %2107
        %v2109 = vlaneseq
        %v2110 = vshrl.u32 %v2109, 7
        %v2111 = vsub.s32 3, %v2110
        %v2112 = vrot.slane %v819, %v2111
        %2114 = vbcast.lane.b32.xlu0 %v2112, 256
        %v2115 = vpop.permute.xlu0 %2114
        %v2116 = vlaneseq
        %v2117 = vshrl.u32 %v2116, 7
        %v2118 = vsub.s32 4, %v2117
        %v2119 = vrot.slane %v819, %v2118
        %2121 = vbcast.lane.b32.xlu0 %v2119, 256
        %v2122 = vpop.permute.xlu0 %2121
        %v2123 = vlaneseq
        %v2124 = vshrl.u32 %v2123, 7
        %v2125 = vsub.s32 5, %v2124
        %v2126 = vrot.slane %v819, %v2125
        %2128 = vbcast.lane.b32.xlu0 %v2126, 256
        %v2129 = vpop.permute.xlu0 %2128
        %v2130 = vlaneseq
        %v2131 = vshrl.u32 %v2130, 7
        %v2132 = vsub.s32 6, %v2131
        %v2133 = vrot.slane %v819, %v2132
        %2135 = vbcast.lane.b32.xlu0 %v2133, 256
        %v2136 = vpop.permute.xlu0 %2135
        %v2137 = vlaneseq
        %v2138 = vshrl.u32 %v2137, 7
        %v2139 = vsub.s32 7, %v2138
        %v2140 = vrot.slane %v819, %v2139
        %2142 = vbcast.lane.b32.xlu0 %v2140, 256
        %v2143 = vpop.permute.xlu0 %2142
        %v2144 = vlaneseq
        %v2145 = vshrl.u32 %v2144, 7
        %v2146 = vsub.s32 0, %v2145
        %v2147 = vrot.slane %v820, %v2146
        %2149 = vbcast.lane.b32.xlu0 %v2147, 256
        %v2150 = vpop.permute.xlu0 %2149
        %v2151 = vlaneseq
        %v2152 = vshrl.u32 %v2151, 7
        %v2153 = vsub.s32 1, %v2152
        %v2154 = vrot.slane %v820, %v2153
        %2156 = vbcast.lane.b32.xlu0 %v2154, 256
        %v2157 = vpop.permute.xlu0 %2156
        %v2158 = vlaneseq
        %v2159 = vshrl.u32 %v2158, 7
        %v2160 = vsub.s32 2, %v2159
        %v2161 = vrot.slane %v820, %v2160
        %2163 = vbcast.lane.b32.xlu0 %v2161, 256
        %v2164 = vpop.permute.xlu0 %2163
        %v2165 = vlaneseq
        %v2166 = vshrl.u32 %v2165, 7
        %v2167 = vsub.s32 3, %v2166
        %v2168 = vrot.slane %v820, %v2167
        %2170 = vbcast.lane.b32.xlu0 %v2168, 256
        %v2171 = vpop.permute.xlu0 %2170
        %v2172 = vlaneseq
        %v2173 = vshrl.u32 %v2172, 7
        %v2174 = vsub.s32 4, %v2173
        %v2175 = vrot.slane %v820, %v2174
        %2177 = vbcast.lane.b32.xlu0 %v2175, 256
        %v2178 = vpop.permute.xlu0 %2177
        %v2179 = vlaneseq
        %v2180 = vshrl.u32 %v2179, 7
        %v2181 = vsub.s32 5, %v2180
        %v2182 = vrot.slane %v820, %v2181
        %2184 = vbcast.lane.b32.xlu0 %v2182, 256
        %v2185 = vpop.permute.xlu0 %2184
        %v2186 = vlaneseq
        %v2187 = vshrl.u32 %v2186, 7
        %v2188 = vsub.s32 6, %v2187
        %v2189 = vrot.slane %v820, %v2188
        %2191 = vbcast.lane.b32.xlu0 %v2189, 256
        %v2192 = vpop.permute.xlu0 %2191
        %v2193 = vlaneseq
        %v2194 = vshrl.u32 %v2193, 7
        %v2195 = vsub.s32 7, %v2194
        %v2196 = vrot.slane %v820, %v2195
        %2198 = vbcast.lane.b32.xlu0 %v2196, 256
        %v2199 = vpop.permute.xlu0 %2198
        %v2200 = vmul.f32 %v735, %v1982
        %v2201 = vmul.f32 %v736, %v1989
        %v2202 = vmul.f32 %v737, %v1996
        %v2203 = vmul.f32 %v738, %v2003
        %v2204 = vmul.f32 %v739, %v2010
        %v2205 = vmul.f32 %v740, %v2017
        %v2206 = vmul.f32 %v741, %v2024
        %v2207 = vmul.f32 %v742, %v2031
        %v2208 = vmul.f32 %v743, %v2038
        %v2209 = vmul.f32 %v744, %v2045
        %v2210 = vmul.f32 %v745, %v2052
        %v2211 = vmul.f32 %v746, %v2059
        %v2212 = vmul.f32 %v747, %v2066
        %v2213 = vmul.f32 %v748, %v2073
        %v2214 = vmul.f32 %v749, %v2080
        %v2215 = vmul.f32 %v750, %v2087
        %v2216 = vmul.f32 %v751, %v2094
        %v2217 = vmul.f32 %v752, %v2101
        %v2218 = vmul.f32 %v753, %v2108
        %v2219 = vmul.f32 %v754, %v2115
        %v2220 = vmul.f32 %v755, %v2122
        %v2221 = vmul.f32 %v756, %v2129
        %v2222 = vmul.f32 %v757, %v2136
        %v2223 = vmul.f32 %v758, %v2143
        %v2224 = vmul.f32 %v759, %v2150
        %v2225 = vmul.f32 %v760, %v2157
        %v2226 = vmul.f32 %v761, %v2164
        %v2227 = vmul.f32 %v762, %v2171
        %v2228 = vmul.f32 %v763, %v2178
        %v2229 = vmul.f32 %v764, %v2185
        %v2230 = vmul.f32 %v765, %v2192
        %v2231 = vmul.f32 %v766, %v2199
        %v2232 = vadd.f32 %v2200, %v2201
        %v2233 = vadd.f32 %v2232, %v2202
        %v2234 = vadd.f32 %v2233, %v2203
        %v2235 = vadd.f32 %v2234, %v2204
        %v2236 = vadd.f32 %v2235, %v2205
        %v2237 = vadd.f32 %v2236, %v2206
        %v2238 = vadd.f32 %v2237, %v2207
        %v2239 = vadd.f32 %v2238, %v2208
        %v2240 = vadd.f32 %v2239, %v2209
        %v2241 = vadd.f32 %v2240, %v2210
        %v2242 = vadd.f32 %v2241, %v2211
        %v2243 = vadd.f32 %v2242, %v2212
        %v2244 = vadd.f32 %v2243, %v2213
        %v2245 = vadd.f32 %v2244, %v2214
        %v2246 = vadd.f32 %v2245, %v2215
        %v2247 = vadd.f32 %v2246, %v2216
        %v2248 = vadd.f32 %v2247, %v2217
        %v2249 = vadd.f32 %v2248, %v2218
        %v2250 = vadd.f32 %v2249, %v2219
        %v2251 = vadd.f32 %v2250, %v2220
        %v2252 = vadd.f32 %v2251, %v2221
        %v2253 = vadd.f32 %v2252, %v2222
        %v2254 = vadd.f32 %v2253, %v2223
        %v2255 = vadd.f32 %v2254, %v2224
        %v2256 = vadd.f32 %v2255, %v2225
        %v2257 = vadd.f32 %v2256, %v2226
        %v2258 = vadd.f32 %v2257, %v2227
        %v2259 = vadd.f32 %v2258, %v2228
        %v2260 = vadd.f32 %v2259, %v2229
        %v2261 = vadd.f32 %v2260, %v2230
        %v2262 = vadd.f32 %v2261, %v2231
        %v2263 = vpack.c.bf16 %v1975, %v1975
        %v2264 = vpack.c.bf16 %v2262, %v2262
        %v2265 = vld [vmem:[#allocation3] sm:$0xf]
        %v2266 = vld [vmem:[#allocation3 + $0x4] sm:$0xf]
        %v2267 = vld [vmem:[#allocation3 + $0x8] sm:$0xf]
        %v2268 = vld [vmem:[#allocation3 + $0xc] sm:$0xf]
        %v2269 = vld [vmem:[#allocation3 + $0x10] sm:$0xf]
        %v2270 = vld [vmem:[#allocation3 + $0x14] sm:$0xf]
        %v2271 = vld [vmem:[#allocation3 + $0x18] sm:$0xf]
        %v2272 = vld [vmem:[#allocation3 + $0x1c] sm:$0xf]
        %v2273 = vld [vmem:[#allocation3 + $0x20] sm:$0xf]
        %v2274 = vld [vmem:[#allocation3 + $0x24] sm:$0xf]
        %v2275 = vld [vmem:[#allocation3 + $0x28] sm:$0xf]
        %v2276 = vld [vmem:[#allocation3 + $0x2c] sm:$0xf]
        %v2277 = vld [vmem:[#allocation3 + $0x30] sm:$0xf]
        %v2278 = vld [vmem:[#allocation3 + $0x34] sm:$0xf]
        %v2279 = vld [vmem:[#allocation3 + $0x38] sm:$0xf]
        %v2280 = vld [vmem:[#allocation3 + $0x3c] sm:$0xf]
        %v2281 = vld [vmem:[#allocation3 + $0x40] sm:$0xf]
        %v2282 = vld [vmem:[#allocation3 + $0x44] sm:$0xf]
        %v2283 = vld [vmem:[#allocation3 + $0x48] sm:$0xf]
        %v2284 = vld [vmem:[#allocation3 + $0x4c] sm:$0xf]
        %v2285 = vld [vmem:[#allocation3 + $0x50] sm:$0xf]
        %v2286 = vld [vmem:[#allocation3 + $0x54] sm:$0xf]
        %v2287 = vld [vmem:[#allocation3 + $0x58] sm:$0xf]
        %v2288 = vld [vmem:[#allocation3 + $0x5c] sm:$0xf]
        %v2289 = vld [vmem:[#allocation3 + $0x60] sm:$0xf]
        %v2290 = vld [vmem:[#allocation3 + $0x64] sm:$0xf]
        %v2291 = vld [vmem:[#allocation3 + $0x68] sm:$0xf]
        %v2292 = vld [vmem:[#allocation3 + $0x6c] sm:$0xf]
        %v2293 = vld [vmem:[#allocation3 + $0x70] sm:$0xf]
        %v2294 = vld [vmem:[#allocation3 + $0x74] sm:$0xf]
        %v2295 = vld [vmem:[#allocation3 + $0x78] sm:$0xf]
        %v2296 = vld [vmem:[#allocation3 + $0x7c] sm:$0xf]
        %v2297 = vld [vmem:[%s8] sm:$0x1]
        %v2299 = vlaneseq
        %v2300 = vshrl.u32 %v2299, 7
        %v2301 = vsub.s32 0, %v2300
        %v2302 = vrot.slane %v2297, %v2301
        %v2336 = vunpack.c.l.b16 %v2265
        %v2337 = vunpack.c.l.b16 %v2266
        %v2338 = vunpack.c.l.b16 %v2267
        %v2339 = vunpack.c.l.b16 %v2268
        %v2340 = vunpack.c.l.b16 %v2269
        %v2341 = vunpack.c.l.b16 %v2270
        %v2342 = vunpack.c.l.b16 %v2271
        %v2343 = vunpack.c.l.b16 %v2272
        %v2344 = vunpack.c.l.b16 %v2273
        %v2345 = vunpack.c.l.b16 %v2274
        %v2346 = vunpack.c.l.b16 %v2275
        %v2347 = vunpack.c.l.b16 %v2276
        %v2348 = vunpack.c.l.b16 %v2277
        %v2349 = vunpack.c.l.b16 %v2278
        %v2350 = vunpack.c.l.b16 %v2279
        %v2351 = vunpack.c.l.b16 %v2280
        %v2352 = vunpack.c.l.b16 %v2281
        %v2353 = vunpack.c.l.b16 %v2282
        %v2354 = vunpack.c.l.b16 %v2283
        %v2355 = vunpack.c.l.b16 %v2284
        %v2356 = vunpack.c.l.b16 %v2285
        %v2357 = vunpack.c.l.b16 %v2286
        %v2358 = vunpack.c.l.b16 %v2287
        %v2359 = vunpack.c.l.b16 %v2288
        %v2360 = vunpack.c.l.b16 %v2289
        %v2361 = vunpack.c.l.b16 %v2290
        %v2362 = vunpack.c.l.b16 %v2291
        %v2363 = vunpack.c.l.b16 %v2292
        %v2364 = vunpack.c.l.b16 %v2293
        %v2365 = vunpack.c.l.b16 %v2294
        %v2366 = vunpack.c.l.b16 %v2295
        %v2367 = vunpack.c.l.b16 %v2296
        %v2368 = vpack.c.b16 %v2337, %v2336
        %v2369 = vpack.c.b16 %v2339, %v2338
        %v2370 = vpack.c.b16 %v2341, %v2340
        %v2371 = vpack.c.b16 %v2343, %v2342
        %v2372 = vpack.c.b16 %v2345, %v2344
        %v2373 = vpack.c.b16 %v2347, %v2346
        %v2374 = vpack.c.b16 %v2349, %v2348
        %v2375 = vpack.c.b16 %v2351, %v2350
        %v2376 = vpack.c.b16 %v2353, %v2352
        %v2377 = vpack.c.b16 %v2355, %v2354
        %v2378 = vpack.c.b16 %v2357, %v2356
        %v2379 = vpack.c.b16 %v2359, %v2358
        %v2380 = vpack.c.b16 %v2361, %v2360
        %v2381 = vpack.c.b16 %v2363, %v2362
        %v2382 = vpack.c.b16 %v2365, %v2364
        %v2383 = vpack.c.b16 %v2367, %v2366
        %2400 = vmatprep.subr.bf16.mxu0 0
        %2401 = vmatpush1.bf16.msra.mxu0 %v2368
        %2402 = vmatprep.subr.bf16.mxu0 0
        %2403 = vmatpush1.bf16.msra.mxu0 %v2369
        %2404 = vmatprep.subr.bf16.mxu0 0
        %2405 = vmatpush1.bf16.msra.mxu0 %v2370
        %2406 = vmatprep.subr.bf16.mxu0 0
        %2407 = vmatpush1.bf16.msra.mxu0 %v2371
        %2408 = vmatprep.subr.bf16.mxu0 0
        %2409 = vmatpush1.bf16.msra.mxu0 %v2372
        %2410 = vmatprep.subr.bf16.mxu0 0
        %2411 = vmatpush1.bf16.msra.mxu0 %v2373
        %2412 = vmatprep.subr.bf16.mxu0 0
        %2413 = vmatpush1.bf16.msra.mxu0 %v2374
        %2414 = vmatprep.subr.bf16.mxu0 0
        %2415 = vmatpush1.bf16.msra.mxu0 %v2375
        %2416 = vmatprep.subr.bf16.mxu0 0
        %2417 = vmatpush1.bf16.msra.mxu0 %v2376
        %2418 = vmatprep.subr.bf16.mxu0 0
        %2419 = vmatpush1.bf16.msra.mxu0 %v2377
        %2420 = vmatprep.subr.bf16.mxu0 0
        %2421 = vmatpush1.bf16.msra.mxu0 %v2378
        %2422 = vmatprep.subr.bf16.mxu0 0
        %2423 = vmatpush1.bf16.msra.mxu0 %v2379
        %2424 = vmatprep.subr.bf16.mxu0 0
        %2425 = vmatpush1.bf16.msra.mxu0 %v2380
        %2426 = vmatprep.subr.bf16.mxu0 0
        %2427 = vmatpush1.bf16.msra.mxu0 %v2381
        %2428 = vmatprep.subr.bf16.mxu0 0
        %2429 = vmatpush1.bf16.msra.mxu0 %v2382
        %2430 = vmatprep.subr.bf16.mxu0 0
        %2431 = vmatpush1.bf16.msra.mxu0 %v2383
        %2432 = vmatprep.mubr.bf16.mxu0 %v2264
        %2433 = vmatmul.mubr.bf16.gmra.mrb[0].mxu0 %v2263
        %v2434 = vpop.f32.mrb[0].mxu0
        %v2435 = vadd.f32 %v2302, %v2434
        %v2436 = vpop.f32.mrb[0].mxu0
        %v2437 = vpop.f32.mrb[0].mxu0
        %v2438 = vpop.f32.mrb[0].mxu0
        %2439 = vdwg.mxu0
        %v2440 = vmax.f32 %v2435, 0.0
        %v2441 = vld [vmem:[%s701] sm:$0xff]
        %v2442 = vadd.f32 %v2440, %v2441
        %v2443 = vpack.c.bf16 %v2442, %v2442
        %v2444 = vld [vmem:[#allocation8] sm:$0xf]
        %v2445 = vld [vmem:[#allocation8 + $0x4] sm:$0xf]
        %v2446 = vld [vmem:[#allocation8 + $0x8] sm:$0xf]
        %v2447 = vld [vmem:[#allocation8 + $0xc] sm:$0xf]
        %v2448 = vld [vmem:[#allocation8 + $0x10] sm:$0xf]
        %v2449 = vld [vmem:[#allocation8 + $0x14] sm:$0xf]
        %v2450 = vld [vmem:[#allocation8 + $0x18] sm:$0xf]
        %v2451 = vld [vmem:[#allocation8 + $0x1c] sm:$0xf]
        %v2452 = vld [vmem:[#allocation8 + $0x20] sm:$0xf]
        %v2453 = vld [vmem:[#allocation8 + $0x24] sm:$0xf]
        %v2454 = vld [vmem:[#allocation8 + $0x28] sm:$0xf]
        %v2455 = vld [vmem:[#allocation8 + $0x2c] sm:$0xf]
        %v2456 = vld [vmem:[#allocation8 + $0x30] sm:$0xf]
        %v2457 = vld [vmem:[#allocation8 + $0x34] sm:$0xf]
        %v2458 = vld [vmem:[#allocation8 + $0x38] sm:$0xf]
        %v2459 = vld [vmem:[#allocation8 + $0x3c] sm:$0xf]
        %v2476 = vunpack.c.l.b16 %v2444
        %v2477 = vunpack.c.l.b16 %v2445
        %v2478 = vunpack.c.l.b16 %v2446
        %v2479 = vunpack.c.l.b16 %v2447
        %v2480 = vunpack.c.l.b16 %v2448
        %v2481 = vunpack.c.l.b16 %v2449
        %v2482 = vunpack.c.l.b16 %v2450
        %v2483 = vunpack.c.l.b16 %v2451
        %v2484 = vunpack.c.l.b16 %v2452
        %v2485 = vunpack.c.l.b16 %v2453
        %v2486 = vunpack.c.l.b16 %v2454
        %v2487 = vunpack.c.l.b16 %v2455
        %v2488 = vunpack.c.l.b16 %v2456
        %v2489 = vunpack.c.l.b16 %v2457
        %v2490 = vunpack.c.l.b16 %v2458
        %v2491 = vunpack.c.l.b16 %v2459
        %v2492 = vpack.c.b16 %v2477, %v2476
        %v2493 = vpack.c.b16 %v2479, %v2478
        %v2494 = vpack.c.b16 %v2481, %v2480
        %v2495 = vpack.c.b16 %v2483, %v2482
        %v2496 = vpack.c.b16 %v2485, %v2484
        %v2497 = vpack.c.b16 %v2487, %v2486
        %v2498 = vpack.c.b16 %v2489, %v2488
        %v2499 = vpack.c.b16 %v2491, %v2490
        %2508 = vmatprep.subr.bf16.mxu0 0
        %2509 = vmatpush1.bf16.msra.mxu0 %v2492
        %2510 = vmatprep.subr.bf16.mxu0 0
        %2511 = vmatpush1.bf16.msra.mxu0 %v2493
        %2512 = vmatprep.subr.bf16.mxu0 0
        %2513 = vmatpush1.bf16.msra.mxu0 %v2494
        %2514 = vmatprep.subr.bf16.mxu0 0
        %2515 = vmatpush1.bf16.msra.mxu0 %v2495
        %2516 = vmatprep.subr.bf16.mxu0 0
        %2517 = vmatpush1.bf16.msra.mxu0 %v2496
        %2518 = vmatprep.subr.bf16.mxu0 0
        %2519 = vmatpush1.bf16.msra.mxu0 %v2497
        %2520 = vmatprep.subr.bf16.mxu0 0
        %2521 = vmatpush1.bf16.msra.mxu0 %v2498
        %2522 = vmatprep.subr.bf16.mxu0 0
        %2523 = vmatpush1.bf16.msra.mxu0 %v2499
        %2524 = vmatprep.subr.bf16.mxu0 0
        %2525 = vmatpush1.bf16.msra.mxu0 0
        %2526 = vmatprep.subr.bf16.mxu0 0
        %2527 = vmatpush1.bf16.msra.mxu0 0
        %2528 = vmatprep.subr.bf16.mxu0 0
        %2529 = vmatpush1.bf16.msra.mxu0 0
        %2530 = vmatprep.subr.bf16.mxu0 0
        %2531 = vmatpush1.bf16.msra.mxu0 0
        %2532 = vmatprep.subr.bf16.mxu0 0
        %2533 = vmatpush1.bf16.msra.mxu0 0
        %2534 = vmatprep.subr.bf16.mxu0 0
        %2535 = vmatpush1.bf16.msra.mxu0 0
        %2536 = vmatprep.subr.bf16.mxu0 0
        %2537 = vmatpush1.bf16.msra.mxu0 0
        %2538 = vmatprep.subr.bf16.mxu0 0
        %2539 = vmatpush1.bf16.msra.mxu0 0
        %2540 = vmatprep.mubr.bf16.mxu0 0
        %2541 = vmatmul.mubr.bf16.gmra.mrb[0].mxu0 %v2443
        %v2542 = vpop.f32.mrb[0].mxu0
        %v2543 = vadd.f32 0.0, %v2542
        %v2544 = vpop.f32.mrb[0].mxu0
        %v2545 = vpop.f32.mrb[0].mxu0
        %v2546 = vpop.f32.mrb[0].mxu0
        %2547 = vdwg.mxu0
        %v2548 = vld [vmem:[#allocation6] sm:$0xf]
        %v2549 = vld [vmem:[#allocation6 + $0x4] sm:$0xf]
        %v2550 = vld [vmem:[#allocation6 + $0x8] sm:$0xf]
        %v2551 = vld [vmem:[#allocation6 + $0xc] sm:$0xf]
        %v2552 = vld [vmem:[#allocation6 + $0x10] sm:$0xf]
        %v2553 = vld [vmem:[#allocation6 + $0x14] sm:$0xf]
        %v2554 = vld [vmem:[#allocation6 + $0x18] sm:$0xf]
        %v2555 = vld [vmem:[#allocation6 + $0x1c] sm:$0xf]
        %v2556 = vld [vmem:[#allocation6 + $0x20] sm:$0xf]
        %v2557 = vld [vmem:[#allocation6 + $0x24] sm:$0xf]
        %v2558 = vld [vmem:[#allocation6 + $0x28] sm:$0xf]
        %v2559 = vld [vmem:[#allocation6 + $0x2c] sm:$0xf]
        %v2560 = vld [vmem:[#allocation6 + $0x30] sm:$0xf]
        %v2561 = vld [vmem:[#allocation6 + $0x34] sm:$0xf]
        %v2562 = vld [vmem:[#allocation6 + $0x38] sm:$0xf]
        %v2563 = vld [vmem:[#allocation6 + $0x3c] sm:$0xf]
        %v2564 = vld [vmem:[#allocation9] sm:$0x1]
        %v2566 = vlaneseq
        %v2567 = vshrl.u32 %v2566, 7
        %v2568 = vsub.s32 0, %v2567
        %v2569 = vrot.slane %v2564, %v2568
        %v2603 = vunpack.c.l.b16 %v703
        %v2604 = vunpack.c.l.b16 %v704
        %v2605 = vunpack.c.l.b16 %v705
        %v2606 = vunpack.c.l.b16 %v706
        %v2607 = vunpack.c.l.b16 %v707
        %v2608 = vunpack.c.l.b16 %v708
        %v2609 = vunpack.c.l.b16 %v709
        %v2610 = vunpack.c.l.b16 %v710
        %v2611 = vunpack.c.l.b16 %v711
        %v2612 = vunpack.c.l.b16 %v712
        %v2613 = vunpack.c.l.b16 %v713
        %v2614 = vunpack.c.l.b16 %v714
        %v2615 = vunpack.c.l.b16 %v715
        %v2616 = vunpack.c.l.b16 %v716
        %v2617 = vunpack.c.l.b16 %v717
        %v2618 = vunpack.c.l.b16 %v718
        %v2619 = vunpack.c.l.b16 %v719
        %v2620 = vunpack.c.l.b16 %v720
        %v2621 = vunpack.c.l.b16 %v721
        %v2622 = vunpack.c.l.b16 %v722
        %v2623 = vunpack.c.l.b16 %v723
        %v2624 = vunpack.c.l.b16 %v724
        %v2625 = vunpack.c.l.b16 %v725
        %v2626 = vunpack.c.l.b16 %v726
        %v2627 = vunpack.c.l.b16 %v727
        %v2628 = vunpack.c.l.b16 %v728
        %v2629 = vunpack.c.l.b16 %v729
        %v2630 = vunpack.c.l.b16 %v730
        %v2631 = vunpack.c.l.b16 %v731
        %v2632 = vunpack.c.l.b16 %v732
        %v2633 = vunpack.c.l.b16 %v733
        %v2634 = vunpack.c.l.b16 %v734
        %v2635 = vpack.c.b16 %v2604, %v2603
        %v2636 = vpack.c.b16 %v2606, %v2605
        %v2637 = vpack.c.b16 %v2608, %v2607
        %v2638 = vpack.c.b16 %v2610, %v2609
        %v2639 = vpack.c.b16 %v2612, %v2611
        %v2640 = vpack.c.b16 %v2614, %v2613
        %v2641 = vpack.c.b16 %v2616, %v2615
        %v2642 = vpack.c.b16 %v2618, %v2617
        %v2643 = vpack.c.b16 %v2620, %v2619
        %v2644 = vpack.c.b16 %v2622, %v2621
        %v2645 = vpack.c.b16 %v2624, %v2623
        %v2646 = vpack.c.b16 %v2626, %v2625
        %v2647 = vpack.c.b16 %v2628, %v2627
        %v2648 = vpack.c.b16 %v2630, %v2629
        %v2649 = vpack.c.b16 %v2632, %v2631
        %v2650 = vpack.c.b16 %v2634, %v2633
        %v2683 = vunpack.c.l.b16 %v2548
        %v2684 = vunpack.c.l.b16 %v2549
        %v2685 = vunpack.c.l.b16 %v2550
        %v2686 = vunpack.c.l.b16 %v2551
        %v2687 = vunpack.c.l.b16 %v2552
        %v2688 = vunpack.c.l.b16 %v2553
        %v2689 = vunpack.c.l.b16 %v2554
        %v2690 = vunpack.c.l.b16 %v2555
        %v2691 = vunpack.c.l.b16 %v2556
        %v2692 = vunpack.c.l.b16 %v2557
        %v2693 = vunpack.c.l.b16 %v2558
        %v2694 = vunpack.c.l.b16 %v2559
        %v2695 = vunpack.c.l.b16 %v2560
        %v2696 = vunpack.c.l.b16 %v2561
        %v2697 = vunpack.c.l.b16 %v2562
        %v2698 = vunpack.c.l.b16 %v2563
        %v2699 = vpack.c.b16 %v2684, %v2683
        %v2700 = vpack.c.b16 %v2686, %v2685
        %v2701 = vpack.c.b16 %v2688, %v2687
        %v2702 = vpack.c.b16 %v2690, %v2689
        %v2703 = vpack.c.b16 %v2692, %v2691
        %v2704 = vpack.c.b16 %v2694, %v2693
        %v2705 = vpack.c.b16 %v2696, %v2695
        %v2706 = vpack.c.b16 %v2698, %v2697
        %2715 = vmatprep.subr.bf16.mxu0 0
        %2716 = vmatpush1.bf16.msra.mxu0 %v2699
        %2717 = vmatprep.subr.bf16.mxu0 0
        %2718 = vmatpush1.bf16.msra.mxu0 %v2700
        %2719 = vmatprep.subr.bf16.mxu0 0
        %2720 = vmatpush1.bf16.msra.mxu0 %v2701
        %2721 = vmatprep.subr.bf16.mxu0 0
        %2722 = vmatpush1.bf16.msra.mxu0 %v2702
        %2723 = vmatprep.subr.bf16.mxu0 0
        %2724 = vmatpush1.bf16.msra.mxu0 %v2703
        %2725 = vmatprep.subr.bf16.mxu0 0
        %2726 = vmatpush1.bf16.msra.mxu0 %v2704
        %2727 = vmatprep.subr.bf16.mxu0 0
        %2728 = vmatpush1.bf16.msra.mxu0 %v2705
        %2729 = vmatprep.subr.bf16.mxu0 0
        %2730 = vmatpush1.bf16.msra.mxu0 %v2706
        %2731 = vmatprep.subr.bf16.mxu0 0
        %2732 = vmatpush1.bf16.msra.mxu0 0
        %2733 = vmatprep.subr.bf16.mxu0 0
        %2734 = vmatpush1.bf16.msra.mxu0 0
        %2735 = vmatprep.subr.bf16.mxu0 0
        %2736 = vmatpush1.bf16.msra.mxu0 0
        %2737 = vmatprep.subr.bf16.mxu0 0
        %2738 = vmatpush1.bf16.msra.mxu0 0
        %2739 = vmatprep.subr.bf16.mxu0 0
        %2740 = vmatpush1.bf16.msra.mxu0 0
        %2741 = vmatprep.subr.bf16.mxu0 0
        %2742 = vmatpush1.bf16.msra.mxu0 0
        %2743 = vmatprep.subr.bf16.mxu0 0
        %2744 = vmatpush1.bf16.msra.mxu0 0
        %2745 = vmatprep.subr.bf16.mxu0 0
        %2746 = vmatpush1.bf16.msra.mxu0 0
        %2747 = vmatprep.mubr.bf16.mxu0 0
        %2748 = vmatmul.mubr.bf16.gmra.mrb[0].mxu0 %v2635
        %v2749 = vpop.f32.mrb[0].mxu0
        %v2750 = vadd.f32 %v2569, %v2749
        %v2751 = vpop.f32.mrb[0].mxu0
        %v2752 = vpop.f32.mrb[0].mxu0
        %v2753 = vadd.f32 %v2569, %v2752
        %v2754 = vpop.f32.mrb[0].mxu0
        %2755 = vmatprep.mubr.bf16.mxu0 0
        %2756 = vmatmul.mubr.bf16.gmra.mrb[0].mxu0 %v2636
        %v2757 = vpop.f32.mrb[0].mxu0
        %v2758 = vadd.f32 %v2569, %v2757
        %v2759 = vpop.f32.mrb[0].mxu0
        %v2760 = vpop.f32.mrb[0].mxu0
        %v2761 = vadd.f32 %v2569, %v2760
        %v2762 = vpop.f32.mrb[0].mxu0
        %2763 = vmatprep.mubr.bf16.mxu0 0
        %2764 = vmatmul.mubr.bf16.gmra.mrb[0].mxu0 %v2637
        %v2765 = vpop.f32.mrb[0].mxu0
        %v2766 = vadd.f32 %v2569, %v2765
        %v2767 = vpop.f32.mrb[0].mxu0
        %v2768 = vpop.f32.mrb[0].mxu0
        %v2769 = vadd.f32 %v2569, %v2768
        %v2770 = vpop.f32.mrb[0].mxu0
        %2771 = vmatprep.mubr.bf16.mxu0 0
        %2772 = vmatmul.mubr.bf16.gmra.mrb[0].mxu0 %v2638
        %v2773 = vpop.f32.mrb[0].mxu0
        %v2774 = vadd.f32 %v2569, %v2773
        %v2775 = vpop.f32.mrb[0].mxu0
        %v2776 = vpop.f32.mrb[0].mxu0
        %v2777 = vadd.f32 %v2569, %v2776
        %v2778 = vpop.f32.mrb[0].mxu0
        %2779 = vmatprep.mubr.bf16.mxu0 0
        %2780 = vmatmul.mubr.bf16.gmra.mrb[0].mxu0 %v2639
        %v2781 = vpop.f32.mrb[0].mxu0
        %v2782 = vadd.f32 %v2569, %v2781
        %v2783 = vpop.f32.mrb[0].mxu0
        %v2784 = vpop.f32.mrb[0].mxu0
        %v2785 = vadd.f32 %v2569, %v2784
        %v2786 = vpop.f32.mrb[0].mxu0
        %2787 = vmatprep.mubr.bf16.mxu0 0
        %2788 = vmatmul.mubr.bf16.gmra.mrb[0].mxu0 %v2640
        %v2789 = vpop.f32.mrb[0].mxu0
        %v2790 = vadd.f32 %v2569, %v2789
        %v2791 = vpop.f32.mrb[0].mxu0
        %v2792 = vpop.f32.mrb[0].mxu0
        %v2793 = vadd.f32 %v2569, %v2792
        %v2794 = vpop.f32.mrb[0].mxu0
        %2795 = vmatprep.mubr.bf16.mxu0 0
        %2796 = vmatmul.mubr.bf16.gmra.mrb[0].mxu0 %v2641
        %v2797 = vpop.f32.mrb[0].mxu0
        %v2798 = vadd.f32 %v2569, %v2797
        %v2799 = vpop.f32.mrb[0].mxu0
        %v2800 = vpop.f32.mrb[0].mxu0
        %v2801 = vadd.f32 %v2569, %v2800
        %v2802 = vpop.f32.mrb[0].mxu0
        %2803 = vmatprep.mubr.bf16.mxu0 0
        %2804 = vmatmul.mubr.bf16.gmra.mrb[0].mxu0 %v2642
        %v2805 = vpop.f32.mrb[0].mxu0
        %v2806 = vadd.f32 %v2569, %v2805
        %v2807 = vpop.f32.mrb[0].mxu0
        %v2808 = vpop.f32.mrb[0].mxu0
        %v2809 = vadd.f32 %v2569, %v2808
        %v2810 = vpop.f32.mrb[0].mxu0
        %2811 = vmatprep.mubr.bf16.mxu0 0
        %2812 = vmatmul.mubr.bf16.gmra.mrb[0].mxu0 %v2643
        %v2813 = vpop.f32.mrb[0].mxu0
        %v2814 = vadd.f32 %v2569, %v2813
        %v2815 = vpop.f32.mrb[0].mxu0
        %v2816 = vpop.f32.mrb[0].mxu0
        %v2817 = vadd.f32 %v2569, %v2816
        %v2818 = vpop.f32.mrb[0].mxu0
        %2819 = vmatprep.mubr.bf16.mxu0 0
        %2820 = vmatmul.mubr.bf16.gmra.mrb[0].mxu0 %v2644
        %v2821 = vpop.f32.mrb[0].mxu0
        %v2822 = vadd.f32 %v2569, %v2821
        %v2823 = vpop.f32.mrb[0].mxu0
        %v2824 = vpop.f32.mrb[0].mxu0
        %v2825 = vadd.f32 %v2569, %v2824
        %v2826 = vpop.f32.mrb[0].mxu0
        %2827 = vmatprep.mubr.bf16.mxu0 0
        %2828 = vmatmul.mubr.bf16.gmra.mrb[0].mxu0 %v2645
        %v2829 = vpop.f32.mrb[0].mxu0
        %v2830 = vadd.f32 %v2569, %v2829
        %v2831 = vpop.f32.mrb[0].mxu0
        %v2832 = vpop.f32.mrb[0].mxu0
        %v2833 = vadd.f32 %v2569, %v2832
        %v2834 = vpop.f32.mrb[0].mxu0
        %2835 = vmatprep.mubr.bf16.mxu0 0
        %2836 = vmatmul.mubr.bf16.gmra.mrb[0].mxu0 %v2646
        %v2837 = vpop.f32.mrb[0].mxu0
        %v2838 = vadd.f32 %v2569, %v2837
        %v2839 = vpop.f32.mrb[0].mxu0
        %v2840 = vpop.f32.mrb[0].mxu0
        %v2841 = vadd.f32 %v2569, %v2840
        %v2842 = vpop.f32.mrb[0].mxu0
        %2843 = vmatprep.mubr.bf16.mxu0 0
        %2844 = vmatmul.mubr.bf16.gmra.mrb[0].mxu0 %v2647
        %v2845 = vpop.f32.mrb[0].mxu0
        %v2846 = vadd.f32 %v2569, %v2845
        %v2847 = vpop.f32.mrb[0].mxu0
        %v2848 = vpop.f32.mrb[0].mxu0
        %v2849 = vadd.f32 %v2569, %v2848
        %v2850 = vpop.f32.mrb[0].mxu0
        %2851 = vmatprep.mubr.bf16.mxu0 0
        %2852 = vmatmul.mubr.bf16.gmra.mrb[0].mxu0 %v2648
        %v2853 = vpop.f32.mrb[0].mxu0
        %v2854 = vadd.f32 %v2569, %v2853
        %v2855 = vpop.f32.mrb[0].mxu0
        %v2856 = vpop.f32.mrb[0].mxu0
        %v2857 = vadd.f32 %v2569, %v2856
        %v2858 = vpop.f32.mrb[0].mxu0
        %2859 = vmatprep.mubr.bf16.mxu0 0
        %2860 = vmatmul.mubr.bf16.gmra.mrb[0].mxu0 %v2649
        %v2861 = vpop.f32.mrb[0].mxu0
        %v2862 = vadd.f32 %v2569, %v2861
        %v2863 = vpop.f32.mrb[0].mxu0
        %v2864 = vpop.f32.mrb[0].mxu0
        %v2865 = vadd.f32 %v2569, %v2864
        %v2866 = vpop.f32.mrb[0].mxu0
        %2867 = vmatprep.mubr.bf16.mxu0 0
        %2868 = vmatmul.mubr.bf16.gmra.mrb[0].mxu0 %v2650
        %v2869 = vpop.f32.mrb[0].mxu0
        %v2870 = vadd.f32 %v2569, %v2869
        %v2871 = vpop.f32.mrb[0].mxu0
        %v2872 = vpop.f32.mrb[0].mxu0
        %v2873 = vadd.f32 %v2569, %v2872
        %v2874 = vpop.f32.mrb[0].mxu0
        %2875 = vdwg.mxu0
        %v2876 = vlaneseq
        %v2877 = vshrl.u32 %v2876, 7
        %v2878 = vsub.s32 0, %v2877
        %v2879 = vrot.slane %v1685, %v2878
        %2881 = vbcast.lane.b32.xlu0 %v2879, 256
        %v2882 = vpop.permute.xlu0 %2881
        %v2883 = vlaneseq
        %v2884 = vshrl.u32 %v2883, 7
        %v2885 = vsub.s32 1, %v2884
        %v2886 = vrot.slane %v1685, %v2885
        %2888 = vbcast.lane.b32.xlu0 %v2886, 256
        %v2889 = vpop.permute.xlu0 %2888
        %v2890 = vlaneseq
        %v2891 = vshrl.u32 %v2890, 7
        %v2892 = vsub.s32 2, %v2891
        %v2893 = vrot.slane %v1685, %v2892
        %2895 = vbcast.lane.b32.xlu0 %v2893, 256
        %v2896 = vpop.permute.xlu0 %2895
        %v2897 = vlaneseq
        %v2898 = vshrl.u32 %v2897, 7
        %v2899 = vsub.s32 3, %v2898
        %v2900 = vrot.slane %v1685, %v2899
        %2902 = vbcast.lane.b32.xlu0 %v2900, 256
        %v2903 = vpop.permute.xlu0 %2902
        %v2904 = vlaneseq
        %v2905 = vshrl.u32 %v2904, 7
        %v2906 = vsub.s32 4, %v2905
        %v2907 = vrot.slane %v1685, %v2906
        %2909 = vbcast.lane.b32.xlu0 %v2907, 256
        %v2910 = vpop.permute.xlu0 %2909
        %v2911 = vlaneseq
        %v2912 = vshrl.u32 %v2911, 7
        %v2913 = vsub.s32 5, %v2912
        %v2914 = vrot.slane %v1685, %v2913
        %2916 = vbcast.lane.b32.xlu0 %v2914, 256
        %v2917 = vpop.permute.xlu0 %2916
        %v2918 = vlaneseq
        %v2919 = vshrl.u32 %v2918, 7
        %v2920 = vsub.s32 6, %v2919
        %v2921 = vrot.slane %v1685, %v2920
        %2923 = vbcast.lane.b32.xlu0 %v2921, 256
        %v2924 = vpop.permute.xlu0 %2923
        %v2925 = vlaneseq
        %v2926 = vshrl.u32 %v2925, 7
        %v2927 = vsub.s32 7, %v2926
        %v2928 = vrot.slane %v1685, %v2927
        %2930 = vbcast.lane.b32.xlu0 %v2928, 256
        %v2931 = vpop.permute.xlu0 %2930
        %v2932 = vlaneseq
        %v2933 = vshrl.u32 %v2932, 7
        %v2934 = vsub.s32 0, %v2933
        %v2935 = vrot.slane %v1686, %v2934
        %2937 = vbcast.lane.b32.xlu0 %v2935, 256
        %v2938 = vpop.permute.xlu0 %2937
        %v2939 = vlaneseq
        %v2940 = vshrl.u32 %v2939, 7
        %v2941 = vsub.s32 1, %v2940
        %v2942 = vrot.slane %v1686, %v2941
        %2944 = vbcast.lane.b32.xlu0 %v2942, 256
        %v2945 = vpop.permute.xlu0 %2944
        %v2946 = vlaneseq
        %v2947 = vshrl.u32 %v2946, 7
        %v2948 = vsub.s32 2, %v2947
        %v2949 = vrot.slane %v1686, %v2948
        %2951 = vbcast.lane.b32.xlu0 %v2949, 256
        %v2952 = vpop.permute.xlu0 %2951
        %v2953 = vlaneseq
        %v2954 = vshrl.u32 %v2953, 7
        %v2955 = vsub.s32 3, %v2954
        %v2956 = vrot.slane %v1686, %v2955
        %2958 = vbcast.lane.b32.xlu0 %v2956, 256
        %v2959 = vpop.permute.xlu0 %2958
        %v2960 = vlaneseq
        %v2961 = vshrl.u32 %v2960, 7
        %v2962 = vsub.s32 4, %v2961
        %v2963 = vrot.slane %v1686, %v2962
        %2965 = vbcast.lane.b32.xlu0 %v2963, 256
        %v2966 = vpop.permute.xlu0 %2965
        %v2967 = vlaneseq
        %v2968 = vshrl.u32 %v2967, 7
        %v2969 = vsub.s32 5, %v2968
        %v2970 = vrot.slane %v1686, %v2969
        %2972 = vbcast.lane.b32.xlu0 %v2970, 256
        %v2973 = vpop.permute.xlu0 %2972
        %v2974 = vlaneseq
        %v2975 = vshrl.u32 %v2974, 7
        %v2976 = vsub.s32 6, %v2975
        %v2977 = vrot.slane %v1686, %v2976
        %2979 = vbcast.lane.b32.xlu0 %v2977, 256
        %v2980 = vpop.permute.xlu0 %2979
        %v2981 = vlaneseq
        %v2982 = vshrl.u32 %v2981, 7
        %v2983 = vsub.s32 7, %v2982
        %v2984 = vrot.slane %v1686, %v2983
        %2986 = vbcast.lane.b32.xlu0 %v2984, 256
        %v2987 = vpop.permute.xlu0 %2986
        %v2988 = vlaneseq
        %v2989 = vshrl.u32 %v2988, 7
        %v2990 = vsub.s32 0, %v2989
        %v2991 = vrot.slane %v1687, %v2990
        %2993 = vbcast.lane.b32.xlu0 %v2991, 256
        %v2994 = vpop.permute.xlu0 %2993
        %v2995 = vlaneseq
        %v2996 = vshrl.u32 %v2995, 7
        %v2997 = vsub.s32 1, %v2996
        %v2998 = vrot.slane %v1687, %v2997
        %3000 = vbcast.lane.b32.xlu0 %v2998, 256
        %v3001 = vpop.permute.xlu0 %3000
        %v3002 = vlaneseq
        %v3003 = vshrl.u32 %v3002, 7
        %v3004 = vsub.s32 2, %v3003
        %v3005 = vrot.slane %v1687, %v3004
        %3007 = vbcast.lane.b32.xlu0 %v3005, 256
        %v3008 = vpop.permute.xlu0 %3007
        %v3009 = vlaneseq
        %v3010 = vshrl.u32 %v3009, 7
        %v3011 = vsub.s32 3, %v3010
        %v3012 = vrot.slane %v1687, %v3011
        %3014 = vbcast.lane.b32.xlu0 %v3012, 256
        %v3015 = vpop.permute.xlu0 %3014
        %v3016 = vlaneseq
        %v3017 = vshrl.u32 %v3016, 7
        %v3018 = vsub.s32 4, %v3017
        %v3019 = vrot.slane %v1687, %v3018
        %3021 = vbcast.lane.b32.xlu0 %v3019, 256
        %v3022 = vpop.permute.xlu0 %3021
        %v3023 = vlaneseq
        %v3024 = vshrl.u32 %v3023, 7
        %v3025 = vsub.s32 5, %v3024
        %v3026 = vrot.slane %v1687, %v3025
        %3028 = vbcast.lane.b32.xlu0 %v3026, 256
        %v3029 = vpop.permute.xlu0 %3028
        %v3030 = vlaneseq
        %v3031 = vshrl.u32 %v3030, 7
        %v3032 = vsub.s32 6, %v3031
        %v3033 = vrot.slane %v1687, %v3032
        %3035 = vbcast.lane.b32.xlu0 %v3033, 256
        %v3036 = vpop.permute.xlu0 %3035
        %v3037 = vlaneseq
        %v3038 = vshrl.u32 %v3037, 7
        %v3039 = vsub.s32 7, %v3038
        %v3040 = vrot.slane %v1687, %v3039
        %3042 = vbcast.lane.b32.xlu0 %v3040, 256
        %v3043 = vpop.permute.xlu0 %3042
        %v3044 = vlaneseq
        %v3045 = vshrl.u32 %v3044, 7
        %v3046 = vsub.s32 0, %v3045
        %v3047 = vrot.slane %v1688, %v3046
        %3049 = vbcast.lane.b32.xlu0 %v3047, 256
        %v3050 = vpop.permute.xlu0 %3049
        %v3051 = vlaneseq
        %v3052 = vshrl.u32 %v3051, 7
        %v3053 = vsub.s32 1, %v3052
        %v3054 = vrot.slane %v1688, %v3053
        %3056 = vbcast.lane.b32.xlu0 %v3054, 256
        %v3057 = vpop.permute.xlu0 %3056
        %v3058 = vlaneseq
        %v3059 = vshrl.u32 %v3058, 7
        %v3060 = vsub.s32 2, %v3059
        %v3061 = vrot.slane %v1688, %v3060
        %3063 = vbcast.lane.b32.xlu0 %v3061, 256
        %v3064 = vpop.permute.xlu0 %3063
        %v3065 = vlaneseq
        %v3066 = vshrl.u32 %v3065, 7
        %v3067 = vsub.s32 3, %v3066
        %v3068 = vrot.slane %v1688, %v3067
        %3070 = vbcast.lane.b32.xlu0 %v3068, 256
        %v3071 = vpop.permute.xlu0 %3070
        %v3072 = vlaneseq
        %v3073 = vshrl.u32 %v3072, 7
        %v3074 = vsub.s32 4, %v3073
        %v3075 = vrot.slane %v1688, %v3074
        %3077 = vbcast.lane.b32.xlu0 %v3075, 256
        %v3078 = vpop.permute.xlu0 %3077
        %v3079 = vlaneseq
        %v3080 = vshrl.u32 %v3079, 7
        %v3081 = vsub.s32 5, %v3080
        %v3082 = vrot.slane %v1688, %v3081
        %3084 = vbcast.lane.b32.xlu0 %v3082, 256
        %v3085 = vpop.permute.xlu0 %3084
        %v3086 = vlaneseq
        %v3087 = vshrl.u32 %v3086, 7
        %v3088 = vsub.s32 6, %v3087
        %v3089 = vrot.slane %v1688, %v3088
        %3091 = vbcast.lane.b32.xlu0 %v3089, 256
        %v3092 = vpop.permute.xlu0 %3091
        %v3093 = vlaneseq
        %v3094 = vshrl.u32 %v3093, 7
        %v3095 = vsub.s32 7, %v3094
        %v3096 = vrot.slane %v1688, %v3095
        %3098 = vbcast.lane.b32.xlu0 %v3096, 256
        %v3099 = vpop.permute.xlu0 %3098
        %v3100 = vmul.f32 %v2882, %v2543
        %v3101 = vmul.f32 %v2889, %v2543
        %v3102 = vmul.f32 %v2896, %v2543
        %v3103 = vmul.f32 %v2903, %v2543
        %v3104 = vmul.f32 %v2910, %v2543
        %v3105 = vmul.f32 %v2917, %v2543
        %v3106 = vmul.f32 %v2924, %v2543
        %v3107 = vmul.f32 %v2931, %v2543
        %v3108 = vmul.f32 %v2938, %v2543
        %v3109 = vmul.f32 %v2945, %v2543
        %v3110 = vmul.f32 %v2952, %v2543
        %v3111 = vmul.f32 %v2959, %v2543
        %v3112 = vmul.f32 %v2966, %v2543
        %v3113 = vmul.f32 %v2973, %v2543
        %v3114 = vmul.f32 %v2980, %v2543
        %v3115 = vmul.f32 %v2987, %v2543
        %v3116 = vmul.f32 %v2994, %v2543
        %v3117 = vmul.f32 %v3001, %v2543
        %v3118 = vmul.f32 %v3008, %v2543
        %v3119 = vmul.f32 %v3015, %v2543
        %v3120 = vmul.f32 %v3022, %v2543
        %v3121 = vmul.f32 %v3029, %v2543
        %v3122 = vmul.f32 %v3036, %v2543
        %v3123 = vmul.f32 %v3043, %v2543
        %v3124 = vmul.f32 %v3050, %v2543
        %v3125 = vmul.f32 %v3057, %v2543
        %v3126 = vmul.f32 %v3064, %v2543
        %v3127 = vmul.f32 %v3071, %v2543
        %v3128 = vmul.f32 %v3078, %v2543
        %v3129 = vmul.f32 %v3085, %v2543
        %v3130 = vmul.f32 %v3092, %v2543
        %v3131 = vmul.f32 %v3099, %v2543
        %v3132 = vadd.f32 %v2750, %v3100
        %v3133 = vadd.f32 %v2753, %v3101
        %v3134 = vadd.f32 %v2758, %v3102
        %v3135 = vadd.f32 %v2761, %v3103
        %v3136 = vadd.f32 %v2766, %v3104
        %v3137 = vadd.f32 %v2769, %v3105
        %v3138 = vadd.f32 %v2774, %v3106
        %v3139 = vadd.f32 %v2777, %v3107
        %v3140 = vadd.f32 %v2782, %v3108
        %v3141 = vadd.f32 %v2785, %v3109
        %v3142 = vadd.f32 %v2790, %v3110
        %v3143 = vadd.f32 %v2793, %v3111
        %v3144 = vadd.f32 %v2798, %v3112
        %v3145 = vadd.f32 %v2801, %v3113
        %v3146 = vadd.f32 %v2806, %v3114
        %v3147 = vadd.f32 %v2809, %v3115
        %v3148 = vadd.f32 %v2814, %v3116
        %v3149 = vadd.f32 %v2817, %v3117
        %v3150 = vadd.f32 %v2822, %v3118
        %v3151 = vadd.f32 %v2825, %v3119
        %v3152 = vadd.f32 %v2830, %v3120
        %v3153 = vadd.f32 %v2833, %v3121
        %v3154 = vadd.f32 %v2838, %v3122
        %v3155 = vadd.f32 %v2841, %v3123
        %v3156 = vadd.f32 %v2846, %v3124
        %v3157 = vadd.f32 %v2849, %v3125
        %v3158 = vadd.f32 %v2854, %v3126
        %v3159 = vadd.f32 %v2857, %v3127
        %v3160 = vadd.f32 %v2862, %v3128
        %v3161 = vadd.f32 %v2865, %v3129
        %v3162 = vadd.f32 %v2870, %v3130
        %v3163 = vadd.f32 %v2873, %v3131
        %v3164 = vpack.c.bf16 %v3132, %v3132
        %v3165 = vpack.c.bf16 %v3133, %v3133
        %v3166 = vpack.c.bf16 %v3134, %v3134
        %v3167 = vpack.c.bf16 %v3135, %v3135
        %v3168 = vpack.c.bf16 %v3136, %v3136
        %v3169 = vpack.c.bf16 %v3137, %v3137
        %v3170 = vpack.c.bf16 %v3138, %v3138
        %v3171 = vpack.c.bf16 %v3139, %v3139
        %v3172 = vpack.c.bf16 %v3140, %v3140
        %v3173 = vpack.c.bf16 %v3141, %v3141
        %v3174 = vpack.c.bf16 %v3142, %v3142
        %v3175 = vpack.c.bf16 %v3143, %v3143
        %v3176 = vpack.c.bf16 %v3144, %v3144
        %v3177 = vpack.c.bf16 %v3145, %v3145
        %v3178 = vpack.c.bf16 %v3146, %v3146
        %v3179 = vpack.c.bf16 %v3147, %v3147
        %v3180 = vpack.c.bf16 %v3148, %v3148
        %v3181 = vpack.c.bf16 %v3149, %v3149
        %v3182 = vpack.c.bf16 %v3150, %v3150
        %v3183 = vpack.c.bf16 %v3151, %v3151
        %v3184 = vpack.c.bf16 %v3152, %v3152
        %v3185 = vpack.c.bf16 %v3153, %v3153
        %v3186 = vpack.c.bf16 %v3154, %v3154
        %v3187 = vpack.c.bf16 %v3155, %v3155
        %v3188 = vpack.c.bf16 %v3156, %v3156
        %v3189 = vpack.c.bf16 %v3157, %v3157
        %v3190 = vpack.c.bf16 %v3158, %v3158
        %v3191 = vpack.c.bf16 %v3159, %v3159
        %v3192 = vpack.c.bf16 %v3160, %v3160
        %v3193 = vpack.c.bf16 %v3161, %v3161
        %v3194 = vpack.c.bf16 %v3162, %v3162
        %v3195 = vpack.c.bf16 %v3163, %v3163
        %3196 = vst [vmem:[%s685] sm:$0xf] %v3164
        %3197 = vst [vmem:[%s685 + $0x4] sm:$0xf] %v3165
        %3198 = vst [vmem:[%s685 + $0x8] sm:$0xf] %v3166
        %3199 = vst [vmem:[%s685 + $0xc] sm:$0xf] %v3167
        %3200 = vst [vmem:[%s685 + $0x10] sm:$0xf] %v3168
        %3201 = vst [vmem:[%s685 + $0x14] sm:$0xf] %v3169
        %3202 = vst [vmem:[%s685 + $0x18] sm:$0xf] %v3170
        %3203 = vst [vmem:[%s685 + $0x1c] sm:$0xf] %v3171
        %3204 = vst [vmem:[%s685 + $0x20] sm:$0xf] %v3172
        %3205 = vst [vmem:[%s685 + $0x24] sm:$0xf] %v3173
        %3206 = vst [vmem:[%s685 + $0x28] sm:$0xf] %v3174
        %3207 = vst [vmem:[%s685 + $0x2c] sm:$0xf] %v3175
        %3208 = vst [vmem:[%s685 + $0x30] sm:$0xf] %v3176
        %3209 = vst [vmem:[%s685 + $0x34] sm:$0xf] %v3177
        %3210 = vst [vmem:[%s685 + $0x38] sm:$0xf] %v3178
        %3211 = vst [vmem:[%s685 + $0x3c] sm:$0xf] %v3179
        %3212 = vst [vmem:[%s685 + $0x40] sm:$0xf] %v3180
        %3213 = vst [vmem:[%s685 + $0x44] sm:$0xf] %v3181
        %3214 = vst [vmem:[%s685 + $0x48] sm:$0xf] %v3182
        %3215 = vst [vmem:[%s685 + $0x4c] sm:$0xf] %v3183
        %3216 = vst [vmem:[%s685 + $0x50] sm:$0xf] %v3184
        %3217 = vst [vmem:[%s685 + $0x54] sm:$0xf] %v3185
        %3218 = vst [vmem:[%s685 + $0x58] sm:$0xf] %v3186
        %3219 = vst [vmem:[%s685 + $0x5c] sm:$0xf] %v3187
        %3220 = vst [vmem:[%s685 + $0x60] sm:$0xf] %v3188
        %3221 = vst [vmem:[%s685 + $0x64] sm:$0xf] %v3189
        %3222 = vst [vmem:[%s685 + $0x68] sm:$0xf] %v3190
        %3223 = vst [vmem:[%s685 + $0x6c] sm:$0xf] %v3191
        %3224 = vst [vmem:[%s685 + $0x70] sm:$0xf] %v3192
        %3225 = vst [vmem:[%s685 + $0x74] sm:$0xf] %v3193
        %3226 = vst [vmem:[%s685 + $0x78] sm:$0xf] %v3194
        %3227 = vst [vmem:[%s685 + $0x7c] sm:$0xf] %v3195
        %s3228 = sand.u32 %s314, 1
        %s3229 = scalar_lea.sflag [#allocation5], %s3228
        %s3230 = sand.u32 %s314, 1
        %s3231 = smul.addr %s3230, 128
        %s3232 = scalar_lea.vmem [#allocation11], %s3231
        // Predicated region
        $region126: #{integration_forward.1} parent=104 // pred_check
          %p3233 = pneg %p324
        $region127: #{integration_forward.1} parent=104 // pred_check_branch
          %3235 = sbr.rel (%p3233) target = $region129
        $region128: #{integration_forward.1} parent=104 // pred_region
          %s3237 = ssub.s32 2048, 2048
          %3238 = vsyncadd %s3229, %s3237
          %s3239 = smul.addr %s29, 64
          %s3240 = scalar_lea.hbm %s12, %s3239
          %s3241 = sshll.u32 %s3232, 4
          %s3242 = int_to_ptr.vmem [resolvable:$true] %s3241
          %3247 = dma.vmem_to_hbm [thread:$0]  %s3242, 2048, %s3240, %s3229, 64, 128, 4
        $region129: #{integration_forward.1} parent=104 // pred_fallthru
          _
      $region105: #{integration_forward.1} parent=5 // pred_fallthru
        _
      %p3248 = scmp.le.s32.totalorder 2, %s24
      // Predicated region
      $region130: #{integration_forward.1} parent=5 // pred_check
        %p3249 = pneg %p3248
      $region131: #{integration_forward.1} parent=5 // pred_check_branch
        %3251 = sbr.rel (%p3249) target = $region133
      $region132: #{integration_forward.1} parent=5 // pred_region
        %s3252 = ssub.s32 %s24, 2
        // Predicated region
        $region134: #{integration_forward.1} parent=132 // pred_check
          %p3253 = pneg %p330
        $region135: #{integration_forward.1} parent=132 // pred_check_branch
          %3255 = sbr.rel (%p3253) target = $region137
        $region136: #{integration_forward.1} parent=132 // pred_region
          %s3256 = sand.u32 %s315, 1
          %s3257 = scalar_lea.sflag [#allocation5], %s3256
          %s3258 = sand.u32 %s315, 1
          %s3259 = smul.addr %s3258, 128
          %s3260 = scalar_lea.vmem [#allocation11], %s3259
          %3261 = dma.done %s3257, 2048
        $region137: #{integration_forward.1} parent=132 // pred_fallthru
          _
      $region133: #{integration_forward.1} parent=5 // pred_fallthru
        _
    $region6: #{integration_forward.1} parent=1 // loop_footer
      %s28 = sadd.s32 1, %s24
    $region7: #{integration_forward.1} parent=1 // loop_footer_branch
      %23 = sbr.rel target = $region3
    $region8: #{integration_forward.1} parent=1 // loop_exit
      _
    %3262 = vsyncpa [#allocation4], 1
    %s3263 = scalar_lea.sflag [#allocation4], 1
    %3264 = vsyncpa %s3263, 1
    %3265 = vsyncpa [#allocation7], 1
    %3266 = vsyncpa [#allocation10], 1
    %3267 = vsyncpa [#allocation5], 1
    %s3268 = scalar_lea.sflag [#allocation5], 1
    %3269 = vsyncpa %s3268, 1

</llo_original>
